<compile_context>
chip_gen: v7x
topology: tpu7x:2x2x1
jax: 0.10.0
libtpu: 0.0.40
codegen_flags: <defaults>
</compile_context>

<pallas_src>
import jax
import jax.numpy as jnp
from jax.experimental import pallas as pl
from jax.experimental.pallas import tpu as pltpu


def _tensorcores_per_chip() -> int:
    """Best-effort TensorCore count per chip: v7x has 2, v5e/v6e have 1."""
    try:
        kind = jax.devices()[0].device_kind.lower()
    except Exception:
        return 1
    return 2 if "7" in kind else 1


def _make_bertvae_kernel(n_bert: int, n_enc_mid: int, n_dec: int, dz: int):
    """Kernel applying the full BERTVAE forward to one batch tile.

    Ref order after (x_ref, feat_ref):
      bert:     n_bert    x (W, b)
      enc0:     W0 (fused [W0x; W0f]), b0
      enc_mid:  n_enc_mid x (W, b)
      mu‖sigma: Wms (Wmu ‖ Wsigma along N), bms
      dec:      n_dec     x (W, b)
      outputs:  recon_ref, mu_ref, logvar_ref
    """

    def dot(a, w_ref):
        # bf16 MXU operands, f32 accumulation.
        return jnp.dot(a.astype(jnp.bfloat16), w_ref[...],
                       preferred_element_type=jnp.float32)

    def kernel(x_ref, feat_ref, *refs):
        recon_ref, mu_ref, logvar_ref = refs[-3:]
        p = refs[:-3]
        i = 0

        x_bf = x_ref[...]                                      # bf16 (tm, d)
        row_sum = jnp.sum(x_bf.astype(jnp.float32), axis=-1, keepdims=True)
        # max() guard keeps all-zero sparse rows NaN-free; reciprocal off VALU.
        inv = pl.reciprocal(jnp.maximum(row_sum, 1.0), approx=False)

        # --- feature aggregation: (x @ feat) * (1 / rowsum) -------------------
        f = dot(x_bf, feat_ref) * inv

        # --- bertnet MLP (ReLU after every linear except the last; a single
        #     layer still gets a ReLU — matches the torch module) --------------
        for j in range(n_bert):
            f = dot(f, p[i]) + p[i + 1][...].astype(jnp.float32)
            i += 2
            if j != n_bert - 1 or n_bert == 1:
                f = jnp.maximum(f, 0.0)

        # --- encoder inet[0] on concat(x, f): one fused K=(d+feat_dim) matmul -
        hcat = jnp.concatenate([x_bf, f.astype(jnp.bfloat16)], axis=-1)
        h = jnp.maximum(dot(hcat, p[i]) + p[i + 1][...].astype(jnp.float32), 0.0)
        i += 2
        for _ in range(n_enc_mid):
            h = jnp.maximum(dot(h, p[i]) + p[i + 1][...].astype(jnp.float32), 0.0)
            i += 2

        # --- fused mu‖sigma linear (N = 2*dz); slice at a 128-lane boundary ---
        ms = dot(h, p[i]) + p[i + 1][...].astype(jnp.float32)
        i += 2
        mu = ms[:, :dz]
        logvar = ms[:, dz:]

        # --- reparameterize (eval mode): z = mu -------------------------------
        # TODO(synk): training-mode z = mu + eps*exp(0.5*logvar) would need
        # pltpu.prng_seed / pltpu.stateful_normal (different RNG stream than torch).
        hd = mu

        # --- decoder -----------------------------------------------------------
        for j in range(n_dec):
            hd = dot(hd, p[i]) + p[i + 1][...].astype(jnp.float32)
            i += 2
            if j != n_dec - 1:
                hd = jnp.maximum(hd, 0.0)

        recon_ref[...] = hd.astype(recon_ref.dtype)
        mu_ref[...] = mu.astype(mu_ref.dtype)
        logvar_ref[...] = logvar.astype(logvar_ref.dtype)

    return kernel


def _flatten_fused_params(params):
    """Alternating (weight, bias) arrays in kernel order, with host-side fusion.

    Fusions:
      * enc0: W0x stacked over W0f -> one (d + feat_dim, d1) weight.
      * mu‖sigma: Wmu and Wsigma concatenated along N -> (d_{l-1}, 2*dz).
    """
    flat = []
    for w, b in params["bert"]:
        flat += [w, b]
    w0x, w0f, b0 = params["enc0"]
    flat += [jnp.concatenate([w0x, w0f], axis=0), b0]
    for w, b in params["enc_mid"]:
        flat += [w, b]
    (wmu, bmu), (ws, bs) = params["mu"], params["sigma"]
    flat += [jnp.concatenate([wmu, ws], axis=1),
             jnp.concatenate([bmu, bs], axis=1)]
    for w, b in params["dec"]:
        flat += [w, b]
    return flat


def bertvae_forward(x, feat, params, *, tm=None):
    """Fused BERTVAE forward. Returns (recon, mu, logvar), all float32."""
    B, d = x.shape
    n_bert = len(params["bert"])
    n_enc_mid = len(params["enc_mid"])
    n_dec = len(params["dec"])
    dz = params["mu"][0].shape[1]
    d_out = params["dec"][-1][0].shape[1]

    # Halve the only streaming DMA: x rows are 0/1-valued, exact in bf16.
    x_bf = x.astype(jnp.bfloat16)

    # Grid: one batch tile per TensorCore.  v5e/v6e (1 TC) -> grid=(1,) so no
    # duplicate weight pushes or per-step overhead; v7x (2 TCs) -> 2 balanced
    # "parallel" tiles.
    if tm is None:
        n_tc = _tensorcores_per_chip()
        if n_tc > 1 and B >= 16:
            tm = ((B + n_tc - 1) // n_tc + 7) // 8 * 8
        else:
            tm = B
    tm = min(tm, B)
    grid = (pl.cdiv(B, tm),)

    flat = _flatten_fused_params(params)

    in_specs = [
        pl.BlockSpec((tm, d), lambda i: (i, 0)),        # x: tiled over batch (bf16)
        pl.BlockSpec(feat.shape, lambda i: (0, 0)),     # feat: resident in VMEM
    ]
    for prm in flat:                                    # weights/biases: resident
        in_specs.append(pl.BlockSpec(prm.shape, lambda i: (0, 0)))

    out_shape = (
        jax.ShapeDtypeStruct((B, d_out), jnp.float32),  # recon
        jax.ShapeDtypeStruct((B, dz), jnp.float32),     # mu
        jax.ShapeDtypeStruct((B, dz), jnp.float32),     # logvar
    )
    out_specs = (
        pl.BlockSpec((tm, d_out), lambda i: (i, 0)),
        pl.BlockSpec((tm, dz), lambda i: (i, 0)),
        pl.BlockSpec((tm, dz), lambda i: (i, 0)),
    )

    # Advisory hint so XLA can schedule neighbors around this µs-scale call.
    flops = 2 * B * d * feat.shape[1]
    flops += 2 * B * sum(int(w.shape[0]) * int(w.shape[1]) for w in flat[0::2])
    bytes_accessed = int(x_bf.size) * 2
    bytes_accessed += sum(int(a.size) * a.dtype.itemsize for a in [feat] + flat)
    bytes_accessed += 4 * (B * d_out + 2 * B * dz)

    kernel = _make_bertvae_kernel(n_bert, n_enc_mid, n_dec, dz)

    return pl.pallas_call(
        kernel,
        out_shape=out_shape,
        grid=grid,
        in_specs=in_specs,
        out_specs=out_specs,
        compiler_params=pltpu.CompilerParams(
            dimension_semantics=("parallel",),
            # Working set today is ~1 MiB; 32 MiB scoped VMEM leaves plenty of
            # headroom on v5e/v6e (128 MiB physical) and v7x (64 MiB physical).
            # TODO(synk): for much larger d/feat_len/layer configs, tile the
            # largest weights over their N dimension instead of keeping every
            # weight fully resident (v7x hits its VMEM ceiling first).
            vmem_limit_bytes=32 * 1024 * 1024,
        ),
        cost_estimate=pl.CostEstimate(
            flops=int(flops),
            transcendentals=int(B),
            bytes_accessed=int(bytes_accessed)),
    )(x_bf, feat, *flat)


def init_bertvae_params(key, *, d, feat_len, feat_layer, layer):
    """Deterministic init matching BERTVAE.__init__ layer shapes.

    Torch Linear weight is (out, in); we store its transpose (in, out) in bf16.
    inet[0] (acting on concat(x, bert_feat)) is kept as two row blocks
    (W0x for the x part, W0f for the feature part); they are stacked host-side
    before the kernel call — mathematically identical.
    """
    l = len(layer)
    assert l >= 2, "l == 1 variant (mu/sigma on the raw concat) not wired up in this demo"
    darray = [d] + list(layer)
    keys = iter(jax.random.split(key, 64))

    def linear(d_in, d_out):
        k = next(keys)
        std = (2.0 / d_in) ** 0.5
        w = (jax.random.normal(k, (d_in, d_out), jnp.float32) * std).astype(jnp.bfloat16)
        b = jnp.zeros((1, d_out), jnp.float32)
        return w, b

    bdims = [feat_len] + list(feat_layer)
    bert = [linear(bdims[i], bdims[i + 1]) for i in range(len(feat_layer))]

    w0x, b0 = linear(d, darray[1])
    w0f, _ = linear(feat_layer[-1], darray[1])
    enc_mid = [linear(darray[i], darray[i + 1]) for i in range(1, l - 1)]
    mu = linear(darray[l - 1], darray[l])
    sigma = linear(darray[l - 1], darray[l])
    dec = [linear(darray[l - i], darray[l - i - 1]) for i in range(l)]

    return dict(bert=bert, enc0=(w0x, w0f, b0), enc_mid=enc_mid,
                mu=mu, sigma=sigma, dec=dec)


def bertvae_reference(x, feat, params):
    """Pure-JAX reference mirroring the kernel's bf16-operand / f32-accumulate math."""
    def dot(a, w):
        return jnp.dot(a.astype(jnp.bfloat16), w.astype(jnp.bfloat16),
                       preferred_element_type=jnp.float32)

    x_bf = x.astype(jnp.bfloat16)
    row_sum = jnp.sum(x_bf.astype(jnp.float32), axis=-1, keepdims=True)
    inv = 1.0 / jnp.maximum(row_sum, 1.0)
    f = dot(x_bf, feat) * inv
    n_bert = len(params["bert"])
    for j, (w, b) in enumerate(params["bert"]):
        f = dot(f, w) + b
        if j != n_bert - 1 or n_bert == 1:
            f = jnp.maximum(f, 0.0)
    w0x, w0f, b0 = params["enc0"]
    hcat = jnp.concatenate([x_bf, f.astype(jnp.bfloat16)], axis=-1)
    h = jnp.maximum(dot(hcat, jnp.concatenate([w0x, w0f], axis=0)) + b0, 0.0)
    for w, b in params["enc_mid"]:
        h = jnp.maximum(dot(h, w) + b, 0.0)
    wmu, bmu = params["mu"]
    mu = dot(h, wmu) + bmu
    ws, bs = params["sigma"]
    logvar = dot(h, ws) + bs
    hd = mu  # eval-mode reparameterize
    n_dec = len(params["dec"])
    for j, (w, b) in enumerate(params["dec"]):
        hd = dot(hd, w) + b
        if j != n_dec - 1:
            hd = jnp.maximum(hd, 0.0)
    return hd, mu, logvar


if __name__ == "__main__":
    # All feature dims are multiples of 128 (lane-dense vregs, unmasked stores).
    d = 128                    # args.d  (== number of columns of x)
    feat_len = 128             # args.feat_len
    feat_layer = [128, 128]    # args.feat_layer
    layer = [256, 128]         # args.layer (l = 2, latent dim 128)
    B = 512                    # batch

    key = jax.random.PRNGKey(0)
    kx, kf, kp = jax.random.split(key, 3)

    # x: dense 0/1 "adjacency" rows (torch feeds a sparse x and row-normalizes).
    x = (jax.random.uniform(kx, (B, d)) > 0.5).astype(jnp.float32)
    feat = jax.random.normal(kf, (d, feat_len), jnp.float32).astype(jnp.bfloat16)
    params = init_bertvae_params(kp, d=d, feat_len=feat_len,
                                 feat_layer=feat_layer, layer=layer)

    recon, mu, logvar = jax.block_until_ready(bertvae_forward(x, feat, params))

    r_ref, m_ref, lv_ref = bertvae_reference(x, feat, params)
    assert recon.shape == (B, d), recon.shape
    assert mu.shape == (B, layer[-1]) and logvar.shape == (B, layer[-1])
    for got, ref in ((recon, r_ref), (mu, m_ref), (logvar, lv_ref)):
        assert jnp.allclose(got, ref, atol=2e-3, rtol=2e-3), \
            float(jnp.max(jnp.abs(got - ref)))

    print("KERNEL_OK")
</pallas_src>

<mosaic_0001>
module attributes {stable_mosaic.version = 11 : i64} {
  func.func @kernel(%arg0: i32, %arg1: memref<512x128xbf16, #tpu.memory_space<vmem>>, %arg2: memref<128x128xbf16, #tpu.memory_space<vmem>>, %arg3: memref<128x128xbf16, #tpu.memory_space<vmem>>, %arg4: memref<1x128xf32, #tpu.memory_space<vmem>>, %arg5: memref<128x128xbf16, #tpu.memory_space<vmem>>, %arg6: memref<1x128xf32, #tpu.memory_space<vmem>>, %arg7: memref<256x256xbf16, #tpu.memory_space<vmem>>, %arg8: memref<1x256xf32, #tpu.memory_space<vmem>>, %arg9: memref<256x256xbf16, #tpu.memory_space<vmem>>, %arg10: memref<1x256xf32, #tpu.memory_space<vmem>>, %arg11: memref<128x256xbf16, #tpu.memory_space<vmem>>, %arg12: memref<1x256xf32, #tpu.memory_space<vmem>>, %arg13: memref<256x128xbf16, #tpu.memory_space<vmem>>, %arg14: memref<1x128xf32, #tpu.memory_space<vmem>>, %arg15: memref<512x128xf32, #tpu.memory_space<vmem>>, %arg16: memref<512x128xf32, #tpu.memory_space<vmem>>, %arg17: memref<512x128xf32, #tpu.memory_space<vmem>>) attributes {dimension_semantics = [#tpu.dimension_semantics<parallel>], iteration_bounds = array<i64: 1>, scalar_prefetch = 0 : i64, scratch_operands = 0 : i64, tpu.core_type = #tpu.core_type<tc>, window_params = [{transform_indices = @transform_0, window_bounds = array<i64: 512, 128>}, {pipeline_mode = #tpu.pipeline_mode<synchronous>, transform_indices = @transform_1, window_bounds = array<i64: 128, 128>}, {pipeline_mode = #tpu.pipeline_mode<synchronous>, transform_indices = @transform_2, window_bounds = array<i64: 128, 128>}, {pipeline_mode = #tpu.pipeline_mode<synchronous>, transform_indices = @transform_3, window_bounds = array<i64: 1, 128>}, {pipeline_mode = #tpu.pipeline_mode<synchronous>, transform_indices = @transform_4, window_bounds = array<i64: 128, 128>}, {pipeline_mode = #tpu.pipeline_mode<synchronous>, transform_indices = @transform_5, window_bounds = array<i64: 1, 128>}, {pipeline_mode = #tpu.pipeline_mode<synchronous>, transform_indices = @transform_6, window_bounds = array<i64: 256, 256>}, {pipeline_mode = #tpu.pipeline_mode<synchronous>, transform_indices = @transform_7, window_bounds = array<i64: 1, 256>}, {pipeline_mode = #tpu.pipeline_mode<synchronous>, transform_indices = @transform_8, window_bounds = array<i64: 256, 256>}, {pipeline_mode = #tpu.pipeline_mode<synchronous>, transform_indices = @transform_9, window_bounds = array<i64: 1, 256>}, {pipeline_mode = #tpu.pipeline_mode<synchronous>, transform_indices = @transform_10, window_bounds = array<i64: 128, 256>}, {pipeline_mode = #tpu.pipeline_mode<synchronous>, transform_indices = @transform_11, window_bounds = array<i64: 1, 256>}, {pipeline_mode = #tpu.pipeline_mode<synchronous>, transform_indices = @transform_12, window_bounds = array<i64: 256, 128>}, {pipeline_mode = #tpu.pipeline_mode<synchronous>, transform_indices = @transform_13, window_bounds = array<i64: 1, 128>}, {transform_indices = @transform_14, window_bounds = array<i64: 512, 128>}, {transform_indices = @transform_15, window_bounds = array<i64: 512, 128>}, {transform_indices = @transform_16, window_bounds = array<i64: 512, 128>}]} {
    %c0 = arith.constant 0 : index
    %c0_0 = arith.constant 0 : index
    %0 = vector.load %arg1[%c0, %c0_0] : memref<512x128xbf16, #tpu.memory_space<vmem>>, vector<512x128xbf16>
    %1 = arith.extf %0 : vector<512x128xbf16> to vector<512x128xf32>
    %cst = arith.constant dense<0.000000e+00> : vector<512xf32>
    %2 = vector.multi_reduction <add>, %1, %cst [1] : vector<512x128xf32> to vector<512xf32>
    %3 = vector.shape_cast %2 : vector<512xf32> to vector<512x1xf32>
    %cst_1 = arith.constant 1.000000e+00 : f32
    %4 = vector.broadcast %cst_1 : f32 to vector<512x1xf32>
    %5 = arith.maximumf %3, %4 : vector<512x1xf32>
    %6 = tpu.reciprocal %5 : vector<512x1xf32> -> vector<512x1xf32>
    %c0_2 = arith.constant 0 : index
    %c0_3 = arith.constant 0 : index
    %7 = vector.load %arg2[%c0_2, %c0_3] : memref<128x128xbf16, #tpu.memory_space<vmem>>, vector<128x128xbf16>
    %cst_4 = arith.constant dense<0.000000e+00> : vector<512x128xf32>
    %8 = tpu.matmul %0, %7, %cst_4 {dimension_numbers = #tpu.dot_dimension_numbers<[1], [0], [0], [1], [0, 0, 1, 1], [], []>} : vector<512x128xbf16>, vector<128x128xbf16>, vector<512x128xf32> -> vector<512x128xf32>
    %9 = vector.broadcast %6 : vector<512x1xf32> to vector<512x128xf32>
    %10 = arith.mulf %8, %9 : vector<512x128xf32>
    %11 = arith.truncf %10 : vector<512x128xf32> to vector<512x128xbf16>
    %c0_5 = arith.constant 0 : index
    %c0_6 = arith.constant 0 : index
    %12 = vector.load %arg3[%c0_5, %c0_6] : memref<128x128xbf16, #tpu.memory_space<vmem>>, vector<128x128xbf16>
    %cst_7 = arith.constant dense<0.000000e+00> : vector<512x128xf32>
    %13 = tpu.matmul %11, %12, %cst_7 {dimension_numbers = #tpu.dot_dimension_numbers<[1], [0], [0], [1], [0, 0, 1, 1], [], []>} : vector<512x128xbf16>, vector<128x128xbf16>, vector<512x128xf32> -> vector<512x128xf32>
    %c0_8 = arith.constant 0 : index
    %c0_9 = arith.constant 0 : index
    %14 = vector.load %arg4[%c0_8, %c0_9] : memref<1x128xf32, #tpu.memory_space<vmem>>, vector<1x128xf32>
    %15 = vector.broadcast %14 : vector<1x128xf32> to vector<512x128xf32>
    %16 = arith.addf %13, %15 : vector<512x128xf32>
    %cst_10 = arith.constant 0.000000e+00 : f32
    %17 = vector.broadcast %cst_10 : f32 to vector<512x128xf32>
    %18 = arith.maximumf %16, %17 : vector<512x128xf32>
    %19 = arith.truncf %18 : vector<512x128xf32> to vector<512x128xbf16>
    %c0_11 = arith.constant 0 : index
    %c0_12 = arith.constant 0 : index
    %20 = vector.load %arg5[%c0_11, %c0_12] : memref<128x128xbf16, #tpu.memory_space<vmem>>, vector<128x128xbf16>
    %cst_13 = arith.constant dense<0.000000e+00> : vector<512x128xf32>
    %21 = tpu.matmul %19, %20, %cst_13 {dimension_numbers = #tpu.dot_dimension_numbers<[1], [0], [0], [1], [0, 0, 1, 1], [], []>} : vector<512x128xbf16>, vector<128x128xbf16>, vector<512x128xf32> -> vector<512x128xf32>
    %c0_14 = arith.constant 0 : index
    %c0_15 = arith.constant 0 : index
    %22 = vector.load %arg6[%c0_14, %c0_15] : memref<1x128xf32, #tpu.memory_space<vmem>>, vector<1x128xf32>
    %23 = vector.broadcast %22 : vector<1x128xf32> to vector<512x128xf32>
    %24 = arith.addf %21, %23 : vector<512x128xf32>
    %25 = arith.truncf %24 : vector<512x128xf32> to vector<512x128xbf16>
    %26 = tpu.concatenate %0, %25 in 1 : vector<512x128xbf16>, vector<512x128xbf16> -> vector<512x256xbf16>
    %c0_16 = arith.constant 0 : index
    %c0_17 = arith.constant 0 : index
    %27 = vector.load %arg7[%c0_16, %c0_17] : memref<256x256xbf16, #tpu.memory_space<vmem>>, vector<256x256xbf16>
    %cst_18 = arith.constant dense<0.000000e+00> : vector<512x256xf32>
    %28 = tpu.matmul %26, %27, %cst_18 {dimension_numbers = #tpu.dot_dimension_numbers<[1], [0], [0], [1], [0, 0, 1, 1], [], []>} : vector<512x256xbf16>, vector<256x256xbf16>, vector<512x256xf32> -> vector<512x256xf32>
    %c0_19 = arith.constant 0 : index
    %c0_20 = arith.constant 0 : index
    %29 = vector.load %arg8[%c0_19, %c0_20] : memref<1x256xf32, #tpu.memory_space<vmem>>, vector<1x256xf32>
    %30 = vector.broadcast %29 : vector<1x256xf32> to vector<512x256xf32>
    %31 = arith.addf %28, %30 : vector<512x256xf32>
    %cst_21 = arith.constant 0.000000e+00 : f32
    %32 = vector.broadcast %cst_21 : f32 to vector<512x256xf32>
    %33 = arith.maximumf %31, %32 : vector<512x256xf32>
    %34 = arith.truncf %33 : vector<512x256xf32> to vector<512x256xbf16>
    %c0_22 = arith.constant 0 : index
    %c0_23 = arith.constant 0 : index
    %35 = vector.load %arg9[%c0_22, %c0_23] : memref<256x256xbf16, #tpu.memory_space<vmem>>, vector<256x256xbf16>
    %cst_24 = arith.constant dense<0.000000e+00> : vector<512x256xf32>
    %36 = tpu.matmul %34, %35, %cst_24 {dimension_numbers = #tpu.dot_dimension_numbers<[1], [0], [0], [1], [0, 0, 1, 1], [], []>} : vector<512x256xbf16>, vector<256x256xbf16>, vector<512x256xf32> -> vector<512x256xf32>
    %c0_25 = arith.constant 0 : index
    %c0_26 = arith.constant 0 : index
    %37 = vector.load %arg10[%c0_25, %c0_26] : memref<1x256xf32, #tpu.memory_space<vmem>>, vector<1x256xf32>
    %38 = vector.broadcast %37 : vector<1x256xf32> to vector<512x256xf32>
    %39 = arith.addf %36, %38 : vector<512x256xf32>
    %40 = vector.extract_strided_slice %39 {offsets = [0, 0], sizes = [512, 128], strides = [1, 1]} : vector<512x256xf32> to vector<512x128xf32>
    %41 = vector.extract_strided_slice %39 {offsets = [0, 128], sizes = [512, 128], strides = [1, 1]} : vector<512x256xf32> to vector<512x128xf32>
    %42 = arith.truncf %40 : vector<512x128xf32> to vector<512x128xbf16>
    %c0_27 = arith.constant 0 : index
    %c0_28 = arith.constant 0 : index
    %43 = vector.load %arg11[%c0_27, %c0_28] : memref<128x256xbf16, #tpu.memory_space<vmem>>, vector<128x256xbf16>
    %cst_29 = arith.constant dense<0.000000e+00> : vector<512x256xf32>
    %44 = tpu.matmul %42, %43, %cst_29 {dimension_numbers = #tpu.dot_dimension_numbers<[1], [0], [0], [1], [0, 0, 1, 1], [], []>} : vector<512x128xbf16>, vector<128x256xbf16>, vector<512x256xf32> -> vector<512x256xf32>
    %c0_30 = arith.constant 0 : index
    %c0_31 = arith.constant 0 : index
    %45 = vector.load %arg12[%c0_30, %c0_31] : memref<1x256xf32, #tpu.memory_space<vmem>>, vector<1x256xf32>
    %46 = vector.broadcast %45 : vector<1x256xf32> to vector<512x256xf32>
    %47 = arith.addf %44, %46 : vector<512x256xf32>
    %cst_32 = arith.constant 0.000000e+00 : f32
    %48 = vector.broadcast %cst_32 : f32 to vector<512x256xf32>
    %49 = arith.maximumf %47, %48 : vector<512x256xf32>
    %50 = arith.truncf %49 : vector<512x256xf32> to vector<512x256xbf16>
    %c0_33 = arith.constant 0 : index
    %c0_34 = arith.constant 0 : index
    %51 = vector.load %arg13[%c0_33, %c0_34] : memref<256x128xbf16, #tpu.memory_space<vmem>>, vector<256x128xbf16>
    %cst_35 = arith.constant dense<0.000000e+00> : vector<512x128xf32>
    %52 = tpu.matmul %50, %51, %cst_35 {dimension_numbers = #tpu.dot_dimension_numbers<[1], [0], [0], [1], [0, 0, 1, 1], [], []>} : vector<512x256xbf16>, vector<256x128xbf16>, vector<512x128xf32> -> vector<512x128xf32>
    %c0_36 = arith.constant 0 : index
    %c0_37 = arith.constant 0 : index
    %53 = vector.load %arg14[%c0_36, %c0_37] : memref<1x128xf32, #tpu.memory_space<vmem>>, vector<1x128xf32>
    %54 = vector.broadcast %53 : vector<1x128xf32> to vector<512x128xf32>
    %55 = arith.addf %52, %54 : vector<512x128xf32>
    %c0_38 = arith.constant 0 : index
    %c0_39 = arith.constant 0 : index
    %56 = vector.load %arg15[%c0_38, %c0_39] : memref<512x128xf32, #tpu.memory_space<vmem>>, vector<512x128xf32>
    tpu.vector_store %arg15[%c0_38, %c0_39], %55 {strides = array<i32>} : memref<512x128xf32, #tpu.memory_space<vmem>>, vector<512x128xf32>,
    %c0_40 = arith.constant 0 : index
    %c0_41 = arith.constant 0 : index
    %57 = vector.load %arg16[%c0_40, %c0_41] : memref<512x128xf32, #tpu.memory_space<vmem>>, vector<512x128xf32>
    tpu.vector_store %arg16[%c0_40, %c0_41], %40 {strides = array<i32>} : memref<512x128xf32, #tpu.memory_space<vmem>>, vector<512x128xf32>,
    %c0_42 = arith.constant 0 : index
    %c0_43 = arith.constant 0 : index
    %58 = vector.load %arg17[%c0_42, %c0_43] : memref<512x128xf32, #tpu.memory_space<vmem>>, vector<512x128xf32>
    tpu.vector_store %arg17[%c0_42, %c0_43], %41 {strides = array<i32>} : memref<512x128xf32, #tpu.memory_space<vmem>>, vector<512x128xf32>,
    return
  }
  func.func @transform_0(%arg0: i32) -> (i32, i32) {
    %c0_i32 = arith.constant 0 : i32
    %c0_i32_0 = arith.constant 0 : i32
    return %arg0, %c0_i32 : i32, i32
  }
  func.func @transform_1(%arg0: i32) -> (i32, i32) {
    %c0_i32 = arith.constant 0 : i32
    %c0_i32_0 = arith.constant 0 : i32
    %c0_i32_1 = arith.constant 0 : i32
    return %c0_i32, %c0_i32_0 : i32, i32
  }
  func.func @transform_2(%arg0: i32) -> (i32, i32) {
    %c0_i32 = arith.constant 0 : i32
    %c0_i32_0 = arith.constant 0 : i32
    %c0_i32_1 = arith.constant 0 : i32
    return %c0_i32, %c0_i32_0 : i32, i32
  }
  func.func @transform_3(%arg0: i32) -> (i32, i32) {
    %c0_i32 = arith.constant 0 : i32
    %c0_i32_0 = arith.constant 0 : i32
    %c0_i32_1 = arith.constant 0 : i32
    return %c0_i32, %c0_i32_0 : i32, i32
  }
  func.func @transform_4(%arg0: i32) -> (i32, i32) {
    %c0_i32 = arith.constant 0 : i32
    %c0_i32_0 = arith.constant 0 : i32
    %c0_i32_1 = arith.constant 0 : i32
    return %c0_i32, %c0_i32_0 : i32, i32
  }
  func.func @transform_5(%arg0: i32) -> (i32, i32) {
    %c0_i32 = arith.constant 0 : i32
    %c0_i32_0 = arith.constant 0 : i32
    %c0_i32_1 = arith.constant 0 : i32
    return %c0_i32, %c0_i32_0 : i32, i32
  }
  func.func @transform_6(%arg0: i32) -> (i32, i32) {
    %c0_i32 = arith.constant 0 : i32
    %c0_i32_0 = arith.constant 0 : i32
    %c0_i32_1 = arith.constant 0 : i32
    return %c0_i32, %c0_i32_0 : i32, i32
  }
  func.func @transform_7(%arg0: i32) -> (i32, i32) {
    %c0_i32 = arith.constant 0 : i32
    %c0_i32_0 = arith.constant 0 : i32
    %c0_i32_1 = arith.constant 0 : i32
    return %c0_i32, %c0_i32_0 : i32, i32
  }
  func.func @transform_8(%arg0: i32) -> (i32, i32) {
    %c0_i32 = arith.constant 0 : i32
    %c0_i32_0 = arith.constant 0 : i32
    %c0_i32_1 = arith.constant 0 : i32
    return %c0_i32, %c0_i32_0 : i32, i32
  }
  func.func @transform_9(%arg0: i32) -> (i32, i32) {
    %c0_i32 = arith.constant 0 : i32
    %c0_i32_0 = arith.constant 0 : i32
    %c0_i32_1 = arith.constant 0 : i32
    return %c0_i32, %c0_i32_0 : i32, i32
  }
  func.func @transform_10(%arg0: i32) -> (i32, i32) {
    %c0_i32 = arith.constant 0 : i32
    %c0_i32_0 = arith.constant 0 : i32
    %c0_i32_1 = arith.constant 0 : i32
    return %c0_i32, %c0_i32_0 : i32, i32
  }
  func.func @transform_11(%arg0: i32) -> (i32, i32) {
    %c0_i32 = arith.constant 0 : i32
    %c0_i32_0 = arith.constant 0 : i32
    %c0_i32_1 = arith.constant 0 : i32
    return %c0_i32, %c0_i32_0 : i32, i32
  }
  func.func @transform_12(%arg0: i32) -> (i32, i32) {
    %c0_i32 = arith.constant 0 : i32
    %c0_i32_0 = arith.constant 0 : i32
    %c0_i32_1 = arith.constant 0 : i32
    return %c0_i32, %c0_i32_0 : i32, i32
  }
  func.func @transform_13(%arg0: i32) -> (i32, i32) {
    %c0_i32 = arith.constant 0 : i32
    %c0_i32_0 = arith.constant 0 : i32
    %c0_i32_1 = arith.constant 0 : i32
    return %c0_i32, %c0_i32_0 : i32, i32
  }
  func.func @transform_14(%arg0: i32) -> (i32, i32) {
    %c0_i32 = arith.constant 0 : i32
    %c0_i32_0 = arith.constant 0 : i32
    return %arg0, %c0_i32 : i32, i32
  }
  func.func @transform_15(%arg0: i32) -> (i32, i32) {
    %c0_i32 = arith.constant 0 : i32
    %c0_i32_0 = arith.constant 0 : i32
    return %arg0, %c0_i32 : i32, i32
  }
  func.func @transform_16(%arg0: i32) -> (i32, i32) {
    %c0_i32 = arith.constant 0 : i32
    %c0_i32_0 = arith.constant 0 : i32
    return %arg0, %c0_i32 : i32, i32
  }
}

</mosaic_0001>

<llo_original>
// kernel: tpu_custom_call.1
$region0: #{tpu_custom_call.1}
  #allocation0 [shape = 'u32[]', space=smem, size = 0x4, offset = 0x4, fixed_abs, tag = 'smem constant byte address 0x4 - core index']
  #allocation1 [shape = 'u32[144,128]{1,0:T(1,128)}', space=vmem, size = 0x12000, scoped, tag = 'internal scratch']
  %s0 = inlined_call_operand.hbm [shape: bf16[512,128], index: 0, kind: input, shape index: {}]
  %s1 = inlined_call_operand.hbm [shape: bf16[128,128], index: 1, kind: input, shape index: {}]
  %s2 = inlined_call_operand.hbm [shape: bf16[128,128], index: 2, kind: input, shape index: {}]
  %s3 = inlined_call_operand.vmem [shape: f32[1,128], index: 3, kind: input, shape index: {}]
  %s4 = inlined_call_operand.hbm [shape: bf16[128,128], index: 4, kind: input, shape index: {}]
  %s5 = inlined_call_operand.vmem [shape: f32[1,128], index: 5, kind: input, shape index: {}]
  %s6 = inlined_call_operand.hbm [shape: bf16[256,256], index: 6, kind: input, shape index: {}]
  %s7 = inlined_call_operand.vmem [shape: f32[1,256], index: 7, kind: input, shape index: {}]
  %s8 = inlined_call_operand.hbm [shape: bf16[256,256], index: 8, kind: input, shape index: {}]
  %s9 = inlined_call_operand.vmem [shape: f32[1,256], index: 9, kind: input, shape index: {}]
  %s10 = inlined_call_operand.hbm [shape: bf16[128,256], index: 10, kind: input, shape index: {}]
  %s11 = inlined_call_operand.vmem [shape: f32[1,256], index: 11, kind: input, shape index: {}]
  %s12 = inlined_call_operand.hbm [shape: bf16[256,128], index: 12, kind: input, shape index: {}]
  %s13 = inlined_call_operand.vmem [shape: f32[1,128], index: 13, kind: input, shape index: {}]
  %s14 = inlined_call_operand.hbm [shape: f32[512,128], index: 14, kind: output, shape index: {0}]
  %s15 = inlined_call_operand.hbm [shape: f32[512,128], index: 15, kind: output, shape index: {1}]
  %s16 = inlined_call_operand.hbm [shape: f32[512,128], index: 16, kind: output, shape index: {2}]
  %17 = xla_tuple %s14, %s15, %s16
  %s18 = sld [smem:[#allocation0]]
  $region114: #{tpu_custom_call.1} parent=0
    _
  %s20 = ssub.s32 1, %s18
  %s21 = scalar_select 0, %s20, %s18
  $region1: #{tpu_custom_call.1} parent=0
    #allocation2 [shape = 'u8[131072]{0}', space=vmem, size = 0x20000, scoped, tag = 'input window, operand 0, single buffered']
    #allocation3 [shape = 's32[1]{0}', space=sflag, size = 0x4, scoped, tag = 'scoped memory for tpu_custom_call.1']
    #allocation4 [shape = 's32[1]{0}', space=sflag, size = 0x4, scoped, tag = 'scoped memory for tpu_custom_call.1']
    #allocation5 [shape = 'u8[32768]{0}', space=vmem, size = 0x8000, scoped, tag = 'input window, operand 1, single buffered']
    #allocation6 [shape = 's32[1]{0}', space=sflag, size = 0x4, scoped, tag = 'scoped memory for tpu_custom_call.1']
    #allocation7 [shape = 'u8[32768]{0}', space=vmem, size = 0x8000, scoped, tag = 'input window, operand 2, single buffered']
    #allocation8 [shape = 'u8[32768]{0}', space=vmem, size = 0x8000, scoped, tag = 'input window, operand 4, single buffered']
    #allocation9 [shape = 's32[1]{0}', space=sflag, size = 0x4, scoped, tag = 'scoped memory for tpu_custom_call.1']
    #allocation10 [shape = 'u8[131072]{0}', space=vmem, size = 0x20000, scoped, tag = 'input window, operand 6, single buffered']
    #allocation11 [shape = 'u8[131072]{0}', space=vmem, size = 0x20000, scoped, tag = 'input window, operand 8, single buffered']
    #allocation12 [shape = 's32[1]{0}', space=sflag, size = 0x4, scoped, tag = 'scoped memory for tpu_custom_call.1']
    #allocation13 [shape = 'u8[65536]{0}', space=vmem, size = 0x10000, scoped, tag = 'input window, operand 10, single buffered']
    #allocation14 [shape = 'u8[65536]{0}', space=vmem, size = 0x10000, scoped, tag = 'input window, operand 12, single buffered']
    #allocation15 [shape = 's32[1]{0}', space=sflag, size = 0x4, scoped, tag = 'scoped memory for tpu_custom_call.1']
    #allocation16 [shape = 'u8[262144]{0}', space=vmem, size = 0x40000, scoped, tag = 'output window, operand 0, single buffered']
    #allocation17 [shape = 'u8[262144]{0}', space=vmem, size = 0x40000, scoped, tag = 'output window, operand 1, single buffered']
    #allocation18 [shape = 's32[1]{0}', space=sflag, size = 0x4, scoped, tag = 'scoped memory for tpu_custom_call.1']
    #allocation19 [shape = 'u8[262144]{0}', space=vmem, size = 0x40000, scoped, tag = 'output window, operand 2, single buffered']
    %22 = vsyncpa [#allocation3], 0
    %23 = vsyncpa [#allocation6], 0
    %24 = vsyncpa [#allocation9], 0
    %25 = vsyncpa [#allocation12], 0
    %26 = vsyncpa [#allocation15], 0
    %27 = vsyncpa [#allocation4], 0
    %28 = vsyncpa [#allocation18], 0
    // Predicated region
    $region2: #{tpu_custom_call.1} parent=1 // pred_check
      _
    $region3: #{tpu_custom_call.1} parent=1 // pred_check_branch
      %30 = sbr.rel (0) target = $region5
    $region4: #{tpu_custom_call.1} parent=1 // pred_region
      %s32 = ssub.s32 4096, 4096
      %33 = vsyncadd [#allocation3], %s32
      %s34 = sshll.u32 [#allocation2], 4
      %s35 = int_to_ptr.vmem [resolvable:$true] %s34
      %40 = dma.hbm_to_vmem [thread:$0]  %s0, 4096, %s35, [#allocation3], 64, 64, 4
    $region5: #{tpu_custom_call.1} parent=1 // pred_fallthru
      _
    // Predicated region
    $region6: #{tpu_custom_call.1} parent=1 // pred_check
      _
    $region7: #{tpu_custom_call.1} parent=1 // pred_check_branch
      %42 = sbr.rel (0) target = $region9
    $region8: #{tpu_custom_call.1} parent=1 // pred_region
      %s44 = ssub.s32 1024, 1024
      %45 = vsyncadd [#allocation6], %s44
      %s46 = sshll.u32 [#allocation5], 4
      %s47 = int_to_ptr.vmem [resolvable:$true] %s46
      %52 = dma.hbm_to_vmem [thread:$0]  %s1, 1024, %s47, [#allocation6], 64, 64, 4
    $region9: #{tpu_custom_call.1} parent=1 // pred_fallthru
      _
    // Predicated region
    $region10: #{tpu_custom_call.1} parent=1 // pred_check
      _
    $region11: #{tpu_custom_call.1} parent=1 // pred_check_branch
      %54 = sbr.rel (0) target = $region13
    $region12: #{tpu_custom_call.1} parent=1 // pred_region
      %s56 = ssub.s32 1024, 1024
      %57 = vsyncadd [#allocation6], %s56
      %s58 = sshll.u32 [#allocation7], 4
      %s59 = int_to_ptr.vmem [resolvable:$true] %s58
      %64 = dma.hbm_to_vmem [thread:$0]  %s2, 1024, %s59, [#allocation6], 64, 64, 4
    $region13: #{tpu_custom_call.1} parent=1 // pred_fallthru
      _
    // Predicated region
    $region14: #{tpu_custom_call.1} parent=1 // pred_check
      _
    $region15: #{tpu_custom_call.1} parent=1 // pred_check_branch
      %66 = sbr.rel (0) target = $region17
    $region16: #{tpu_custom_call.1} parent=1 // pred_region
      _
    $region17: #{tpu_custom_call.1} parent=1 // pred_fallthru
      _
    // Predicated region
    $region18: #{tpu_custom_call.1} parent=1 // pred_check
      _
    $region19: #{tpu_custom_call.1} parent=1 // pred_check_branch
      %68 = sbr.rel (0) target = $region21
    $region20: #{tpu_custom_call.1} parent=1 // pred_region
      %s70 = ssub.s32 1024, 1024
      %71 = vsyncadd [#allocation9], %s70
      %s72 = sshll.u32 [#allocation8], 4
      %s73 = int_to_ptr.vmem [resolvable:$true] %s72
      %78 = dma.hbm_to_vmem [thread:$0]  %s4, 1024, %s73, [#allocation9], 64, 64, 4
    $region21: #{tpu_custom_call.1} parent=1 // pred_fallthru
      _
    // Predicated region
    $region22: #{tpu_custom_call.1} parent=1 // pred_check
      _
    $region23: #{tpu_custom_call.1} parent=1 // pred_check_branch
      %80 = sbr.rel (0) target = $region25
    $region24: #{tpu_custom_call.1} parent=1 // pred_region
      _
    $region25: #{tpu_custom_call.1} parent=1 // pred_fallthru
      _
    // Predicated region
    $region26: #{tpu_custom_call.1} parent=1 // pred_check
      _
    $region27: #{tpu_custom_call.1} parent=1 // pred_check_branch
      %82 = sbr.rel (0) target = $region29
    $region28: #{tpu_custom_call.1} parent=1 // pred_region
      %s84 = ssub.s32 4096, 4096
      %85 = vsyncadd [#allocation9], %s84
      %s86 = sshll.u32 [#allocation10], 4
      %s87 = int_to_ptr.vmem [resolvable:$true] %s86
      %92 = dma.hbm_to_vmem [thread:$0]  %s6, 4096, %s87, [#allocation9], 128, 128, 8
    $region29: #{tpu_custom_call.1} parent=1 // pred_fallthru
      _
    // Predicated region
    $region30: #{tpu_custom_call.1} parent=1 // pred_check
      _
    $region31: #{tpu_custom_call.1} parent=1 // pred_check_branch
      %94 = sbr.rel (0) target = $region33
    $region32: #{tpu_custom_call.1} parent=1 // pred_region
      _
    $region33: #{tpu_custom_call.1} parent=1 // pred_fallthru
      _
    // Predicated region
    $region34: #{tpu_custom_call.1} parent=1 // pred_check
      _
    $region35: #{tpu_custom_call.1} parent=1 // pred_check_branch
      %96 = sbr.rel (0) target = $region37
    $region36: #{tpu_custom_call.1} parent=1 // pred_region
      %s98 = ssub.s32 4096, 4096
      %99 = vsyncadd [#allocation12], %s98
      %s100 = sshll.u32 [#allocation11], 4
      %s101 = int_to_ptr.vmem [resolvable:$true] %s100
      %106 = dma.hbm_to_vmem [thread:$0]  %s8, 4096, %s101, [#allocation12], 128, 128, 8
    $region37: #{tpu_custom_call.1} parent=1 // pred_fallthru
      _
    // Predicated region
    $region38: #{tpu_custom_call.1} parent=1 // pred_check
      _
    $region39: #{tpu_custom_call.1} parent=1 // pred_check_branch
      %108 = sbr.rel (0) target = $region41
    $region40: #{tpu_custom_call.1} parent=1 // pred_region
      _
    $region41: #{tpu_custom_call.1} parent=1 // pred_fallthru
      _
    // Predicated region
    $region42: #{tpu_custom_call.1} parent=1 // pred_check
      _
    $region43: #{tpu_custom_call.1} parent=1 // pred_check_branch
      %110 = sbr.rel (0) target = $region45
    $region44: #{tpu_custom_call.1} parent=1 // pred_region
      %s112 = ssub.s32 2048, 2048
      %113 = vsyncadd [#allocation12], %s112
      %s114 = sshll.u32 [#allocation13], 4
      %s115 = int_to_ptr.vmem [resolvable:$true] %s114
      %120 = dma.hbm_to_vmem [thread:$0]  %s10, 2048, %s115, [#allocation12], 128, 128, 8
    $region45: #{tpu_custom_call.1} parent=1 // pred_fallthru
      _
    // Predicated region
    $region46: #{tpu_custom_call.1} parent=1 // pred_check
      _
    $region47: #{tpu_custom_call.1} parent=1 // pred_check_branch
      %122 = sbr.rel (0) target = $region49
    $region48: #{tpu_custom_call.1} parent=1 // pred_region
      _
    $region49: #{tpu_custom_call.1} parent=1 // pred_fallthru
      _
    // Predicated region
    $region50: #{tpu_custom_call.1} parent=1 // pred_check
      _
    $region51: #{tpu_custom_call.1} parent=1 // pred_check_branch
      %124 = sbr.rel (0) target = $region53
    $region52: #{tpu_custom_call.1} parent=1 // pred_region
      %s126 = ssub.s32 2048, 2048
      %127 = vsyncadd [#allocation15], %s126
      %s128 = sshll.u32 [#allocation14], 4
      %s129 = int_to_ptr.vmem [resolvable:$true] %s128
      %134 = dma.hbm_to_vmem [thread:$0]  %s12, 2048, %s129, [#allocation15], 64, 64, 4
    $region53: #{tpu_custom_call.1} parent=1 // pred_fallthru
      _
    // Predicated region
    $region54: #{tpu_custom_call.1} parent=1 // pred_check
      _
    $region55: #{tpu_custom_call.1} parent=1 // pred_check_branch
      %136 = sbr.rel (0) target = $region57
    $region56: #{tpu_custom_call.1} parent=1 // pred_region
      _
    $region57: #{tpu_custom_call.1} parent=1 // pred_fallthru
      _
    // Predicated region
    $region58: #{tpu_custom_call.1} parent=1 // pred_check
      _
    $region59: #{tpu_custom_call.1} parent=1 // pred_check_branch
      %138 = sbr.rel (0) target = $region61
    $region60: #{tpu_custom_call.1} parent=1 // pred_region
      %139 = dma.done [#allocation3], 4096
    $region61: #{tpu_custom_call.1} parent=1 // pred_fallthru
      _
    // Predicated region
    $region62: #{tpu_custom_call.1} parent=1 // pred_check
      _
    $region63: #{tpu_custom_call.1} parent=1 // pred_check_branch
      %141 = sbr.rel (0) target = $region65
    $region64: #{tpu_custom_call.1} parent=1 // pred_region
      %142 = dma.done [#allocation6], 1024
    $region65: #{tpu_custom_call.1} parent=1 // pred_fallthru
      _
    // Predicated region
    $region66: #{tpu_custom_call.1} parent=1 // pred_check
      _
    $region67: #{tpu_custom_call.1} parent=1 // pred_check_branch
      %144 = sbr.rel (0) target = $region69
    $region68: #{tpu_custom_call.1} parent=1 // pred_region
      %145 = dma.done [#allocation6], 1024
    $region69: #{tpu_custom_call.1} parent=1 // pred_fallthru
      _
    // Predicated region
    $region70: #{tpu_custom_call.1} parent=1 // pred_check
      _
    $region71: #{tpu_custom_call.1} parent=1 // pred_check_branch
      %147 = sbr.rel (0) target = $region73
    $region72: #{tpu_custom_call.1} parent=1 // pred_region
      %148 = dma.done [#allocation9], 1024
    $region73: #{tpu_custom_call.1} parent=1 // pred_fallthru
      _
    // Predicated region
    $region74: #{tpu_custom_call.1} parent=1 // pred_check
      _
    $region75: #{tpu_custom_call.1} parent=1 // pred_check_branch
      %150 = sbr.rel (0) target = $region77
    $region76: #{tpu_custom_call.1} parent=1 // pred_region
      %151 = dma.done [#allocation9], 4096
    $region77: #{tpu_custom_call.1} parent=1 // pred_fallthru
      _
    // Predicated region
    $region78: #{tpu_custom_call.1} parent=1 // pred_check
      _
    $region79: #{tpu_custom_call.1} parent=1 // pred_check_branch
      %153 = sbr.rel (0) target = $region81
    $region80: #{tpu_custom_call.1} parent=1 // pred_region
      %154 = dma.done [#allocation12], 4096
    $region81: #{tpu_custom_call.1} parent=1 // pred_fallthru
      _
    // Predicated region
    $region82: #{tpu_custom_call.1} parent=1 // pred_check
      _
    $region83: #{tpu_custom_call.1} parent=1 // pred_check_branch
      %156 = sbr.rel (0) target = $region85
    $region84: #{tpu_custom_call.1} parent=1 // pred_region
      %157 = dma.done [#allocation12], 2048
    $region85: #{tpu_custom_call.1} parent=1 // pred_fallthru
      _
    // Predicated region
    $region86: #{tpu_custom_call.1} parent=1 // pred_check
      _
    $region87: #{tpu_custom_call.1} parent=1 // pred_check_branch
      %159 = sbr.rel (0) target = $region89
    $region88: #{tpu_custom_call.1} parent=1 // pred_region
      %160 = dma.done [#allocation15], 2048
    $region89: #{tpu_custom_call.1} parent=1 // pred_fallthru
      _
    %v162 = vld [vmem:[#allocation2] sm:$0xf]
    %v163 = vld [vmem:[#allocation2 + $0x4] sm:$0xf]
    %v164 = vld [vmem:[#allocation2 + $0x8] sm:$0xf]
    %v165 = vld [vmem:[#allocation2 + $0xc] sm:$0xf]
    %v166 = vld [vmem:[#allocation2 + $0x10] sm:$0xf]
    %v167 = vld [vmem:[#allocation2 + $0x14] sm:$0xf]
    %v168 = vld [vmem:[#allocation2 + $0x18] sm:$0xf]
    %v169 = vld [vmem:[#allocation2 + $0x1c] sm:$0xf]
    %v170 = vld [vmem:[#allocation2 + $0x20] sm:$0xf]
    %v171 = vld [vmem:[#allocation2 + $0x24] sm:$0xf]
    %v172 = vld [vmem:[#allocation2 + $0x28] sm:$0xf]
    %v173 = vld [vmem:[#allocation2 + $0x2c] sm:$0xf]
    %v174 = vld [vmem:[#allocation2 + $0x30] sm:$0xf]
    %v175 = vld [vmem:[#allocation2 + $0x34] sm:$0xf]
    %v176 = vld [vmem:[#allocation2 + $0x38] sm:$0xf]
    %v177 = vld [vmem:[#allocation2 + $0x3c] sm:$0xf]
    %v178 = vld [vmem:[#allocation2 + $0x40] sm:$0xf]
    %v179 = vld [vmem:[#allocation2 + $0x44] sm:$0xf]
    %v180 = vld [vmem:[#allocation2 + $0x48] sm:$0xf]
    %v181 = vld [vmem:[#allocation2 + $0x4c] sm:$0xf]
    %v182 = vld [vmem:[#allocation2 + $0x50] sm:$0xf]
    %v183 = vld [vmem:[#allocation2 + $0x54] sm:$0xf]
    %v184 = vld [vmem:[#allocation2 + $0x58] sm:$0xf]
    %v185 = vld [vmem:[#allocation2 + $0x5c] sm:$0xf]
    %v186 = vld [vmem:[#allocation2 + $0x60] sm:$0xf]
    %v187 = vld [vmem:[#allocation2 + $0x64] sm:$0xf]
    %v188 = vld [vmem:[#allocation2 + $0x68] sm:$0xf]
    %v189 = vld [vmem:[#allocation2 + $0x6c] sm:$0xf]
    %v190 = vld [vmem:[#allocation2 + $0x70] sm:$0xf]
    %v191 = vld [vmem:[#allocation2 + $0x74] sm:$0xf]
    %v192 = vld [vmem:[#allocation2 + $0x78] sm:$0xf]
    %v193 = vld [vmem:[#allocation2 + $0x7c] sm:$0xf]
    %v194 = vld [vmem:[#allocation2 + $0x80] sm:$0xf]
    %v195 = vld [vmem:[#allocation2 + $0x84] sm:$0xf]
    %v196 = vld [vmem:[#allocation2 + $0x88] sm:$0xf]
    %v197 = vld [vmem:[#allocation2 + $0x8c] sm:$0xf]
    %v198 = vld [vmem:[#allocation2 + $0x90] sm:$0xf]
    %v199 = vld [vmem:[#allocation2 + $0x94] sm:$0xf]
    %v200 = vld [vmem:[#allocation2 + $0x98] sm:$0xf]
    %v201 = vld [vmem:[#allocation2 + $0x9c] sm:$0xf]
    %v202 = vld [vmem:[#allocation2 + $0xa0] sm:$0xf]
    %v203 = vld [vmem:[#allocation2 + $0xa4] sm:$0xf]
    %v204 = vld [vmem:[#allocation2 + $0xa8] sm:$0xf]
    %v205 = vld [vmem:[#allocation2 + $0xac] sm:$0xf]
    %v206 = vld [vmem:[#allocation2 + $0xb0] sm:$0xf]
    %v207 = vld [vmem:[#allocation2 + $0xb4] sm:$0xf]
    %v208 = vld [vmem:[#allocation2 + $0xb8] sm:$0xf]
    %v209 = vld [vmem:[#allocation2 + $0xbc] sm:$0xf]
    %v210 = vld [vmem:[#allocation2 + $0xc0] sm:$0xf]
    %v211 = vld [vmem:[#allocation2 + $0xc4] sm:$0xf]
    %v212 = vld [vmem:[#allocation2 + $0xc8] sm:$0xf]
    %v213 = vld [vmem:[#allocation2 + $0xcc] sm:$0xf]
    %v214 = vld [vmem:[#allocation2 + $0xd0] sm:$0xf]
    %v215 = vld [vmem:[#allocation2 + $0xd4] sm:$0xf]
    %v216 = vld [vmem:[#allocation2 + $0xd8] sm:$0xf]
    %v217 = vld [vmem:[#allocation2 + $0xdc] sm:$0xf]
    %v218 = vld [vmem:[#allocation2 + $0xe0] sm:$0xf]
    %v219 = vld [vmem:[#allocation2 + $0xe4] sm:$0xf]
    %v220 = vld [vmem:[#allocation2 + $0xe8] sm:$0xf]
    %v221 = vld [vmem:[#allocation2 + $0xec] sm:$0xf]
    %v222 = vld [vmem:[#allocation2 + $0xf0] sm:$0xf]
    %v223 = vld [vmem:[#allocation2 + $0xf4] sm:$0xf]
    %v224 = vld [vmem:[#allocation2 + $0xf8] sm:$0xf]
    %v225 = vld [vmem:[#allocation2 + $0xfc] sm:$0xf]
    %v226 = vunpack.c.l.bf16 %v162
    %v227 = vunpack.c.l.bf16 %v163
    %v228 = vunpack.c.l.bf16 %v164
    %v229 = vunpack.c.l.bf16 %v165
    %v230 = vunpack.c.l.bf16 %v166
    %v231 = vunpack.c.l.bf16 %v167
    %v232 = vunpack.c.l.bf16 %v168
    %v233 = vunpack.c.l.bf16 %v169
    %v234 = vunpack.c.l.bf16 %v170
    %v235 = vunpack.c.l.bf16 %v171
    %v236 = vunpack.c.l.bf16 %v172
    %v237 = vunpack.c.l.bf16 %v173
    %v238 = vunpack.c.l.bf16 %v174
    %v239 = vunpack.c.l.bf16 %v175
    %v240 = vunpack.c.l.bf16 %v176
    %v241 = vunpack.c.l.bf16 %v177
    %v242 = vunpack.c.l.bf16 %v178
    %v243 = vunpack.c.l.bf16 %v179
    %v244 = vunpack.c.l.bf16 %v180
    %v245 = vunpack.c.l.bf16 %v181
    %v246 = vunpack.c.l.bf16 %v182
    %v247 = vunpack.c.l.bf16 %v183
    %v248 = vunpack.c.l.bf16 %v184
    %v249 = vunpack.c.l.bf16 %v185
    %v250 = vunpack.c.l.bf16 %v186
    %v251 = vunpack.c.l.bf16 %v187
    %v252 = vunpack.c.l.bf16 %v188
    %v253 = vunpack.c.l.bf16 %v189
    %v254 = vunpack.c.l.bf16 %v190
    %v255 = vunpack.c.l.bf16 %v191
    %v256 = vunpack.c.l.bf16 %v192
    %v257 = vunpack.c.l.bf16 %v193
    %v258 = vunpack.c.l.bf16 %v194
    %v259 = vunpack.c.l.bf16 %v195
    %v260 = vunpack.c.l.bf16 %v196
    %v261 = vunpack.c.l.bf16 %v197
    %v262 = vunpack.c.l.bf16 %v198
    %v263 = vunpack.c.l.bf16 %v199
    %v264 = vunpack.c.l.bf16 %v200
    %v265 = vunpack.c.l.bf16 %v201
    %v266 = vunpack.c.l.bf16 %v202
    %v267 = vunpack.c.l.bf16 %v203
    %v268 = vunpack.c.l.bf16 %v204
    %v269 = vunpack.c.l.bf16 %v205
    %v270 = vunpack.c.l.bf16 %v206
    %v271 = vunpack.c.l.bf16 %v207
    %v272 = vunpack.c.l.bf16 %v208
    %v273 = vunpack.c.l.bf16 %v209
    %v274 = vunpack.c.l.bf16 %v210
    %v275 = vunpack.c.l.bf16 %v211
    %v276 = vunpack.c.l.bf16 %v212
    %v277 = vunpack.c.l.bf16 %v213
    %v278 = vunpack.c.l.bf16 %v214
    %v279 = vunpack.c.l.bf16 %v215
    %v280 = vunpack.c.l.bf16 %v216
    %v281 = vunpack.c.l.bf16 %v217
    %v282 = vunpack.c.l.bf16 %v218
    %v283 = vunpack.c.l.bf16 %v219
    %v284 = vunpack.c.l.bf16 %v220
    %v285 = vunpack.c.l.bf16 %v221
    %v286 = vunpack.c.l.bf16 %v222
    %v287 = vunpack.c.l.bf16 %v223
    %v288 = vunpack.c.l.bf16 %v224
    %v289 = vunpack.c.l.bf16 %v225
    %290 = vadd.xlane.f32.xlu0 %v226
    %v291 = vpop.xlane.xlu0 %290
    %292 = vadd.xlane.f32.xlu0 %v227
    %v293 = vpop.xlane.xlu0 %292
    %294 = vadd.xlane.f32.xlu0 %v228
    %v295 = vpop.xlane.xlu0 %294
    %296 = vadd.xlane.f32.xlu0 %v229
    %v297 = vpop.xlane.xlu0 %296
    %298 = vadd.xlane.f32.xlu0 %v230
    %v299 = vpop.xlane.xlu0 %298
    %300 = vadd.xlane.f32.xlu0 %v231
    %v301 = vpop.xlane.xlu0 %300
    %302 = vadd.xlane.f32.xlu0 %v232
    %v303 = vpop.xlane.xlu0 %302
    %304 = vadd.xlane.f32.xlu0 %v233
    %v305 = vpop.xlane.xlu0 %304
    %306 = vadd.xlane.f32.xlu0 %v234
    %v307 = vpop.xlane.xlu0 %306
    %308 = vadd.xlane.f32.xlu0 %v235
    %v309 = vpop.xlane.xlu0 %308
    %310 = vadd.xlane.f32.xlu0 %v236
    %v311 = vpop.xlane.xlu0 %310
    %312 = vadd.xlane.f32.xlu0 %v237
    %v313 = vpop.xlane.xlu0 %312
    %314 = vadd.xlane.f32.xlu0 %v238
    %v315 = vpop.xlane.xlu0 %314
    %316 = vadd.xlane.f32.xlu0 %v239
    %v317 = vpop.xlane.xlu0 %316
    %318 = vadd.xlane.f32.xlu0 %v240
    %v319 = vpop.xlane.xlu0 %318
    %320 = vadd.xlane.f32.xlu0 %v241
    %v321 = vpop.xlane.xlu0 %320
    %322 = vadd.xlane.f32.xlu0 %v242
    %v323 = vpop.xlane.xlu0 %322
    %324 = vadd.xlane.f32.xlu0 %v243
    %v325 = vpop.xlane.xlu0 %324
    %326 = vadd.xlane.f32.xlu0 %v244
    %v327 = vpop.xlane.xlu0 %326
    %328 = vadd.xlane.f32.xlu0 %v245
    %v329 = vpop.xlane.xlu0 %328
    %330 = vadd.xlane.f32.xlu0 %v246
    %v331 = vpop.xlane.xlu0 %330
    %332 = vadd.xlane.f32.xlu0 %v247
    %v333 = vpop.xlane.xlu0 %332
    %334 = vadd.xlane.f32.xlu0 %v248
    %v335 = vpop.xlane.xlu0 %334
    %336 = vadd.xlane.f32.xlu0 %v249
    %v337 = vpop.xlane.xlu0 %336
    %338 = vadd.xlane.f32.xlu0 %v250
    %v339 = vpop.xlane.xlu0 %338
    %340 = vadd.xlane.f32.xlu0 %v251
    %v341 = vpop.xlane.xlu0 %340
    %342 = vadd.xlane.f32.xlu0 %v252
    %v343 = vpop.xlane.xlu0 %342
    %344 = vadd.xlane.f32.xlu0 %v253
    %v345 = vpop.xlane.xlu0 %344
    %346 = vadd.xlane.f32.xlu0 %v254
    %v347 = vpop.xlane.xlu0 %346
    %348 = vadd.xlane.f32.xlu0 %v255
    %v349 = vpop.xlane.xlu0 %348
    %350 = vadd.xlane.f32.xlu0 %v256
    %v351 = vpop.xlane.xlu0 %350
    %352 = vadd.xlane.f32.xlu0 %v257
    %v353 = vpop.xlane.xlu0 %352
    %354 = vadd.xlane.f32.xlu0 %v258
    %v355 = vpop.xlane.xlu0 %354
    %356 = vadd.xlane.f32.xlu0 %v259
    %v357 = vpop.xlane.xlu0 %356
    %358 = vadd.xlane.f32.xlu0 %v260
    %v359 = vpop.xlane.xlu0 %358
    %360 = vadd.xlane.f32.xlu0 %v261
    %v361 = vpop.xlane.xlu0 %360
    %362 = vadd.xlane.f32.xlu0 %v262
    %v363 = vpop.xlane.xlu0 %362
    %364 = vadd.xlane.f32.xlu0 %v263
    %v365 = vpop.xlane.xlu0 %364
    %366 = vadd.xlane.f32.xlu0 %v264
    %v367 = vpop.xlane.xlu0 %366
    %368 = vadd.xlane.f32.xlu0 %v265
    %v369 = vpop.xlane.xlu0 %368
    %370 = vadd.xlane.f32.xlu0 %v266
    %v371 = vpop.xlane.xlu0 %370
    %372 = vadd.xlane.f32.xlu0 %v267
    %v373 = vpop.xlane.xlu0 %372
    %374 = vadd.xlane.f32.xlu0 %v268
    %v375 = vpop.xlane.xlu0 %374
    %376 = vadd.xlane.f32.xlu0 %v269
    %v377 = vpop.xlane.xlu0 %376
    %378 = vadd.xlane.f32.xlu0 %v270
    %v379 = vpop.xlane.xlu0 %378
    %380 = vadd.xlane.f32.xlu0 %v271
    %v381 = vpop.xlane.xlu0 %380
    %382 = vadd.xlane.f32.xlu0 %v272
    %v383 = vpop.xlane.xlu0 %382
    %384 = vadd.xlane.f32.xlu0 %v273
    %v385 = vpop.xlane.xlu0 %384
    %386 = vadd.xlane.f32.xlu0 %v274
    %v387 = vpop.xlane.xlu0 %386
    %388 = vadd.xlane.f32.xlu0 %v275
    %v389 = vpop.xlane.xlu0 %388
    %390 = vadd.xlane.f32.xlu0 %v276
    %v391 = vpop.xlane.xlu0 %390
    %392 = vadd.xlane.f32.xlu0 %v277
    %v393 = vpop.xlane.xlu0 %392
    %394 = vadd.xlane.f32.xlu0 %v278
    %v395 = vpop.xlane.xlu0 %394
    %396 = vadd.xlane.f32.xlu0 %v279
    %v397 = vpop.xlane.xlu0 %396
    %398 = vadd.xlane.f32.xlu0 %v280
    %v399 = vpop.xlane.xlu0 %398
    %400 = vadd.xlane.f32.xlu0 %v281
    %v401 = vpop.xlane.xlu0 %400
    %402 = vadd.xlane.f32.xlu0 %v282
    %v403 = vpop.xlane.xlu0 %402
    %404 = vadd.xlane.f32.xlu0 %v283
    %v405 = vpop.xlane.xlu0 %404
    %406 = vadd.xlane.f32.xlu0 %v284
    %v407 = vpop.xlane.xlu0 %406
    %408 = vadd.xlane.f32.xlu0 %v285
    %v409 = vpop.xlane.xlu0 %408
    %410 = vadd.xlane.f32.xlu0 %v286
    %v411 = vpop.xlane.xlu0 %410
    %412 = vadd.xlane.f32.xlu0 %v287
    %v413 = vpop.xlane.xlu0 %412
    %414 = vadd.xlane.f32.xlu0 %v288
    %v415 = vpop.xlane.xlu0 %414
    %416 = vadd.xlane.f32.xlu0 %v289
    %v417 = vpop.xlane.xlu0 %416
    %v418 = vmax.f32 %v291, 1.0
    %v419 = vmax.f32 %v293, 1.0
    %v420 = vmax.f32 %v295, 1.0
    %v421 = vmax.f32 %v297, 1.0
    %v422 = vmax.f32 %v299, 1.0
    %v423 = vmax.f32 %v301, 1.0
    %v424 = vmax.f32 %v303, 1.0
    %v425 = vmax.f32 %v305, 1.0
    %v426 = vmax.f32 %v307, 1.0
    %v427 = vmax.f32 %v309, 1.0
    %v428 = vmax.f32 %v311, 1.0
    %v429 = vmax.f32 %v313, 1.0
    %v430 = vmax.f32 %v315, 1.0
    %v431 = vmax.f32 %v317, 1.0
    %v432 = vmax.f32 %v319, 1.0
    %v433 = vmax.f32 %v321, 1.0
    %v434 = vmax.f32 %v323, 1.0
    %v435 = vmax.f32 %v325, 1.0
    %v436 = vmax.f32 %v327, 1.0
    %v437 = vmax.f32 %v329, 1.0
    %v438 = vmax.f32 %v331, 1.0
    %v439 = vmax.f32 %v333, 1.0
    %v440 = vmax.f32 %v335, 1.0
    %v441 = vmax.f32 %v337, 1.0
    %v442 = vmax.f32 %v339, 1.0
    %v443 = vmax.f32 %v341, 1.0
    %v444 = vmax.f32 %v343, 1.0
    %v445 = vmax.f32 %v345, 1.0
    %v446 = vmax.f32 %v347, 1.0
    %v447 = vmax.f32 %v349, 1.0
    %v448 = vmax.f32 %v351, 1.0
    %v449 = vmax.f32 %v353, 1.0
    %v450 = vmax.f32 %v355, 1.0
    %v451 = vmax.f32 %v357, 1.0
    %v452 = vmax.f32 %v359, 1.0
    %v453 = vmax.f32 %v361, 1.0
    %v454 = vmax.f32 %v363, 1.0
    %v455 = vmax.f32 %v365, 1.0
    %v456 = vmax.f32 %v367, 1.0
    %v457 = vmax.f32 %v369, 1.0
    %v458 = vmax.f32 %v371, 1.0
    %v459 = vmax.f32 %v373, 1.0
    %v460 = vmax.f32 %v375, 1.0
    %v461 = vmax.f32 %v377, 1.0
    %v462 = vmax.f32 %v379, 1.0
    %v463 = vmax.f32 %v381, 1.0
    %v464 = vmax.f32 %v383, 1.0
    %v465 = vmax.f32 %v385, 1.0
    %v466 = vmax.f32 %v387, 1.0
    %v467 = vmax.f32 %v389, 1.0
    %v468 = vmax.f32 %v391, 1.0
    %v469 = vmax.f32 %v393, 1.0
    %v470 = vmax.f32 %v395, 1.0
    %v471 = vmax.f32 %v397, 1.0
    %v472 = vmax.f32 %v399, 1.0
    %v473 = vmax.f32 %v401, 1.0
    %v474 = vmax.f32 %v403, 1.0
    %v475 = vmax.f32 %v405, 1.0
    %v476 = vmax.f32 %v407, 1.0
    %v477 = vmax.f32 %v409, 1.0
    %v478 = vmax.f32 %v411, 1.0
    %v479 = vmax.f32 %v413, 1.0
    %v480 = vmax.f32 %v415, 1.0
    %v481 = vmax.f32 %v417, 1.0
    %v482 = vrcp.pop %v418
    %v483 = vrcp.pop %v419
    %v484 = vrcp.pop %v420
    %v485 = vrcp.pop %v421
    %v486 = vrcp.pop %v422
    %v487 = vrcp.pop %v423
    %v488 = vrcp.pop %v424
    %v489 = vrcp.pop %v425
    %v490 = vrcp.pop %v426
    %v491 = vrcp.pop %v427
    %v492 = vrcp.pop %v428
    %v493 = vrcp.pop %v429
    %v494 = vrcp.pop %v430
    %v495 = vrcp.pop %v431
    %v496 = vrcp.pop %v432
    %v497 = vrcp.pop %v433
    %v498 = vrcp.pop %v434
    %v499 = vrcp.pop %v435
    %v500 = vrcp.pop %v436
    %v501 = vrcp.pop %v437
    %v502 = vrcp.pop %v438
    %v503 = vrcp.pop %v439
    %v504 = vrcp.pop %v440
    %v505 = vrcp.pop %v441
    %v506 = vrcp.pop %v442
    %v507 = vrcp.pop %v443
    %v508 = vrcp.pop %v444
    %v509 = vrcp.pop %v445
    %v510 = vrcp.pop %v446
    %v511 = vrcp.pop %v447
    %v512 = vrcp.pop %v448
    %v513 = vrcp.pop %v449
    %v514 = vrcp.pop %v450
    %v515 = vrcp.pop %v451
    %v516 = vrcp.pop %v452
    %v517 = vrcp.pop %v453
    %v518 = vrcp.pop %v454
    %v519 = vrcp.pop %v455
    %v520 = vrcp.pop %v456
    %v521 = vrcp.pop %v457
    %v522 = vrcp.pop %v458
    %v523 = vrcp.pop %v459
    %v524 = vrcp.pop %v460
    %v525 = vrcp.pop %v461
    %v526 = vrcp.pop %v462
    %v527 = vrcp.pop %v463
    %v528 = vrcp.pop %v464
    %v529 = vrcp.pop %v465
    %v530 = vrcp.pop %v466
    %v531 = vrcp.pop %v467
    %v532 = vrcp.pop %v468
    %v533 = vrcp.pop %v469
    %v534 = vrcp.pop %v470
    %v535 = vrcp.pop %v471
    %v536 = vrcp.pop %v472
    %v537 = vrcp.pop %v473
    %v538 = vrcp.pop %v474
    %v539 = vrcp.pop %v475
    %v540 = vrcp.pop %v476
    %v541 = vrcp.pop %v477
    %v542 = vrcp.pop %v478
    %v543 = vrcp.pop %v479
    %v544 = vrcp.pop %v480
    %v545 = vrcp.pop %v481
    %v546 = vld [vmem:[#allocation5] sm:$0xf]
    %v547 = vld [vmem:[#allocation5 + $0x4] sm:$0xf]
    %v548 = vld [vmem:[#allocation5 + $0x8] sm:$0xf]
    %v549 = vld [vmem:[#allocation5 + $0xc] sm:$0xf]
    %v550 = vld [vmem:[#allocation5 + $0x10] sm:$0xf]
    %v551 = vld [vmem:[#allocation5 + $0x14] sm:$0xf]
    %v552 = vld [vmem:[#allocation5 + $0x18] sm:$0xf]
    %v553 = vld [vmem:[#allocation5 + $0x1c] sm:$0xf]
    %v554 = vld [vmem:[#allocation5 + $0x20] sm:$0xf]
    %v555 = vld [vmem:[#allocation5 + $0x24] sm:$0xf]
    %v556 = vld [vmem:[#allocation5 + $0x28] sm:$0xf]
    %v557 = vld [vmem:[#allocation5 + $0x2c] sm:$0xf]
    %v558 = vld [vmem:[#allocation5 + $0x30] sm:$0xf]
    %v559 = vld [vmem:[#allocation5 + $0x34] sm:$0xf]
    %v560 = vld [vmem:[#allocation5 + $0x38] sm:$0xf]
    %v561 = vld [vmem:[#allocation5 + $0x3c] sm:$0xf]
    %v626 = vunpack.c.l.b16 %v162
    %v627 = vunpack.c.l.b16 %v163
    %v628 = vunpack.c.l.b16 %v164
    %v629 = vunpack.c.l.b16 %v165
    %v630 = vunpack.c.l.b16 %v166
    %v631 = vunpack.c.l.b16 %v167
    %v632 = vunpack.c.l.b16 %v168
    %v633 = vunpack.c.l.b16 %v169
    %v634 = vunpack.c.l.b16 %v170
    %v635 = vunpack.c.l.b16 %v171
    %v636 = vunpack.c.l.b16 %v172
    %v637 = vunpack.c.l.b16 %v173
    %v638 = vunpack.c.l.b16 %v174
    %v639 = vunpack.c.l.b16 %v175
    %v640 = vunpack.c.l.b16 %v176
    %v641 = vunpack.c.l.b16 %v177
    %v642 = vunpack.c.l.b16 %v178
    %v643 = vunpack.c.l.b16 %v179
    %v644 = vunpack.c.l.b16 %v180
    %v645 = vunpack.c.l.b16 %v181
    %v646 = vunpack.c.l.b16 %v182
    %v647 = vunpack.c.l.b16 %v183
    %v648 = vunpack.c.l.b16 %v184
    %v649 = vunpack.c.l.b16 %v185
    %v650 = vunpack.c.l.b16 %v186
    %v651 = vunpack.c.l.b16 %v187
    %v652 = vunpack.c.l.b16 %v188
    %v653 = vunpack.c.l.b16 %v189
    %v654 = vunpack.c.l.b16 %v190
    %v655 = vunpack.c.l.b16 %v191
    %v656 = vunpack.c.l.b16 %v192
    %v657 = vunpack.c.l.b16 %v193
    %v658 = vunpack.c.l.b16 %v194
    %v659 = vunpack.c.l.b16 %v195
    %v660 = vunpack.c.l.b16 %v196
    %v661 = vunpack.c.l.b16 %v197
    %v662 = vunpack.c.l.b16 %v198
    %v663 = vunpack.c.l.b16 %v199
    %v664 = vunpack.c.l.b16 %v200
    %v665 = vunpack.c.l.b16 %v201
    %v666 = vunpack.c.l.b16 %v202
    %v667 = vunpack.c.l.b16 %v203
    %v668 = vunpack.c.l.b16 %v204
    %v669 = vunpack.c.l.b16 %v205
    %v670 = vunpack.c.l.b16 %v206
    %v671 = vunpack.c.l.b16 %v207
    %v672 = vunpack.c.l.b16 %v208
    %v673 = vunpack.c.l.b16 %v209
    %v674 = vunpack.c.l.b16 %v210
    %v675 = vunpack.c.l.b16 %v211
    %v676 = vunpack.c.l.b16 %v212
    %v677 = vunpack.c.l.b16 %v213
    %v678 = vunpack.c.l.b16 %v214
    %v679 = vunpack.c.l.b16 %v215
    %v680 = vunpack.c.l.b16 %v216
    %v681 = vunpack.c.l.b16 %v217
    %v682 = vunpack.c.l.b16 %v218
    %v683 = vunpack.c.l.b16 %v219
    %v684 = vunpack.c.l.b16 %v220
    %v685 = vunpack.c.l.b16 %v221
    %v686 = vunpack.c.l.b16 %v222
    %v687 = vunpack.c.l.b16 %v223
    %v688 = vunpack.c.l.b16 %v224
    %v689 = vunpack.c.l.b16 %v225
    %v690 = vpack.c.b16 %v627, %v626
    %v691 = vpack.c.b16 %v629, %v628
    %v692 = vpack.c.b16 %v631, %v630
    %v693 = vpack.c.b16 %v633, %v632
    %v694 = vpack.c.b16 %v635, %v634
    %v695 = vpack.c.b16 %v637, %v636
    %v696 = vpack.c.b16 %v639, %v638
    %v697 = vpack.c.b16 %v641, %v640
    %v698 = vpack.c.b16 %v643, %v642
    %v699 = vpack.c.b16 %v645, %v644
    %v700 = vpack.c.b16 %v647, %v646
    %v701 = vpack.c.b16 %v649, %v648
    %v702 = vpack.c.b16 %v651, %v650
    %v703 = vpack.c.b16 %v653, %v652
    %v704 = vpack.c.b16 %v655, %v654
    %v705 = vpack.c.b16 %v657, %v656
    %v706 = vpack.c.b16 %v659, %v658
    %v707 = vpack.c.b16 %v661, %v660
    %v708 = vpack.c.b16 %v663, %v662
    %v709 = vpack.c.b16 %v665, %v664
    %v710 = vpack.c.b16 %v667, %v666
    %v711 = vpack.c.b16 %v669, %v668
    %v712 = vpack.c.b16 %v671, %v670
    %v713 = vpack.c.b16 %v673, %v672
    %v714 = vpack.c.b16 %v675, %v674
    %v715 = vpack.c.b16 %v677, %v676
    %v716 = vpack.c.b16 %v679, %v678
    %v717 = vpack.c.b16 %v681, %v680
    %v718 = vpack.c.b16 %v683, %v682
    %v719 = vpack.c.b16 %v685, %v684
    %v720 = vpack.c.b16 %v687, %v686
    %v721 = vpack.c.b16 %v689, %v688
    %v770 = vunpack.c.l.b16 %v546
    %v771 = vunpack.c.l.b16 %v547
    %v772 = vunpack.c.l.b16 %v548
    %v773 = vunpack.c.l.b16 %v549
    %v774 = vunpack.c.l.b16 %v550
    %v775 = vunpack.c.l.b16 %v551
    %v776 = vunpack.c.l.b16 %v552
    %v777 = vunpack.c.l.b16 %v553
    %v778 = vunpack.c.l.b16 %v554
    %v779 = vunpack.c.l.b16 %v555
    %v780 = vunpack.c.l.b16 %v556
    %v781 = vunpack.c.l.b16 %v557
    %v782 = vunpack.c.l.b16 %v558
    %v783 = vunpack.c.l.b16 %v559
    %v784 = vunpack.c.l.b16 %v560
    %v785 = vunpack.c.l.b16 %v561
    %v786 = vpack.c.b16 %v771, %v770
    %v787 = vpack.c.b16 %v773, %v772
    %v788 = vpack.c.b16 %v775, %v774
    %v789 = vpack.c.b16 %v777, %v776
    %v790 = vpack.c.b16 %v779, %v778
    %v791 = vpack.c.b16 %v781, %v780
    %v792 = vpack.c.b16 %v783, %v782
    %v793 = vpack.c.b16 %v785, %v784
    %802 = vmatprep.subr.bf16.mxu0 0
    %803 = vmatpush1.bf16.msra.mxu0 %v786
    %804 = vmatprep.subr.bf16.mxu0 0
    %805 = vmatpush1.bf16.msra.mxu0 %v787
    %806 = vmatprep.subr.bf16.mxu0 0
    %807 = vmatpush1.bf16.msra.mxu0 %v788
    %808 = vmatprep.subr.bf16.mxu0 0
    %809 = vmatpush1.bf16.msra.mxu0 %v789
    %810 = vmatprep.subr.bf16.mxu0 0
    %811 = vmatpush1.bf16.msra.mxu0 %v790
    %812 = vmatprep.subr.bf16.mxu0 0
    %813 = vmatpush1.bf16.msra.mxu0 %v791
    %814 = vmatprep.subr.bf16.mxu0 0
    %815 = vmatpush1.bf16.msra.mxu0 %v792
    %816 = vmatprep.subr.bf16.mxu0 0
    %817 = vmatpush1.bf16.msra.mxu0 %v793
    %818 = vmatprep.subr.bf16.mxu0 0
    %819 = vmatpush1.bf16.msra.mxu0 0
    %820 = vmatprep.subr.bf16.mxu0 0
    %821 = vmatpush1.bf16.msra.mxu0 0
    %822 = vmatprep.subr.bf16.mxu0 0
    %823 = vmatpush1.bf16.msra.mxu0 0
    %824 = vmatprep.subr.bf16.mxu0 0
    %825 = vmatpush1.bf16.msra.mxu0 0
    %826 = vmatprep.subr.bf16.mxu0 0
    %827 = vmatpush1.bf16.msra.mxu0 0
    %828 = vmatprep.subr.bf16.mxu0 0
    %829 = vmatpush1.bf16.msra.mxu0 0
    %830 = vmatprep.subr.bf16.mxu0 0
    %831 = vmatpush1.bf16.msra.mxu0 0
    %832 = vmatprep.subr.bf16.mxu0 0
    %833 = vmatpush1.bf16.msra.mxu0 0
    %834 = vmatprep.mubr.bf16.mxu0 0
    %835 = vmatmul.mubr.bf16.gmra.mrb[0].mxu0 %v690
    %v836 = vpop.f32.mrb[0].mxu0
    %v837 = vadd.f32 0.0, %v836
    %v838 = vpop.f32.mrb[0].mxu0
    %v839 = vpop.f32.mrb[0].mxu0
    %v840 = vadd.f32 0.0, %v839
    %v841 = vpop.f32.mrb[0].mxu0
    %842 = vmatprep.mubr.bf16.mxu0 0
    %843 = vmatmul.mubr.bf16.gmra.mrb[0].mxu0 %v691
    %v844 = vpop.f32.mrb[0].mxu0
    %v845 = vadd.f32 0.0, %v844
    %v846 = vpop.f32.mrb[0].mxu0
    %v847 = vpop.f32.mrb[0].mxu0
    %v848 = vadd.f32 0.0, %v847
    %v849 = vpop.f32.mrb[0].mxu0
    %850 = vmatprep.mubr.bf16.mxu0 0
    %851 = vmatmul.mubr.bf16.gmra.mrb[0].mxu0 %v692
    %v852 = vpop.f32.mrb[0].mxu0
    %v853 = vadd.f32 0.0, %v852
    %v854 = vpop.f32.mrb[0].mxu0
    %v855 = vpop.f32.mrb[0].mxu0
    %v856 = vadd.f32 0.0, %v855
    %v857 = vpop.f32.mrb[0].mxu0
    %858 = vmatprep.mubr.bf16.mxu0 0
    %859 = vmatmul.mubr.bf16.gmra.mrb[0].mxu0 %v693
    %v860 = vpop.f32.mrb[0].mxu0
    %v861 = vadd.f32 0.0, %v860
    %v862 = vpop.f32.mrb[0].mxu0
    %v863 = vpop.f32.mrb[0].mxu0
    %v864 = vadd.f32 0.0, %v863
    %v865 = vpop.f32.mrb[0].mxu0
    %866 = vmatprep.mubr.bf16.mxu0 0
    %867 = vmatmul.mubr.bf16.gmra.mrb[0].mxu0 %v694
    %v868 = vpop.f32.mrb[0].mxu0
    %v869 = vadd.f32 0.0, %v868
    %v870 = vpop.f32.mrb[0].mxu0
    %v871 = vpop.f32.mrb[0].mxu0
    %v872 = vadd.f32 0.0, %v871
    %v873 = vpop.f32.mrb[0].mxu0
    %874 = vmatprep.mubr.bf16.mxu0 0
    %875 = vmatmul.mubr.bf16.gmra.mrb[0].mxu0 %v695
    %v876 = vpop.f32.mrb[0].mxu0
    %v877 = vadd.f32 0.0, %v876
    %v878 = vpop.f32.mrb[0].mxu0
    %v879 = vpop.f32.mrb[0].mxu0
    %v880 = vadd.f32 0.0, %v879
    %v881 = vpop.f32.mrb[0].mxu0
    %882 = vmatprep.mubr.bf16.mxu0 0
    %883 = vmatmul.mubr.bf16.gmra.mrb[0].mxu0 %v696
    %v884 = vpop.f32.mrb[0].mxu0
    %v885 = vadd.f32 0.0, %v884
    %v886 = vpop.f32.mrb[0].mxu0
    %v887 = vpop.f32.mrb[0].mxu0
    %v888 = vadd.f32 0.0, %v887
    %v889 = vpop.f32.mrb[0].mxu0
    %890 = vmatprep.mubr.bf16.mxu0 0
    %891 = vmatmul.mubr.bf16.gmra.mrb[0].mxu0 %v697
    %v892 = vpop.f32.mrb[0].mxu0
    %v893 = vadd.f32 0.0, %v892
    %v894 = vpop.f32.mrb[0].mxu0
    %v895 = vpop.f32.mrb[0].mxu0
    %v896 = vadd.f32 0.0, %v895
    %v897 = vpop.f32.mrb[0].mxu0
    %898 = vmatprep.mubr.bf16.mxu0 0
    %899 = vmatmul.mubr.bf16.gmra.mrb[0].mxu0 %v698
    %v900 = vpop.f32.mrb[0].mxu0
    %v901 = vadd.f32 0.0, %v900
    %v902 = vpop.f32.mrb[0].mxu0
    %v903 = vpop.f32.mrb[0].mxu0
    %v904 = vadd.f32 0.0, %v903
    %v905 = vpop.f32.mrb[0].mxu0
    %906 = vmatprep.mubr.bf16.mxu0 0
    %907 = vmatmul.mubr.bf16.gmra.mrb[0].mxu0 %v699
    %v908 = vpop.f32.mrb[0].mxu0
    %v909 = vadd.f32 0.0, %v908
    %v910 = vpop.f32.mrb[0].mxu0
    %v911 = vpop.f32.mrb[0].mxu0
    %v912 = vadd.f32 0.0, %v911
    %v913 = vpop.f32.mrb[0].mxu0
    %914 = vmatprep.mubr.bf16.mxu0 0
    %915 = vmatmul.mubr.bf16.gmra.mrb[0].mxu0 %v700
    %v916 = vpop.f32.mrb[0].mxu0
    %v917 = vadd.f32 0.0, %v916
    %v918 = vpop.f32.mrb[0].mxu0
    %v919 = vpop.f32.mrb[0].mxu0
    %v920 = vadd.f32 0.0, %v919
    %v921 = vpop.f32.mrb[0].mxu0
    %922 = vmatprep.mubr.bf16.mxu0 0
    %923 = vmatmul.mubr.bf16.gmra.mrb[0].mxu0 %v701
    %v924 = vpop.f32.mrb[0].mxu0
    %v925 = vadd.f32 0.0, %v924
    %v926 = vpop.f32.mrb[0].mxu0
    %v927 = vpop.f32.mrb[0].mxu0
    %v928 = vadd.f32 0.0, %v927
    %v929 = vpop.f32.mrb[0].mxu0
    %930 = vmatprep.mubr.bf16.mxu0 0
    %931 = vmatmul.mubr.bf16.gmra.mrb[0].mxu0 %v702
    %v932 = vpop.f32.mrb[0].mxu0
    %v933 = vadd.f32 0.0, %v932
    %v934 = vpop.f32.mrb[0].mxu0
    %v935 = vpop.f32.mrb[0].mxu0
    %v936 = vadd.f32 0.0, %v935
    %v937 = vpop.f32.mrb[0].mxu0
    %938 = vmatprep.mubr.bf16.mxu0 0
    %939 = vmatmul.mubr.bf16.gmra.mrb[0].mxu0 %v703
    %v940 = vpop.f32.mrb[0].mxu0
    %v941 = vadd.f32 0.0, %v940
    %v942 = vpop.f32.mrb[0].mxu0
    %v943 = vpop.f32.mrb[0].mxu0
    %v944 = vadd.f32 0.0, %v943
    %v945 = vpop.f32.mrb[0].mxu0
    %946 = vmatprep.mubr.bf16.mxu0 0
    %947 = vmatmul.mubr.bf16.gmra.mrb[0].mxu0 %v704
    %v948 = vpop.f32.mrb[0].mxu0
    %v949 = vadd.f32 0.0, %v948
    %v950 = vpop.f32.mrb[0].mxu0
    %v951 = vpop.f32.mrb[0].mxu0
    %v952 = vadd.f32 0.0, %v951
    %v953 = vpop.f32.mrb[0].mxu0
    %954 = vmatprep.mubr.bf16.mxu0 0
    %955 = vmatmul.mubr.bf16.gmra.mrb[0].mxu0 %v705
    %v956 = vpop.f32.mrb[0].mxu0
    %v957 = vadd.f32 0.0, %v956
    %v958 = vpop.f32.mrb[0].mxu0
    %v959 = vpop.f32.mrb[0].mxu0
    %v960 = vadd.f32 0.0, %v959
    %v961 = vpop.f32.mrb[0].mxu0
    %962 = vmatprep.mubr.bf16.mxu0 0
    %963 = vmatmul.mubr.bf16.gmra.mrb[0].mxu0 %v706
    %v964 = vpop.f32.mrb[0].mxu0
    %v965 = vadd.f32 0.0, %v964
    %v966 = vpop.f32.mrb[0].mxu0
    %v967 = vpop.f32.mrb[0].mxu0
    %v968 = vadd.f32 0.0, %v967
    %v969 = vpop.f32.mrb[0].mxu0
    %970 = vmatprep.mubr.bf16.mxu0 0
    %971 = vmatmul.mubr.bf16.gmra.mrb[0].mxu0 %v707
    %v972 = vpop.f32.mrb[0].mxu0
    %v973 = vadd.f32 0.0, %v972
    %v974 = vpop.f32.mrb[0].mxu0
    %v975 = vpop.f32.mrb[0].mxu0
    %v976 = vadd.f32 0.0, %v975
    %v977 = vpop.f32.mrb[0].mxu0
    %978 = vmatprep.mubr.bf16.mxu0 0
    %979 = vmatmul.mubr.bf16.gmra.mrb[0].mxu0 %v708
    %v980 = vpop.f32.mrb[0].mxu0
    %v981 = vadd.f32 0.0, %v980
    %v982 = vpop.f32.mrb[0].mxu0
    %v983 = vpop.f32.mrb[0].mxu0
    %v984 = vadd.f32 0.0, %v983
    %v985 = vpop.f32.mrb[0].mxu0
    %986 = vmatprep.mubr.bf16.mxu0 0
    %987 = vmatmul.mubr.bf16.gmra.mrb[0].mxu0 %v709
    %v988 = vpop.f32.mrb[0].mxu0
    %v989 = vadd.f32 0.0, %v988
    %v990 = vpop.f32.mrb[0].mxu0
    %v991 = vpop.f32.mrb[0].mxu0
    %v992 = vadd.f32 0.0, %v991
    %v993 = vpop.f32.mrb[0].mxu0
    %994 = vmatprep.mubr.bf16.mxu0 0
    %995 = vmatmul.mubr.bf16.gmra.mrb[0].mxu0 %v710
    %v996 = vpop.f32.mrb[0].mxu0
    %v997 = vadd.f32 0.0, %v996
    %v998 = vpop.f32.mrb[0].mxu0
    %v999 = vpop.f32.mrb[0].mxu0
    %v1000 = vadd.f32 0.0, %v999
    %v1001 = vpop.f32.mrb[0].mxu0
    %1002 = vmatprep.mubr.bf16.mxu0 0
    %1003 = vmatmul.mubr.bf16.gmra.mrb[0].mxu0 %v711
    %v1004 = vpop.f32.mrb[0].mxu0
    %v1005 = vadd.f32 0.0, %v1004
    %v1006 = vpop.f32.mrb[0].mxu0
    %v1007 = vpop.f32.mrb[0].mxu0
    %v1008 = vadd.f32 0.0, %v1007
    %v1009 = vpop.f32.mrb[0].mxu0
    %1010 = vmatprep.mubr.bf16.mxu0 0
    %1011 = vmatmul.mubr.bf16.gmra.mrb[0].mxu0 %v712
    %v1012 = vpop.f32.mrb[0].mxu0
    %v1013 = vadd.f32 0.0, %v1012
    %v1014 = vpop.f32.mrb[0].mxu0
    %v1015 = vpop.f32.mrb[0].mxu0
    %v1016 = vadd.f32 0.0, %v1015
    %v1017 = vpop.f32.mrb[0].mxu0
    %1018 = vmatprep.mubr.bf16.mxu0 0
    %1019 = vmatmul.mubr.bf16.gmra.mrb[0].mxu0 %v713
    %v1020 = vpop.f32.mrb[0].mxu0
    %v1021 = vadd.f32 0.0, %v1020
    %v1022 = vpop.f32.mrb[0].mxu0
    %v1023 = vpop.f32.mrb[0].mxu0
    %v1024 = vadd.f32 0.0, %v1023
    %v1025 = vpop.f32.mrb[0].mxu0
    %1026 = vmatprep.mubr.bf16.mxu0 0
    %1027 = vmatmul.mubr.bf16.gmra.mrb[0].mxu0 %v714
    %v1028 = vpop.f32.mrb[0].mxu0
    %v1029 = vadd.f32 0.0, %v1028
    %v1030 = vpop.f32.mrb[0].mxu0
    %v1031 = vpop.f32.mrb[0].mxu0
    %v1032 = vadd.f32 0.0, %v1031
    %v1033 = vpop.f32.mrb[0].mxu0
    %1034 = vmatprep.mubr.bf16.mxu0 0
    %1035 = vmatmul.mubr.bf16.gmra.mrb[0].mxu0 %v715
    %v1036 = vpop.f32.mrb[0].mxu0
    %v1037 = vadd.f32 0.0, %v1036
    %v1038 = vpop.f32.mrb[0].mxu0
    %v1039 = vpop.f32.mrb[0].mxu0
    %v1040 = vadd.f32 0.0, %v1039
    %v1041 = vpop.f32.mrb[0].mxu0
    %1042 = vmatprep.mubr.bf16.mxu0 0
    %1043 = vmatmul.mubr.bf16.gmra.mrb[0].mxu0 %v716
    %v1044 = vpop.f32.mrb[0].mxu0
    %v1045 = vadd.f32 0.0, %v1044
    %v1046 = vpop.f32.mrb[0].mxu0
    %v1047 = vpop.f32.mrb[0].mxu0
    %v1048 = vadd.f32 0.0, %v1047
    %v1049 = vpop.f32.mrb[0].mxu0
    %1050 = vmatprep.mubr.bf16.mxu0 0
    %1051 = vmatmul.mubr.bf16.gmra.mrb[0].mxu0 %v717
    %v1052 = vpop.f32.mrb[0].mxu0
    %v1053 = vadd.f32 0.0, %v1052
    %v1054 = vpop.f32.mrb[0].mxu0
    %v1055 = vpop.f32.mrb[0].mxu0
    %v1056 = vadd.f32 0.0, %v1055
    %v1057 = vpop.f32.mrb[0].mxu0
    %1058 = vmatprep.mubr.bf16.mxu0 0
    %1059 = vmatmul.mubr.bf16.gmra.mrb[0].mxu0 %v718
    %v1060 = vpop.f32.mrb[0].mxu0
    %v1061 = vadd.f32 0.0, %v1060
    %v1062 = vpop.f32.mrb[0].mxu0
    %v1063 = vpop.f32.mrb[0].mxu0
    %v1064 = vadd.f32 0.0, %v1063
    %v1065 = vpop.f32.mrb[0].mxu0
    %1066 = vmatprep.mubr.bf16.mxu0 0
    %1067 = vmatmul.mubr.bf16.gmra.mrb[0].mxu0 %v719
    %v1068 = vpop.f32.mrb[0].mxu0
    %v1069 = vadd.f32 0.0, %v1068
    %v1070 = vpop.f32.mrb[0].mxu0
    %v1071 = vpop.f32.mrb[0].mxu0
    %v1072 = vadd.f32 0.0, %v1071
    %v1073 = vpop.f32.mrb[0].mxu0
    %1074 = vmatprep.mubr.bf16.mxu0 0
    %1075 = vmatmul.mubr.bf16.gmra.mrb[0].mxu0 %v720
    %v1076 = vpop.f32.mrb[0].mxu0
    %v1077 = vadd.f32 0.0, %v1076
    %v1078 = vpop.f32.mrb[0].mxu0
    %v1079 = vpop.f32.mrb[0].mxu0
    %v1080 = vadd.f32 0.0, %v1079
    %v1081 = vpop.f32.mrb[0].mxu0
    %1082 = vmatprep.mubr.bf16.mxu0 0
    %1083 = vmatmul.mubr.bf16.gmra.mrb[0].mxu0 %v721
    %v1084 = vpop.f32.mrb[0].mxu0
    %v1085 = vadd.f32 0.0, %v1084
    %v1086 = vpop.f32.mrb[0].mxu0
    %v1087 = vpop.f32.mrb[0].mxu0
    %v1088 = vadd.f32 0.0, %v1087
    %v1089 = vpop.f32.mrb[0].mxu0
    %1090 = vdwg.mxu0
    %v1091 = vmul.f32 %v837, %v482
    %v1092 = vmul.f32 %v840, %v483
    %v1093 = vmul.f32 %v845, %v484
    %v1094 = vmul.f32 %v848, %v485
    %v1095 = vmul.f32 %v853, %v486
    %v1096 = vmul.f32 %v856, %v487
    %v1097 = vmul.f32 %v861, %v488
    %v1098 = vmul.f32 %v864, %v489
    %v1099 = vmul.f32 %v869, %v490
    %v1100 = vmul.f32 %v872, %v491
    %v1101 = vmul.f32 %v877, %v492
    %v1102 = vmul.f32 %v880, %v493
    %v1103 = vmul.f32 %v885, %v494
    %v1104 = vmul.f32 %v888, %v495
    %v1105 = vmul.f32 %v893, %v496
    %v1106 = vmul.f32 %v896, %v497
    %v1107 = vmul.f32 %v901, %v498
    %v1108 = vmul.f32 %v904, %v499
    %v1109 = vmul.f32 %v909, %v500
    %v1110 = vmul.f32 %v912, %v501
    %v1111 = vmul.f32 %v917, %v502
    %v1112 = vmul.f32 %v920, %v503
    %v1113 = vmul.f32 %v925, %v504
    %v1114 = vmul.f32 %v928, %v505
    %v1115 = vmul.f32 %v933, %v506
    %v1116 = vmul.f32 %v936, %v507
    %v1117 = vmul.f32 %v941, %v508
    %v1118 = vmul.f32 %v944, %v509
    %v1119 = vmul.f32 %v949, %v510
    %v1120 = vmul.f32 %v952, %v511
    %v1121 = vmul.f32 %v957, %v512
    %v1122 = vmul.f32 %v960, %v513
    %v1123 = vmul.f32 %v965, %v514
    %v1124 = vmul.f32 %v968, %v515
    %v1125 = vmul.f32 %v973, %v516
    %v1126 = vmul.f32 %v976, %v517
    %v1127 = vmul.f32 %v981, %v518
    %v1128 = vmul.f32 %v984, %v519
    %v1129 = vmul.f32 %v989, %v520
    %v1130 = vmul.f32 %v992, %v521
    %v1131 = vmul.f32 %v997, %v522
    %v1132 = vmul.f32 %v1000, %v523
    %v1133 = vmul.f32 %v1005, %v524
    %v1134 = vmul.f32 %v1008, %v525
    %v1135 = vmul.f32 %v1013, %v526
    %v1136 = vmul.f32 %v1016, %v527
    %v1137 = vmul.f32 %v1021, %v528
    %v1138 = vmul.f32 %v1024, %v529
    %v1139 = vmul.f32 %v1029, %v530
    %v1140 = vmul.f32 %v1032, %v531
    %v1141 = vmul.f32 %v1037, %v532
    %v1142 = vmul.f32 %v1040, %v533
    %v1143 = vmul.f32 %v1045, %v534
    %v1144 = vmul.f32 %v1048, %v535
    %v1145 = vmul.f32 %v1053, %v536
    %v1146 = vmul.f32 %v1056, %v537
    %v1147 = vmul.f32 %v1061, %v538
    %v1148 = vmul.f32 %v1064, %v539
    %v1149 = vmul.f32 %v1069, %v540
    %v1150 = vmul.f32 %v1072, %v541
    %v1151 = vmul.f32 %v1077, %v542
    %v1152 = vmul.f32 %v1080, %v543
    %v1153 = vmul.f32 %v1085, %v544
    %v1154 = vmul.f32 %v1088, %v545
    %v1155 = vpack.c.bf16 %v1092, %v1091
    %v1156 = vpack.c.bf16 %v1094, %v1093
    %v1157 = vpack.c.bf16 %v1096, %v1095
    %v1158 = vpack.c.bf16 %v1098, %v1097
    %v1159 = vpack.c.bf16 %v1100, %v1099
    %v1160 = vpack.c.bf16 %v1102, %v1101
    %v1161 = vpack.c.bf16 %v1104, %v1103
    %v1162 = vpack.c.bf16 %v1106, %v1105
    %v1163 = vpack.c.bf16 %v1108, %v1107
    %v1164 = vpack.c.bf16 %v1110, %v1109
    %v1165 = vpack.c.bf16 %v1112, %v1111
    %v1166 = vpack.c.bf16 %v1114, %v1113
    %v1167 = vpack.c.bf16 %v1116, %v1115
    %v1168 = vpack.c.bf16 %v1118, %v1117
    %v1169 = vpack.c.bf16 %v1120, %v1119
    %v1170 = vpack.c.bf16 %v1122, %v1121
    %v1171 = vpack.c.bf16 %v1124, %v1123
    %v1172 = vpack.c.bf16 %v1126, %v1125
    %v1173 = vpack.c.bf16 %v1128, %v1127
    %v1174 = vpack.c.bf16 %v1130, %v1129
    %v1175 = vpack.c.bf16 %v1132, %v1131
    %v1176 = vpack.c.bf16 %v1134, %v1133
    %v1177 = vpack.c.bf16 %v1136, %v1135
    %v1178 = vpack.c.bf16 %v1138, %v1137
    %v1179 = vpack.c.bf16 %v1140, %v1139
    %v1180 = vpack.c.bf16 %v1142, %v1141
    %v1181 = vpack.c.bf16 %v1144, %v1143
    %v1182 = vpack.c.bf16 %v1146, %v1145
    %v1183 = vpack.c.bf16 %v1148, %v1147
    %v1184 = vpack.c.bf16 %v1150, %v1149
    %v1185 = vpack.c.bf16 %v1152, %v1151
    %v1186 = vpack.c.bf16 %v1154, %v1153
    %v1187 = vld [vmem:[#allocation7] sm:$0xf]
    %v1188 = vld [vmem:[#allocation7 + $0x4] sm:$0xf]
    %v1189 = vld [vmem:[#allocation7 + $0x8] sm:$0xf]
    %v1190 = vld [vmem:[#allocation7 + $0xc] sm:$0xf]
    %v1191 = vld [vmem:[#allocation7 + $0x10] sm:$0xf]
    %v1192 = vld [vmem:[#allocation7 + $0x14] sm:$0xf]
    %v1193 = vld [vmem:[#allocation7 + $0x18] sm:$0xf]
    %v1194 = vld [vmem:[#allocation7 + $0x1c] sm:$0xf]
    %v1195 = vld [vmem:[#allocation7 + $0x20] sm:$0xf]
    %v1196 = vld [vmem:[#allocation7 + $0x24] sm:$0xf]
    %v1197 = vld [vmem:[#allocation7 + $0x28] sm:$0xf]
    %v1198 = vld [vmem:[#allocation7 + $0x2c] sm:$0xf]
    %v1199 = vld [vmem:[#allocation7 + $0x30] sm:$0xf]
    %v1200 = vld [vmem:[#allocation7 + $0x34] sm:$0xf]
    %v1201 = vld [vmem:[#allocation7 + $0x38] sm:$0xf]
    %v1202 = vld [vmem:[#allocation7 + $0x3c] sm:$0xf]
    %v1203 = vld [vmem:[%s3] sm:$0x1]
    %v1205 = vlaneseq
    %v1206 = vshrl.u32 %v1205, 7
    %v1207 = vsub.s32 0, %v1206
    %v1208 = vrot.slane %v1203, %v1207
    %v1226 = vunpack.c.l.b16 %v1187
    %v1227 = vunpack.c.l.b16 %v1188
    %v1228 = vunpack.c.l.b16 %v1189
    %v1229 = vunpack.c.l.b16 %v1190
    %v1230 = vunpack.c.l.b16 %v1191
    %v1231 = vunpack.c.l.b16 %v1192
    %v1232 = vunpack.c.l.b16 %v1193
    %v1233 = vunpack.c.l.b16 %v1194
    %v1234 = vunpack.c.l.b16 %v1195
    %v1235 = vunpack.c.l.b16 %v1196
    %v1236 = vunpack.c.l.b16 %v1197
    %v1237 = vunpack.c.l.b16 %v1198
    %v1238 = vunpack.c.l.b16 %v1199
    %v1239 = vunpack.c.l.b16 %v1200
    %v1240 = vunpack.c.l.b16 %v1201
    %v1241 = vunpack.c.l.b16 %v1202
    %v1242 = vpack.c.b16 %v1227, %v1226
    %v1243 = vpack.c.b16 %v1229, %v1228
    %v1244 = vpack.c.b16 %v1231, %v1230
    %v1245 = vpack.c.b16 %v1233, %v1232
    %v1246 = vpack.c.b16 %v1235, %v1234
    %v1247 = vpack.c.b16 %v1237, %v1236
    %v1248 = vpack.c.b16 %v1239, %v1238
    %v1249 = vpack.c.b16 %v1241, %v1240
    %1258 = vmatprep.subr.bf16.mxu0 0
    %1259 = vmatpush1.bf16.msra.mxu0 %v1242
    %1260 = vmatprep.subr.bf16.mxu0 0
    %1261 = vmatpush1.bf16.msra.mxu0 %v1243
    %1262 = vmatprep.subr.bf16.mxu0 0
    %1263 = vmatpush1.bf16.msra.mxu0 %v1244
    %1264 = vmatprep.subr.bf16.mxu0 0
    %1265 = vmatpush1.bf16.msra.mxu0 %v1245
    %1266 = vmatprep.subr.bf16.mxu0 0
    %1267 = vmatpush1.bf16.msra.mxu0 %v1246
    %1268 = vmatprep.subr.bf16.mxu0 0
    %1269 = vmatpush1.bf16.msra.mxu0 %v1247
    %1270 = vmatprep.subr.bf16.mxu0 0
    %1271 = vmatpush1.bf16.msra.mxu0 %v1248
    %1272 = vmatprep.subr.bf16.mxu0 0
    %1273 = vmatpush1.bf16.msra.mxu0 %v1249
    %1274 = vmatprep.subr.bf16.mxu0 0
    %1275 = vmatpush1.bf16.msra.mxu0 0
    %1276 = vmatprep.subr.bf16.mxu0 0
    %1277 = vmatpush1.bf16.msra.mxu0 0
    %1278 = vmatprep.subr.bf16.mxu0 0
    %1279 = vmatpush1.bf16.msra.mxu0 0
    %1280 = vmatprep.subr.bf16.mxu0 0
    %1281 = vmatpush1.bf16.msra.mxu0 0
    %1282 = vmatprep.subr.bf16.mxu0 0
    %1283 = vmatpush1.bf16.msra.mxu0 0
    %1284 = vmatprep.subr.bf16.mxu0 0
    %1285 = vmatpush1.bf16.msra.mxu0 0
    %1286 = vmatprep.subr.bf16.mxu0 0
    %1287 = vmatpush1.bf16.msra.mxu0 0
    %1288 = vmatprep.subr.bf16.mxu0 0
    %1289 = vmatpush1.bf16.msra.mxu0 0
    %1290 = vmatprep.mubr.bf16.mxu0 0
    %1291 = vmatmul.mubr.bf16.gmra.mrb[0].mxu0 %v1155
    %v1292 = vpop.f32.mrb[0].mxu0
    %v1293 = vadd.f32 %v1208, %v1292
    %v1294 = vpop.f32.mrb[0].mxu0
    %v1295 = vpop.f32.mrb[0].mxu0
    %v1296 = vadd.f32 %v1208, %v1295
    %v1297 = vpop.f32.mrb[0].mxu0
    %1298 = vmatprep.mubr.bf16.mxu0 0
    %1299 = vmatmul.mubr.bf16.gmra.mrb[0].mxu0 %v1156
    %v1300 = vpop.f32.mrb[0].mxu0
    %v1301 = vadd.f32 %v1208, %v1300
    %v1302 = vpop.f32.mrb[0].mxu0
    %v1303 = vpop.f32.mrb[0].mxu0
    %v1304 = vadd.f32 %v1208, %v1303
    %v1305 = vpop.f32.mrb[0].mxu0
    %1306 = vmatprep.mubr.bf16.mxu0 0
    %1307 = vmatmul.mubr.bf16.gmra.mrb[0].mxu0 %v1157
    %v1308 = vpop.f32.mrb[0].mxu0
    %v1309 = vadd.f32 %v1208, %v1308
    %v1310 = vpop.f32.mrb[0].mxu0
    %v1311 = vpop.f32.mrb[0].mxu0
    %v1312 = vadd.f32 %v1208, %v1311
    %v1313 = vpop.f32.mrb[0].mxu0
    %1314 = vmatprep.mubr.bf16.mxu0 0
    %1315 = vmatmul.mubr.bf16.gmra.mrb[0].mxu0 %v1158
    %v1316 = vpop.f32.mrb[0].mxu0
    %v1317 = vadd.f32 %v1208, %v1316
    %v1318 = vpop.f32.mrb[0].mxu0
    %v1319 = vpop.f32.mrb[0].mxu0
    %v1320 = vadd.f32 %v1208, %v1319
    %v1321 = vpop.f32.mrb[0].mxu0
    %1322 = vmatprep.mubr.bf16.mxu0 0
    %1323 = vmatmul.mubr.bf16.gmra.mrb[0].mxu0 %v1159
    %v1324 = vpop.f32.mrb[0].mxu0
    %v1325 = vadd.f32 %v1208, %v1324
    %v1326 = vpop.f32.mrb[0].mxu0
    %v1327 = vpop.f32.mrb[0].mxu0
    %v1328 = vadd.f32 %v1208, %v1327
    %v1329 = vpop.f32.mrb[0].mxu0
    %1330 = vmatprep.mubr.bf16.mxu0 0
    %1331 = vmatmul.mubr.bf16.gmra.mrb[0].mxu0 %v1160
    %v1332 = vpop.f32.mrb[0].mxu0
    %v1333 = vadd.f32 %v1208, %v1332
    %v1334 = vpop.f32.mrb[0].mxu0
    %v1335 = vpop.f32.mrb[0].mxu0
    %v1336 = vadd.f32 %v1208, %v1335
    %v1337 = vpop.f32.mrb[0].mxu0
    %1338 = vmatprep.mubr.bf16.mxu0 0
    %1339 = vmatmul.mubr.bf16.gmra.mrb[0].mxu0 %v1161
    %v1340 = vpop.f32.mrb[0].mxu0
    %v1341 = vadd.f32 %v1208, %v1340
    %v1342 = vpop.f32.mrb[0].mxu0
    %v1343 = vpop.f32.mrb[0].mxu0
    %v1344 = vadd.f32 %v1208, %v1343
    %v1345 = vpop.f32.mrb[0].mxu0
    %1346 = vmatprep.mubr.bf16.mxu0 0
    %1347 = vmatmul.mubr.bf16.gmra.mrb[0].mxu0 %v1162
    %v1348 = vpop.f32.mrb[0].mxu0
    %v1349 = vadd.f32 %v1208, %v1348
    %v1350 = vpop.f32.mrb[0].mxu0
    %v1351 = vpop.f32.mrb[0].mxu0
    %v1352 = vadd.f32 %v1208, %v1351
    %v1353 = vpop.f32.mrb[0].mxu0
    %1354 = vmatprep.mubr.bf16.mxu0 0
    %1355 = vmatmul.mubr.bf16.gmra.mrb[0].mxu0 %v1163
    %v1356 = vpop.f32.mrb[0].mxu0
    %v1357 = vadd.f32 %v1208, %v1356
    %v1358 = vpop.f32.mrb[0].mxu0
    %v1359 = vpop.f32.mrb[0].mxu0
    %v1360 = vadd.f32 %v1208, %v1359
    %v1361 = vpop.f32.mrb[0].mxu0
    %1362 = vmatprep.mubr.bf16.mxu0 0
    %1363 = vmatmul.mubr.bf16.gmra.mrb[0].mxu0 %v1164
    %v1364 = vpop.f32.mrb[0].mxu0
    %v1365 = vadd.f32 %v1208, %v1364
    %v1366 = vpop.f32.mrb[0].mxu0
    %v1367 = vpop.f32.mrb[0].mxu0
    %v1368 = vadd.f32 %v1208, %v1367
    %v1369 = vpop.f32.mrb[0].mxu0
    %1370 = vmatprep.mubr.bf16.mxu0 0
    %1371 = vmatmul.mubr.bf16.gmra.mrb[0].mxu0 %v1165
    %v1372 = vpop.f32.mrb[0].mxu0
    %v1373 = vadd.f32 %v1208, %v1372
    %v1374 = vpop.f32.mrb[0].mxu0
    %v1375 = vpop.f32.mrb[0].mxu0
    %v1376 = vadd.f32 %v1208, %v1375
    %v1377 = vpop.f32.mrb[0].mxu0
    %1378 = vmatprep.mubr.bf16.mxu0 0
    %1379 = vmatmul.mubr.bf16.gmra.mrb[0].mxu0 %v1166
    %v1380 = vpop.f32.mrb[0].mxu0
    %v1381 = vadd.f32 %v1208, %v1380
    %v1382 = vpop.f32.mrb[0].mxu0
    %v1383 = vpop.f32.mrb[0].mxu0
    %v1384 = vadd.f32 %v1208, %v1383
    %v1385 = vpop.f32.mrb[0].mxu0
    %1386 = vmatprep.mubr.bf16.mxu0 0
    %1387 = vmatmul.mubr.bf16.gmra.mrb[0].mxu0 %v1167
    %v1388 = vpop.f32.mrb[0].mxu0
    %v1389 = vadd.f32 %v1208, %v1388
    %v1390 = vpop.f32.mrb[0].mxu0
    %v1391 = vpop.f32.mrb[0].mxu0
    %v1392 = vadd.f32 %v1208, %v1391
    %v1393 = vpop.f32.mrb[0].mxu0
    %1394 = vmatprep.mubr.bf16.mxu0 0
    %1395 = vmatmul.mubr.bf16.gmra.mrb[0].mxu0 %v1168
    %v1396 = vpop.f32.mrb[0].mxu0
    %v1397 = vadd.f32 %v1208, %v1396
    %v1398 = vpop.f32.mrb[0].mxu0
    %v1399 = vpop.f32.mrb[0].mxu0
    %v1400 = vadd.f32 %v1208, %v1399
    %v1401 = vpop.f32.mrb[0].mxu0
    %1402 = vmatprep.mubr.bf16.mxu0 0
    %1403 = vmatmul.mubr.bf16.gmra.mrb[0].mxu0 %v1169
    %v1404 = vpop.f32.mrb[0].mxu0
    %v1405 = vadd.f32 %v1208, %v1404
    %v1406 = vpop.f32.mrb[0].mxu0
    %v1407 = vpop.f32.mrb[0].mxu0
    %v1408 = vadd.f32 %v1208, %v1407
    %v1409 = vpop.f32.mrb[0].mxu0
    %1410 = vmatprep.mubr.bf16.mxu0 0
    %1411 = vmatmul.mubr.bf16.gmra.mrb[0].mxu0 %v1170
    %v1412 = vpop.f32.mrb[0].mxu0
    %v1413 = vadd.f32 %v1208, %v1412
    %v1414 = vpop.f32.mrb[0].mxu0
    %v1415 = vpop.f32.mrb[0].mxu0
    %v1416 = vadd.f32 %v1208, %v1415
    %v1417 = vpop.f32.mrb[0].mxu0
    %1418 = vmatprep.mubr.bf16.mxu0 0
    %1419 = vmatmul.mubr.bf16.gmra.mrb[0].mxu0 %v1171
    %v1420 = vpop.f32.mrb[0].mxu0
    %v1421 = vadd.f32 %v1208, %v1420
    %v1422 = vpop.f32.mrb[0].mxu0
    %v1423 = vpop.f32.mrb[0].mxu0
    %v1424 = vadd.f32 %v1208, %v1423
    %v1425 = vpop.f32.mrb[0].mxu0
    %1426 = vmatprep.mubr.bf16.mxu0 0
    %1427 = vmatmul.mubr.bf16.gmra.mrb[0].mxu0 %v1172
    %v1428 = vpop.f32.mrb[0].mxu0
    %v1429 = vadd.f32 %v1208, %v1428
    %v1430 = vpop.f32.mrb[0].mxu0
    %v1431 = vpop.f32.mrb[0].mxu0
    %v1432 = vadd.f32 %v1208, %v1431
    %v1433 = vpop.f32.mrb[0].mxu0
    %1434 = vmatprep.mubr.bf16.mxu0 0
    %1435 = vmatmul.mubr.bf16.gmra.mrb[0].mxu0 %v1173
    %v1436 = vpop.f32.mrb[0].mxu0
    %v1437 = vadd.f32 %v1208, %v1436
    %v1438 = vpop.f32.mrb[0].mxu0
    %v1439 = vpop.f32.mrb[0].mxu0
    %v1440 = vadd.f32 %v1208, %v1439
    %v1441 = vpop.f32.mrb[0].mxu0
    %1442 = vmatprep.mubr.bf16.mxu0 0
    %1443 = vmatmul.mubr.bf16.gmra.mrb[0].mxu0 %v1174
    %v1444 = vpop.f32.mrb[0].mxu0
    %v1445 = vadd.f32 %v1208, %v1444
    %v1446 = vpop.f32.mrb[0].mxu0
    %v1447 = vpop.f32.mrb[0].mxu0
    %v1448 = vadd.f32 %v1208, %v1447
    %v1449 = vpop.f32.mrb[0].mxu0
    %1450 = vmatprep.mubr.bf16.mxu0 0
    %1451 = vmatmul.mubr.bf16.gmra.mrb[0].mxu0 %v1175
    %v1452 = vpop.f32.mrb[0].mxu0
    %v1453 = vadd.f32 %v1208, %v1452
    %v1454 = vpop.f32.mrb[0].mxu0
    %v1455 = vpop.f32.mrb[0].mxu0
    %v1456 = vadd.f32 %v1208, %v1455
    %v1457 = vpop.f32.mrb[0].mxu0
    %1458 = vmatprep.mubr.bf16.mxu0 0
    %1459 = vmatmul.mubr.bf16.gmra.mrb[0].mxu0 %v1176
    %v1460 = vpop.f32.mrb[0].mxu0
    %v1461 = vadd.f32 %v1208, %v1460
    %v1462 = vpop.f32.mrb[0].mxu0
    %v1463 = vpop.f32.mrb[0].mxu0
    %v1464 = vadd.f32 %v1208, %v1463
    %v1465 = vpop.f32.mrb[0].mxu0
    %1466 = vmatprep.mubr.bf16.mxu0 0
    %1467 = vmatmul.mubr.bf16.gmra.mrb[0].mxu0 %v1177
    %v1468 = vpop.f32.mrb[0].mxu0
    %v1469 = vadd.f32 %v1208, %v1468
    %v1470 = vpop.f32.mrb[0].mxu0
    %v1471 = vpop.f32.mrb[0].mxu0
    %v1472 = vadd.f32 %v1208, %v1471
    %v1473 = vpop.f32.mrb[0].mxu0
    %1474 = vmatprep.mubr.bf16.mxu0 0
    %1475 = vmatmul.mubr.bf16.gmra.mrb[0].mxu0 %v1178
    %v1476 = vpop.f32.mrb[0].mxu0
    %v1477 = vadd.f32 %v1208, %v1476
    %v1478 = vpop.f32.mrb[0].mxu0
    %v1479 = vpop.f32.mrb[0].mxu0
    %v1480 = vadd.f32 %v1208, %v1479
    %v1481 = vpop.f32.mrb[0].mxu0
    %1482 = vmatprep.mubr.bf16.mxu0 0
    %1483 = vmatmul.mubr.bf16.gmra.mrb[0].mxu0 %v1179
    %v1484 = vpop.f32.mrb[0].mxu0
    %v1485 = vadd.f32 %v1208, %v1484
    %v1486 = vpop.f32.mrb[0].mxu0
    %v1487 = vpop.f32.mrb[0].mxu0
    %v1488 = vadd.f32 %v1208, %v1487
    %v1489 = vpop.f32.mrb[0].mxu0
    %1490 = vmatprep.mubr.bf16.mxu0 0
    %1491 = vmatmul.mubr.bf16.gmra.mrb[0].mxu0 %v1180
    %v1492 = vpop.f32.mrb[0].mxu0
    %v1493 = vadd.f32 %v1208, %v1492
    %v1494 = vpop.f32.mrb[0].mxu0
    %v1495 = vpop.f32.mrb[0].mxu0
    %v1496 = vadd.f32 %v1208, %v1495
    %v1497 = vpop.f32.mrb[0].mxu0
    %1498 = vmatprep.mubr.bf16.mxu0 0
    %1499 = vmatmul.mubr.bf16.gmra.mrb[0].mxu0 %v1181
    %v1500 = vpop.f32.mrb[0].mxu0
    %v1501 = vadd.f32 %v1208, %v1500
    %v1502 = vpop.f32.mrb[0].mxu0
    %v1503 = vpop.f32.mrb[0].mxu0
    %v1504 = vadd.f32 %v1208, %v1503
    %v1505 = vpop.f32.mrb[0].mxu0
    %1506 = vmatprep.mubr.bf16.mxu0 0
    %1507 = vmatmul.mubr.bf16.gmra.mrb[0].mxu0 %v1182
    %v1508 = vpop.f32.mrb[0].mxu0
    %v1509 = vadd.f32 %v1208, %v1508
    %v1510 = vpop.f32.mrb[0].mxu0
    %v1511 = vpop.f32.mrb[0].mxu0
    %v1512 = vadd.f32 %v1208, %v1511
    %v1513 = vpop.f32.mrb[0].mxu0
    %1514 = vmatprep.mubr.bf16.mxu0 0
    %1515 = vmatmul.mubr.bf16.gmra.mrb[0].mxu0 %v1183
    %v1516 = vpop.f32.mrb[0].mxu0
    %v1517 = vadd.f32 %v1208, %v1516
    %v1518 = vpop.f32.mrb[0].mxu0
    %v1519 = vpop.f32.mrb[0].mxu0
    %v1520 = vadd.f32 %v1208, %v1519
    %v1521 = vpop.f32.mrb[0].mxu0
    %1522 = vmatprep.mubr.bf16.mxu0 0
    %1523 = vmatmul.mubr.bf16.gmra.mrb[0].mxu0 %v1184
    %v1524 = vpop.f32.mrb[0].mxu0
    %v1525 = vadd.f32 %v1208, %v1524
    %v1526 = vpop.f32.mrb[0].mxu0
    %v1527 = vpop.f32.mrb[0].mxu0
    %v1528 = vadd.f32 %v1208, %v1527
    %v1529 = vpop.f32.mrb[0].mxu0
    %1530 = vmatprep.mubr.bf16.mxu0 0
    %1531 = vmatmul.mubr.bf16.gmra.mrb[0].mxu0 %v1185
    %v1532 = vpop.f32.mrb[0].mxu0
    %v1533 = vadd.f32 %v1208, %v1532
    %v1534 = vpop.f32.mrb[0].mxu0
    %v1535 = vpop.f32.mrb[0].mxu0
    %v1536 = vadd.f32 %v1208, %v1535
    %v1537 = vpop.f32.mrb[0].mxu0
    %1538 = vmatprep.mubr.bf16.mxu0 0
    %1539 = vmatmul.mubr.bf16.gmra.mrb[0].mxu0 %v1186
    %v1540 = vpop.f32.mrb[0].mxu0
    %v1541 = vadd.f32 %v1208, %v1540
    %v1542 = vpop.f32.mrb[0].mxu0
    %v1543 = vpop.f32.mrb[0].mxu0
    %v1544 = vadd.f32 %v1208, %v1543
    %v1545 = vpop.f32.mrb[0].mxu0
    %1546 = vdwg.mxu0
    %v1547 = vmax.f32 %v1293, 0.0
    %v1548 = vmax.f32 %v1296, 0.0
    %v1549 = vmax.f32 %v1301, 0.0
    %v1550 = vmax.f32 %v1304, 0.0
    %v1551 = vmax.f32 %v1309, 0.0
    %v1552 = vmax.f32 %v1312, 0.0
    %v1553 = vmax.f32 %v1317, 0.0
    %v1554 = vmax.f32 %v1320, 0.0
    %v1555 = vmax.f32 %v1325, 0.0
    %v1556 = vmax.f32 %v1328, 0.0
    %v1557 = vmax.f32 %v1333, 0.0
    %v1558 = vmax.f32 %v1336, 0.0
    %v1559 = vmax.f32 %v1341, 0.0
    %v1560 = vmax.f32 %v1344, 0.0
    %v1561 = vmax.f32 %v1349, 0.0
    %v1562 = vmax.f32 %v1352, 0.0
    %v1563 = vmax.f32 %v1357, 0.0
    %v1564 = vmax.f32 %v1360, 0.0
    %v1565 = vmax.f32 %v1365, 0.0
    %v1566 = vmax.f32 %v1368, 0.0
    %v1567 = vmax.f32 %v1373, 0.0
    %v1568 = vmax.f32 %v1376, 0.0
    %v1569 = vmax.f32 %v1381, 0.0
    %v1570 = vmax.f32 %v1384, 0.0
    %v1571 = vmax.f32 %v1389, 0.0
    %v1572 = vmax.f32 %v1392, 0.0
    %v1573 = vmax.f32 %v1397, 0.0
    %v1574 = vmax.f32 %v1400, 0.0
    %v1575 = vmax.f32 %v1405, 0.0
    %v1576 = vmax.f32 %v1408, 0.0
    %v1577 = vmax.f32 %v1413, 0.0
    %v1578 = vmax.f32 %v1416, 0.0
    %v1579 = vmax.f32 %v1421, 0.0
    %v1580 = vmax.f32 %v1424, 0.0
    %v1581 = vmax.f32 %v1429, 0.0
    %v1582 = vmax.f32 %v1432, 0.0
    %v1583 = vmax.f32 %v1437, 0.0
    %v1584 = vmax.f32 %v1440, 0.0
    %v1585 = vmax.f32 %v1445, 0.0
    %v1586 = vmax.f32 %v1448, 0.0
    %v1587 = vmax.f32 %v1453, 0.0
    %v1588 = vmax.f32 %v1456, 0.0
    %v1589 = vmax.f32 %v1461, 0.0
    %v1590 = vmax.f32 %v1464, 0.0
    %v1591 = vmax.f32 %v1469, 0.0
    %v1592 = vmax.f32 %v1472, 0.0
    %v1593 = vmax.f32 %v1477, 0.0
    %v1594 = vmax.f32 %v1480, 0.0
    %v1595 = vmax.f32 %v1485, 0.0
    %v1596 = vmax.f32 %v1488, 0.0
    %v1597 = vmax.f32 %v1493, 0.0
    %v1598 = vmax.f32 %v1496, 0.0
    %v1599 = vmax.f32 %v1501, 0.0
    %v1600 = vmax.f32 %v1504, 0.0
    %v1601 = vmax.f32 %v1509, 0.0
    %v1602 = vmax.f32 %v1512, 0.0
    %v1603 = vmax.f32 %v1517, 0.0
    %v1604 = vmax.f32 %v1520, 0.0
    %v1605 = vmax.f32 %v1525, 0.0
    %v1606 = vmax.f32 %v1528, 0.0
    %v1607 = vmax.f32 %v1533, 0.0
    %v1608 = vmax.f32 %v1536, 0.0
    %v1609 = vmax.f32 %v1541, 0.0
    %v1610 = vmax.f32 %v1544, 0.0
    %v1611 = vpack.c.bf16 %v1548, %v1547
    %v1612 = vpack.c.bf16 %v1550, %v1549
    %v1613 = vpack.c.bf16 %v1552, %v1551
    %v1614 = vpack.c.bf16 %v1554, %v1553
    %v1615 = vpack.c.bf16 %v1556, %v1555
    %v1616 = vpack.c.bf16 %v1558, %v1557
    %v1617 = vpack.c.bf16 %v1560, %v1559
    %v1618 = vpack.c.bf16 %v1562, %v1561
    %v1619 = vpack.c.bf16 %v1564, %v1563
    %v1620 = vpack.c.bf16 %v1566, %v1565
    %v1621 = vpack.c.bf16 %v1568, %v1567
    %v1622 = vpack.c.bf16 %v1570, %v1569
    %v1623 = vpack.c.bf16 %v1572, %v1571
    %v1624 = vpack.c.bf16 %v1574, %v1573
    %v1625 = vpack.c.bf16 %v1576, %v1575
    %v1626 = vpack.c.bf16 %v1578, %v1577
    %v1627 = vpack.c.bf16 %v1580, %v1579
    %v1628 = vpack.c.bf16 %v1582, %v1581
    %v1629 = vpack.c.bf16 %v1584, %v1583
    %v1630 = vpack.c.bf16 %v1586, %v1585
    %v1631 = vpack.c.bf16 %v1588, %v1587
    %v1632 = vpack.c.bf16 %v1590, %v1589
    %v1633 = vpack.c.bf16 %v1592, %v1591
    %v1634 = vpack.c.bf16 %v1594, %v1593
    %v1635 = vpack.c.bf16 %v1596, %v1595
    %v1636 = vpack.c.bf16 %v1598, %v1597
    %v1637 = vpack.c.bf16 %v1600, %v1599
    %v1638 = vpack.c.bf16 %v1602, %v1601
    %v1639 = vpack.c.bf16 %v1604, %v1603
    %v1640 = vpack.c.bf16 %v1606, %v1605
    %v1641 = vpack.c.bf16 %v1608, %v1607
    %v1642 = vpack.c.bf16 %v1610, %v1609
    %v1643 = vld [vmem:[#allocation8] sm:$0xf]
    %v1644 = vld [vmem:[#allocation8 + $0x4] sm:$0xf]
    %v1645 = vld [vmem:[#allocation8 + $0x8] sm:$0xf]
    %v1646 = vld [vmem:[#allocation8 + $0xc] sm:$0xf]
    %v1647 = vld [vmem:[#allocation8 + $0x10] sm:$0xf]
    %v1648 = vld [vmem:[#allocation8 + $0x14] sm:$0xf]
    %v1649 = vld [vmem:[#allocation8 + $0x18] sm:$0xf]
    %v1650 = vld [vmem:[#allocation8 + $0x1c] sm:$0xf]
    %v1651 = vld [vmem:[#allocation8 + $0x20] sm:$0xf]
    %v1652 = vld [vmem:[#allocation8 + $0x24] sm:$0xf]
    %v1653 = vld [vmem:[#allocation8 + $0x28] sm:$0xf]
    %v1654 = vld [vmem:[#allocation8 + $0x2c] sm:$0xf]
    %v1655 = vld [vmem:[#allocation8 + $0x30] sm:$0xf]
    %v1656 = vld [vmem:[#allocation8 + $0x34] sm:$0xf]
    %v1657 = vld [vmem:[#allocation8 + $0x38] sm:$0xf]
    %v1658 = vld [vmem:[#allocation8 + $0x3c] sm:$0xf]
    %v1659 = vld [vmem:[%s5] sm:$0x1]
    %v1661 = vlaneseq
    %v1662 = vshrl.u32 %v1661, 7
    %v1663 = vsub.s32 0, %v1662
    %v1664 = vrot.slane %v1659, %v1663
    %v1682 = vunpack.c.l.b16 %v1643
    %v1683 = vunpack.c.l.b16 %v1644
    %v1684 = vunpack.c.l.b16 %v1645
    %v1685 = vunpack.c.l.b16 %v1646
    %v1686 = vunpack.c.l.b16 %v1647
    %v1687 = vunpack.c.l.b16 %v1648
    %v1688 = vunpack.c.l.b16 %v1649
    %v1689 = vunpack.c.l.b16 %v1650
    %v1690 = vunpack.c.l.b16 %v1651
    %v1691 = vunpack.c.l.b16 %v1652
    %v1692 = vunpack.c.l.b16 %v1653
    %v1693 = vunpack.c.l.b16 %v1654
    %v1694 = vunpack.c.l.b16 %v1655
    %v1695 = vunpack.c.l.b16 %v1656
    %v1696 = vunpack.c.l.b16 %v1657
    %v1697 = vunpack.c.l.b16 %v1658
    %v1698 = vpack.c.b16 %v1683, %v1682
    %v1699 = vpack.c.b16 %v1685, %v1684
    %v1700 = vpack.c.b16 %v1687, %v1686
    %v1701 = vpack.c.b16 %v1689, %v1688
    %v1702 = vpack.c.b16 %v1691, %v1690
    %v1703 = vpack.c.b16 %v1693, %v1692
    %v1704 = vpack.c.b16 %v1695, %v1694
    %v1705 = vpack.c.b16 %v1697, %v1696
    %1714 = vmatprep.subr.bf16.mxu0 0
    %1715 = vmatpush1.bf16.msra.mxu0 %v1698
    %1716 = vmatprep.subr.bf16.mxu0 0
    %1717 = vmatpush1.bf16.msra.mxu0 %v1699
    %1718 = vmatprep.subr.bf16.mxu0 0
    %1719 = vmatpush1.bf16.msra.mxu0 %v1700
    %1720 = vmatprep.subr.bf16.mxu0 0
    %1721 = vmatpush1.bf16.msra.mxu0 %v1701
    %1722 = vmatprep.subr.bf16.mxu0 0
    %1723 = vmatpush1.bf16.msra.mxu0 %v1702
    %1724 = vmatprep.subr.bf16.mxu0 0
    %1725 = vmatpush1.bf16.msra.mxu0 %v1703
    %1726 = vmatprep.subr.bf16.mxu0 0
    %1727 = vmatpush1.bf16.msra.mxu0 %v1704
    %1728 = vmatprep.subr.bf16.mxu0 0
    %1729 = vmatpush1.bf16.msra.mxu0 %v1705
    %1730 = vmatprep.subr.bf16.mxu0 0
    %1731 = vmatpush1.bf16.msra.mxu0 0
    %1732 = vmatprep.subr.bf16.mxu0 0
    %1733 = vmatpush1.bf16.msra.mxu0 0
    %1734 = vmatprep.subr.bf16.mxu0 0
    %1735 = vmatpush1.bf16.msra.mxu0 0
    %1736 = vmatprep.subr.bf16.mxu0 0
    %1737 = vmatpush1.bf16.msra.mxu0 0
    %1738 = vmatprep.subr.bf16.mxu0 0
    %1739 = vmatpush1.bf16.msra.mxu0 0
    %1740 = vmatprep.subr.bf16.mxu0 0
    %1741 = vmatpush1.bf16.msra.mxu0 0
    %1742 = vmatprep.subr.bf16.mxu0 0
    %1743 = vmatpush1.bf16.msra.mxu0 0
    %1744 = vmatprep.subr.bf16.mxu0 0
    %1745 = vmatpush1.bf16.msra.mxu0 0
    %1746 = vmatprep.mubr.bf16.mxu0 0
    %1747 = vmatmul.mubr.bf16.gmra.mrb[0].mxu0 %v1611
    %v1748 = vpop.f32.mrb[0].mxu0
    %v1749 = vadd.f32 %v1664, %v1748
    %v1750 = vpop.f32.mrb[0].mxu0
    %v1751 = vpop.f32.mrb[0].mxu0
    %v1752 = vadd.f32 %v1664, %v1751
    %v1753 = vpop.f32.mrb[0].mxu0
    %1754 = vmatprep.mubr.bf16.mxu0 0
    %1755 = vmatmul.mubr.bf16.gmra.mrb[0].mxu0 %v1612
    %v1756 = vpop.f32.mrb[0].mxu0
    %v1757 = vadd.f32 %v1664, %v1756
    %v1758 = vpop.f32.mrb[0].mxu0
    %v1759 = vpop.f32.mrb[0].mxu0
    %v1760 = vadd.f32 %v1664, %v1759
    %v1761 = vpop.f32.mrb[0].mxu0
    %1762 = vmatprep.mubr.bf16.mxu0 0
    %1763 = vmatmul.mubr.bf16.gmra.mrb[0].mxu0 %v1613
    %v1764 = vpop.f32.mrb[0].mxu0
    %v1765 = vadd.f32 %v1664, %v1764
    %v1766 = vpop.f32.mrb[0].mxu0
    %v1767 = vpop.f32.mrb[0].mxu0
    %v1768 = vadd.f32 %v1664, %v1767
    %v1769 = vpop.f32.mrb[0].mxu0
    %1770 = vmatprep.mubr.bf16.mxu0 0
    %1771 = vmatmul.mubr.bf16.gmra.mrb[0].mxu0 %v1614
    %v1772 = vpop.f32.mrb[0].mxu0
    %v1773 = vadd.f32 %v1664, %v1772
    %v1774 = vpop.f32.mrb[0].mxu0
    %v1775 = vpop.f32.mrb[0].mxu0
    %v1776 = vadd.f32 %v1664, %v1775
    %v1777 = vpop.f32.mrb[0].mxu0
    %1778 = vmatprep.mubr.bf16.mxu0 0
    %1779 = vmatmul.mubr.bf16.gmra.mrb[0].mxu0 %v1615
    %v1780 = vpop.f32.mrb[0].mxu0
    %v1781 = vadd.f32 %v1664, %v1780
    %v1782 = vpop.f32.mrb[0].mxu0
    %v1783 = vpop.f32.mrb[0].mxu0
    %v1784 = vadd.f32 %v1664, %v1783
    %v1785 = vpop.f32.mrb[0].mxu0
    %1786 = vmatprep.mubr.bf16.mxu0 0
    %1787 = vmatmul.mubr.bf16.gmra.mrb[0].mxu0 %v1616
    %v1788 = vpop.f32.mrb[0].mxu0
    %v1789 = vadd.f32 %v1664, %v1788
    %v1790 = vpop.f32.mrb[0].mxu0
    %v1791 = vpop.f32.mrb[0].mxu0
    %v1792 = vadd.f32 %v1664, %v1791
    %v1793 = vpop.f32.mrb[0].mxu0
    %1794 = vmatprep.mubr.bf16.mxu0 0
    %1795 = vmatmul.mubr.bf16.gmra.mrb[0].mxu0 %v1617
    %v1796 = vpop.f32.mrb[0].mxu0
    %v1797 = vadd.f32 %v1664, %v1796
    %v1798 = vpop.f32.mrb[0].mxu0
    %v1799 = vpop.f32.mrb[0].mxu0
    %v1800 = vadd.f32 %v1664, %v1799
    %v1801 = vpop.f32.mrb[0].mxu0
    %1802 = vmatprep.mubr.bf16.mxu0 0
    %1803 = vmatmul.mubr.bf16.gmra.mrb[0].mxu0 %v1618
    %v1804 = vpop.f32.mrb[0].mxu0
    %v1805 = vadd.f32 %v1664, %v1804
    %v1806 = vpop.f32.mrb[0].mxu0
    %v1807 = vpop.f32.mrb[0].mxu0
    %v1808 = vadd.f32 %v1664, %v1807
    %v1809 = vpop.f32.mrb[0].mxu0
    %1810 = vmatprep.mubr.bf16.mxu0 0
    %1811 = vmatmul.mubr.bf16.gmra.mrb[0].mxu0 %v1619
    %v1812 = vpop.f32.mrb[0].mxu0
    %v1813 = vadd.f32 %v1664, %v1812
    %v1814 = vpop.f32.mrb[0].mxu0
    %v1815 = vpop.f32.mrb[0].mxu0
    %v1816 = vadd.f32 %v1664, %v1815
    %v1817 = vpop.f32.mrb[0].mxu0
    %1818 = vmatprep.mubr.bf16.mxu0 0
    %1819 = vmatmul.mubr.bf16.gmra.mrb[0].mxu0 %v1620
    %v1820 = vpop.f32.mrb[0].mxu0
    %v1821 = vadd.f32 %v1664, %v1820
    %v1822 = vpop.f32.mrb[0].mxu0
    %v1823 = vpop.f32.mrb[0].mxu0
    %v1824 = vadd.f32 %v1664, %v1823
    %v1825 = vpop.f32.mrb[0].mxu0
    %1826 = vmatprep.mubr.bf16.mxu0 0
    %1827 = vmatmul.mubr.bf16.gmra.mrb[0].mxu0 %v1621
    %v1828 = vpop.f32.mrb[0].mxu0
    %v1829 = vadd.f32 %v1664, %v1828
    %v1830 = vpop.f32.mrb[0].mxu0
    %v1831 = vpop.f32.mrb[0].mxu0
    %v1832 = vadd.f32 %v1664, %v1831
    %v1833 = vpop.f32.mrb[0].mxu0
    %1834 = vmatprep.mubr.bf16.mxu0 0
    %1835 = vmatmul.mubr.bf16.gmra.mrb[0].mxu0 %v1622
    %v1836 = vpop.f32.mrb[0].mxu0
    %v1837 = vadd.f32 %v1664, %v1836
    %v1838 = vpop.f32.mrb[0].mxu0
    %v1839 = vpop.f32.mrb[0].mxu0
    %v1840 = vadd.f32 %v1664, %v1839
    %v1841 = vpop.f32.mrb[0].mxu0
    %1842 = vmatprep.mubr.bf16.mxu0 0
    %1843 = vmatmul.mubr.bf16.gmra.mrb[0].mxu0 %v1623
    %v1844 = vpop.f32.mrb[0].mxu0
    %v1845 = vadd.f32 %v1664, %v1844
    %v1846 = vpop.f32.mrb[0].mxu0
    %v1847 = vpop.f32.mrb[0].mxu0
    %v1848 = vadd.f32 %v1664, %v1847
    %v1849 = vpop.f32.mrb[0].mxu0
    %1850 = vmatprep.mubr.bf16.mxu0 0
    %1851 = vmatmul.mubr.bf16.gmra.mrb[0].mxu0 %v1624
    %v1852 = vpop.f32.mrb[0].mxu0
    %v1853 = vadd.f32 %v1664, %v1852
    %v1854 = vpop.f32.mrb[0].mxu0
    %v1855 = vpop.f32.mrb[0].mxu0
    %v1856 = vadd.f32 %v1664, %v1855
    %v1857 = vpop.f32.mrb[0].mxu0
    %1858 = vmatprep.mubr.bf16.mxu0 0
    %1859 = vmatmul.mubr.bf16.gmra.mrb[0].mxu0 %v1625
    %v1860 = vpop.f32.mrb[0].mxu0
    %v1861 = vadd.f32 %v1664, %v1860
    %v1862 = vpop.f32.mrb[0].mxu0
    %v1863 = vpop.f32.mrb[0].mxu0
    %v1864 = vadd.f32 %v1664, %v1863
    %v1865 = vpop.f32.mrb[0].mxu0
    %1866 = vmatprep.mubr.bf16.mxu0 0
    %1867 = vmatmul.mubr.bf16.gmra.mrb[0].mxu0 %v1626
    %v1868 = vpop.f32.mrb[0].mxu0
    %v1869 = vadd.f32 %v1664, %v1868
    %v1870 = vpop.f32.mrb[0].mxu0
    %v1871 = vpop.f32.mrb[0].mxu0
    %v1872 = vadd.f32 %v1664, %v1871
    %v1873 = vpop.f32.mrb[0].mxu0
    %1874 = vmatprep.mubr.bf16.mxu0 0
    %1875 = vmatmul.mubr.bf16.gmra.mrb[0].mxu0 %v1627
    %v1876 = vpop.f32.mrb[0].mxu0
    %v1877 = vadd.f32 %v1664, %v1876
    %v1878 = vpop.f32.mrb[0].mxu0
    %v1879 = vpop.f32.mrb[0].mxu0
    %v1880 = vadd.f32 %v1664, %v1879
    %v1881 = vpop.f32.mrb[0].mxu0
    %1882 = vmatprep.mubr.bf16.mxu0 0
    %1883 = vmatmul.mubr.bf16.gmra.mrb[0].mxu0 %v1628
    %v1884 = vpop.f32.mrb[0].mxu0
    %v1885 = vadd.f32 %v1664, %v1884
    %v1886 = vpop.f32.mrb[0].mxu0
    %v1887 = vpop.f32.mrb[0].mxu0
    %v1888 = vadd.f32 %v1664, %v1887
    %v1889 = vpop.f32.mrb[0].mxu0
    %1890 = vmatprep.mubr.bf16.mxu0 0
    %1891 = vmatmul.mubr.bf16.gmra.mrb[0].mxu0 %v1629
    %v1892 = vpop.f32.mrb[0].mxu0
    %v1893 = vadd.f32 %v1664, %v1892
    %v1894 = vpop.f32.mrb[0].mxu0
    %v1895 = vpop.f32.mrb[0].mxu0
    %v1896 = vadd.f32 %v1664, %v1895
    %v1897 = vpop.f32.mrb[0].mxu0
    %1898 = vmatprep.mubr.bf16.mxu0 0
    %1899 = vmatmul.mubr.bf16.gmra.mrb[0].mxu0 %v1630
    %v1900 = vpop.f32.mrb[0].mxu0
    %v1901 = vadd.f32 %v1664, %v1900
    %v1902 = vpop.f32.mrb[0].mxu0
    %v1903 = vpop.f32.mrb[0].mxu0
    %v1904 = vadd.f32 %v1664, %v1903
    %v1905 = vpop.f32.mrb[0].mxu0
    %1906 = vmatprep.mubr.bf16.mxu0 0
    %1907 = vmatmul.mubr.bf16.gmra.mrb[0].mxu0 %v1631
    %v1908 = vpop.f32.mrb[0].mxu0
    %v1909 = vadd.f32 %v1664, %v1908
    %v1910 = vpop.f32.mrb[0].mxu0
    %v1911 = vpop.f32.mrb[0].mxu0
    %v1912 = vadd.f32 %v1664, %v1911
    %v1913 = vpop.f32.mrb[0].mxu0
    %1914 = vmatprep.mubr.bf16.mxu0 0
    %1915 = vmatmul.mubr.bf16.gmra.mrb[0].mxu0 %v1632
    %v1916 = vpop.f32.mrb[0].mxu0
    %v1917 = vadd.f32 %v1664, %v1916
    %v1918 = vpop.f32.mrb[0].mxu0
    %v1919 = vpop.f32.mrb[0].mxu0
    %v1920 = vadd.f32 %v1664, %v1919
    %v1921 = vpop.f32.mrb[0].mxu0
    %1922 = vmatprep.mubr.bf16.mxu0 0
    %1923 = vmatmul.mubr.bf16.gmra.mrb[0].mxu0 %v1633
    %v1924 = vpop.f32.mrb[0].mxu0
    %v1925 = vadd.f32 %v1664, %v1924
    %v1926 = vpop.f32.mrb[0].mxu0
    %v1927 = vpop.f32.mrb[0].mxu0
    %v1928 = vadd.f32 %v1664, %v1927
    %v1929 = vpop.f32.mrb[0].mxu0
    %1930 = vmatprep.mubr.bf16.mxu0 0
    %1931 = vmatmul.mubr.bf16.gmra.mrb[0].mxu0 %v1634
    %v1932 = vpop.f32.mrb[0].mxu0
    %v1933 = vadd.f32 %v1664, %v1932
    %v1934 = vpop.f32.mrb[0].mxu0
    %v1935 = vpop.f32.mrb[0].mxu0
    %v1936 = vadd.f32 %v1664, %v1935
    %v1937 = vpop.f32.mrb[0].mxu0
    %1938 = vmatprep.mubr.bf16.mxu0 0
    %1939 = vmatmul.mubr.bf16.gmra.mrb[0].mxu0 %v1635
    %v1940 = vpop.f32.mrb[0].mxu0
    %v1941 = vadd.f32 %v1664, %v1940
    %v1942 = vpop.f32.mrb[0].mxu0
    %v1943 = vpop.f32.mrb[0].mxu0
    %v1944 = vadd.f32 %v1664, %v1943
    %v1945 = vpop.f32.mrb[0].mxu0
    %1946 = vmatprep.mubr.bf16.mxu0 0
    %1947 = vmatmul.mubr.bf16.gmra.mrb[0].mxu0 %v1636
    %v1948 = vpop.f32.mrb[0].mxu0
    %v1949 = vadd.f32 %v1664, %v1948
    %v1950 = vpop.f32.mrb[0].mxu0
    %v1951 = vpop.f32.mrb[0].mxu0
    %v1952 = vadd.f32 %v1664, %v1951
    %v1953 = vpop.f32.mrb[0].mxu0
    %1954 = vmatprep.mubr.bf16.mxu0 0
    %1955 = vmatmul.mubr.bf16.gmra.mrb[0].mxu0 %v1637
    %v1956 = vpop.f32.mrb[0].mxu0
    %v1957 = vadd.f32 %v1664, %v1956
    %v1958 = vpop.f32.mrb[0].mxu0
    %v1959 = vpop.f32.mrb[0].mxu0
    %v1960 = vadd.f32 %v1664, %v1959
    %v1961 = vpop.f32.mrb[0].mxu0
    %1962 = vmatprep.mubr.bf16.mxu0 0
    %1963 = vmatmul.mubr.bf16.gmra.mrb[0].mxu0 %v1638
    %v1964 = vpop.f32.mrb[0].mxu0
    %v1965 = vadd.f32 %v1664, %v1964
    %v1966 = vpop.f32.mrb[0].mxu0
    %v1967 = vpop.f32.mrb[0].mxu0
    %v1968 = vadd.f32 %v1664, %v1967
    %v1969 = vpop.f32.mrb[0].mxu0
    %1970 = vmatprep.mubr.bf16.mxu0 0
    %1971 = vmatmul.mubr.bf16.gmra.mrb[0].mxu0 %v1639
    %v1972 = vpop.f32.mrb[0].mxu0
    %v1973 = vadd.f32 %v1664, %v1972
    %v1974 = vpop.f32.mrb[0].mxu0
    %v1975 = vpop.f32.mrb[0].mxu0
    %v1976 = vadd.f32 %v1664, %v1975
    %v1977 = vpop.f32.mrb[0].mxu0
    %1978 = vmatprep.mubr.bf16.mxu0 0
    %1979 = vmatmul.mubr.bf16.gmra.mrb[0].mxu0 %v1640
    %v1980 = vpop.f32.mrb[0].mxu0
    %v1981 = vadd.f32 %v1664, %v1980
    %v1982 = vpop.f32.mrb[0].mxu0
    %v1983 = vpop.f32.mrb[0].mxu0
    %v1984 = vadd.f32 %v1664, %v1983
    %v1985 = vpop.f32.mrb[0].mxu0
    %1986 = vmatprep.mubr.bf16.mxu0 0
    %1987 = vmatmul.mubr.bf16.gmra.mrb[0].mxu0 %v1641
    %v1988 = vpop.f32.mrb[0].mxu0
    %v1989 = vadd.f32 %v1664, %v1988
    %v1990 = vpop.f32.mrb[0].mxu0
    %v1991 = vpop.f32.mrb[0].mxu0
    %v1992 = vadd.f32 %v1664, %v1991
    %v1993 = vpop.f32.mrb[0].mxu0
    %1994 = vmatprep.mubr.bf16.mxu0 0
    %1995 = vmatmul.mubr.bf16.gmra.mrb[0].mxu0 %v1642
    %v1996 = vpop.f32.mrb[0].mxu0
    %v1997 = vadd.f32 %v1664, %v1996
    %v1998 = vpop.f32.mrb[0].mxu0
    %v1999 = vpop.f32.mrb[0].mxu0
    %v2000 = vadd.f32 %v1664, %v1999
    %v2001 = vpop.f32.mrb[0].mxu0
    %2002 = vdwg.mxu0
    %v2003 = vpack.c.bf16 %v1752, %v1749
    %v2004 = vpack.c.bf16 %v1760, %v1757
    %v2005 = vpack.c.bf16 %v1768, %v1765
    %v2006 = vpack.c.bf16 %v1776, %v1773
    %v2007 = vpack.c.bf16 %v1784, %v1781
    %v2008 = vpack.c.bf16 %v1792, %v1789
    %v2009 = vpack.c.bf16 %v1800, %v1797
    %v2010 = vpack.c.bf16 %v1808, %v1805
    %v2011 = vpack.c.bf16 %v1816, %v1813
    %v2012 = vpack.c.bf16 %v1824, %v1821
    %v2013 = vpack.c.bf16 %v1832, %v1829
    %v2014 = vpack.c.bf16 %v1840, %v1837
    %v2015 = vpack.c.bf16 %v1848, %v1845
    %v2016 = vpack.c.bf16 %v1856, %v1853
    %v2017 = vpack.c.bf16 %v1864, %v1861
    %v2018 = vpack.c.bf16 %v1872, %v1869
    %v2019 = vpack.c.bf16 %v1880, %v1877
    %v2020 = vpack.c.bf16 %v1888, %v1885
    %v2021 = vpack.c.bf16 %v1896, %v1893
    %v2022 = vpack.c.bf16 %v1904, %v1901
    %v2023 = vpack.c.bf16 %v1912, %v1909
    %v2024 = vpack.c.bf16 %v1920, %v1917
    %v2025 = vpack.c.bf16 %v1928, %v1925
    %v2026 = vpack.c.bf16 %v1936, %v1933
    %v2027 = vpack.c.bf16 %v1944, %v1941
    %v2028 = vpack.c.bf16 %v1952, %v1949
    %v2029 = vpack.c.bf16 %v1960, %v1957
    %v2030 = vpack.c.bf16 %v1968, %v1965
    %v2031 = vpack.c.bf16 %v1976, %v1973
    %v2032 = vpack.c.bf16 %v1984, %v1981
    %v2033 = vpack.c.bf16 %v1992, %v1989
    %v2034 = vpack.c.bf16 %v2000, %v1997
    %v2035 = vld [vmem:[#allocation10] sm:$0xff]
    %v2036 = vld [vmem:[#allocation10 + $0x8] sm:$0xff]
    %v2037 = vld [vmem:[#allocation10 + $0x10] sm:$0xff]
    %v2038 = vld [vmem:[#allocation10 + $0x18] sm:$0xff]
    %v2039 = vld [vmem:[#allocation10 + $0x20] sm:$0xff]
    %v2040 = vld [vmem:[#allocation10 + $0x28] sm:$0xff]
    %v2041 = vld [vmem:[#allocation10 + $0x30] sm:$0xff]
    %v2042 = vld [vmem:[#allocation10 + $0x38] sm:$0xff]
    %v2043 = vld [vmem:[#allocation10 + $0x40] sm:$0xff]
    %v2044 = vld [vmem:[#allocation10 + $0x48] sm:$0xff]
    %v2045 = vld [vmem:[#allocation10 + $0x50] sm:$0xff]
    %v2046 = vld [vmem:[#allocation10 + $0x58] sm:$0xff]
    %v2047 = vld [vmem:[#allocation10 + $0x60] sm:$0xff]
    %v2048 = vld [vmem:[#allocation10 + $0x68] sm:$0xff]
    %v2049 = vld [vmem:[#allocation10 + $0x70] sm:$0xff]
    %v2050 = vld [vmem:[#allocation10 + $0x78] sm:$0xff]
    %v2051 = vld [vmem:[#allocation10 + $0x80] sm:$0xff]
    %v2052 = vld [vmem:[#allocation10 + $0x88] sm:$0xff]
    %v2053 = vld [vmem:[#allocation10 + $0x90] sm:$0xff]
    %v2054 = vld [vmem:[#allocation10 + $0x98] sm:$0xff]
    %v2055 = vld [vmem:[#allocation10 + $0xa0] sm:$0xff]
    %v2056 = vld [vmem:[#allocation10 + $0xa8] sm:$0xff]
    %v2057 = vld [vmem:[#allocation10 + $0xb0] sm:$0xff]
    %v2058 = vld [vmem:[#allocation10 + $0xb8] sm:$0xff]
    %v2059 = vld [vmem:[#allocation10 + $0xc0] sm:$0xff]
    %v2060 = vld [vmem:[#allocation10 + $0xc8] sm:$0xff]
    %v2061 = vld [vmem:[#allocation10 + $0xd0] sm:$0xff]
    %v2062 = vld [vmem:[#allocation10 + $0xd8] sm:$0xff]
    %v2063 = vld [vmem:[#allocation10 + $0xe0] sm:$0xff]
    %v2064 = vld [vmem:[#allocation10 + $0xe8] sm:$0xff]
    %v2065 = vld [vmem:[#allocation10 + $0xf0] sm:$0xff]
    %v2066 = vld [vmem:[#allocation10 + $0xf8] sm:$0xff]
    %v2067 = vld [vmem:[%s7] sm:$0x3]
    %v2069 = vlaneseq
    %v2070 = vshrl.u32 %v2069, 7
    %v2071 = vsub.s32 0, %v2070
    %v2072 = vrot.slane %v2067, %v2071
    %v2073 = vlaneseq
    %v2074 = vshrl.u32 %v2073, 7
    %v2075 = vsub.s32 1, %v2074
    %v2076 = vrot.slane %v2067, %v2075
    %v2111 = vunpack.c.l.b16 %v2035
    %v2112 = vunpack.c.h.b16 %v2035
    %v2113 = vunpack.c.l.b16 %v2036
    %v2114 = vunpack.c.h.b16 %v2036
    %v2115 = vunpack.c.l.b16 %v2037
    %v2116 = vunpack.c.h.b16 %v2037
    %v2117 = vunpack.c.l.b16 %v2038
    %v2118 = vunpack.c.h.b16 %v2038
    %v2119 = vunpack.c.l.b16 %v2039
    %v2120 = vunpack.c.h.b16 %v2039
    %v2121 = vunpack.c.l.b16 %v2040
    %v2122 = vunpack.c.h.b16 %v2040
    %v2123 = vunpack.c.l.b16 %v2041
    %v2124 = vunpack.c.h.b16 %v2041
    %v2125 = vunpack.c.l.b16 %v2042
    %v2126 = vunpack.c.h.b16 %v2042
    %v2127 = vunpack.c.l.b16 %v2043
    %v2128 = vunpack.c.h.b16 %v2043
    %v2129 = vunpack.c.l.b16 %v2044
    %v2130 = vunpack.c.h.b16 %v2044
    %v2131 = vunpack.c.l.b16 %v2045
    %v2132 = vunpack.c.h.b16 %v2045
    %v2133 = vunpack.c.l.b16 %v2046
    %v2134 = vunpack.c.h.b16 %v2046
    %v2135 = vunpack.c.l.b16 %v2047
    %v2136 = vunpack.c.h.b16 %v2047
    %v2137 = vunpack.c.l.b16 %v2048
    %v2138 = vunpack.c.h.b16 %v2048
    %v2139 = vunpack.c.l.b16 %v2049
    %v2140 = vunpack.c.h.b16 %v2049
    %v2141 = vunpack.c.l.b16 %v2050
    %v2142 = vunpack.c.h.b16 %v2050
    %v2143 = vunpack.c.l.b16 %v2051
    %v2144 = vunpack.c.h.b16 %v2051
    %v2145 = vunpack.c.l.b16 %v2052
    %v2146 = vunpack.c.h.b16 %v2052
    %v2147 = vunpack.c.l.b16 %v2053
    %v2148 = vunpack.c.h.b16 %v2053
    %v2149 = vunpack.c.l.b16 %v2054
    %v2150 = vunpack.c.h.b16 %v2054
    %v2151 = vunpack.c.l.b16 %v2055
    %v2152 = vunpack.c.h.b16 %v2055
    %v2153 = vunpack.c.l.b16 %v2056
    %v2154 = vunpack.c.h.b16 %v2056
    %v2155 = vunpack.c.l.b16 %v2057
    %v2156 = vunpack.c.h.b16 %v2057
    %v2157 = vunpack.c.l.b16 %v2058
    %v2158 = vunpack.c.h.b16 %v2058
    %v2159 = vunpack.c.l.b16 %v2059
    %v2160 = vunpack.c.h.b16 %v2059
    %v2161 = vunpack.c.l.b16 %v2060
    %v2162 = vunpack.c.h.b16 %v2060
    %v2163 = vunpack.c.l.b16 %v2061
    %v2164 = vunpack.c.h.b16 %v2061
    %v2165 = vunpack.c.l.b16 %v2062
    %v2166 = vunpack.c.h.b16 %v2062
    %v2167 = vunpack.c.l.b16 %v2063
    %v2168 = vunpack.c.h.b16 %v2063
    %v2169 = vunpack.c.l.b16 %v2064
    %v2170 = vunpack.c.h.b16 %v2064
    %v2171 = vunpack.c.l.b16 %v2065
    %v2172 = vunpack.c.h.b16 %v2065
    %v2173 = vunpack.c.l.b16 %v2066
    %v2174 = vunpack.c.h.b16 %v2066
    %v2175 = vpack.c.b16 %v2113, %v2111
    %v2176 = vpack.c.b16 %v2114, %v2112
    %v2177 = vpack.c.b16 %v2117, %v2115
    %v2178 = vpack.c.b16 %v2118, %v2116
    %v2179 = vpack.c.b16 %v2121, %v2119
    %v2180 = vpack.c.b16 %v2122, %v2120
    %v2181 = vpack.c.b16 %v2125, %v2123
    %v2182 = vpack.c.b16 %v2126, %v2124
    %v2183 = vpack.c.b16 %v2129, %v2127
    %v2184 = vpack.c.b16 %v2130, %v2128
    %v2185 = vpack.c.b16 %v2133, %v2131
    %v2186 = vpack.c.b16 %v2134, %v2132
    %v2187 = vpack.c.b16 %v2137, %v2135
    %v2188 = vpack.c.b16 %v2138, %v2136
    %v2189 = vpack.c.b16 %v2141, %v2139
    %v2190 = vpack.c.b16 %v2142, %v2140
    %v2191 = vpack.c.b16 %v2145, %v2143
    %v2192 = vpack.c.b16 %v2146, %v2144
    %v2193 = vpack.c.b16 %v2149, %v2147
    %v2194 = vpack.c.b16 %v2150, %v2148
    %v2195 = vpack.c.b16 %v2153, %v2151
    %v2196 = vpack.c.b16 %v2154, %v2152
    %v2197 = vpack.c.b16 %v2157, %v2155
    %v2198 = vpack.c.b16 %v2158, %v2156
    %v2199 = vpack.c.b16 %v2161, %v2159
    %v2200 = vpack.c.b16 %v2162, %v2160
    %v2201 = vpack.c.b16 %v2165, %v2163
    %v2202 = vpack.c.b16 %v2166, %v2164
    %v2203 = vpack.c.b16 %v2169, %v2167
    %v2204 = vpack.c.b16 %v2170, %v2168
    %v2205 = vpack.c.b16 %v2173, %v2171
    %v2206 = vpack.c.b16 %v2174, %v2172
    %2239 = vmatprep.subr.bf16.mxu0 %v2176
    %2240 = vmatpush1.bf16.msra.mxu0 %v2175
    %2241 = vmatprep.subr.bf16.mxu0 %v2178
    %2242 = vmatpush1.bf16.msra.mxu0 %v2177
    %2243 = vmatprep.subr.bf16.mxu0 %v2180
    %2244 = vmatpush1.bf16.msra.mxu0 %v2179
    %2245 = vmatprep.subr.bf16.mxu0 %v2182
    %2246 = vmatpush1.bf16.msra.mxu0 %v2181
    %2247 = vmatprep.subr.bf16.mxu0 %v2184
    %2248 = vmatpush1.bf16.msra.mxu0 %v2183
    %2249 = vmatprep.subr.bf16.mxu0 %v2186
    %2250 = vmatpush1.bf16.msra.mxu0 %v2185
    %2251 = vmatprep.subr.bf16.mxu0 %v2188
    %2252 = vmatpush1.bf16.msra.mxu0 %v2187
    %2253 = vmatprep.subr.bf16.mxu0 %v2190
    %2254 = vmatpush1.bf16.msra.mxu0 %v2189
    %2255 = vmatprep.subr.bf16.mxu0 %v2192
    %2256 = vmatpush1.bf16.msra.mxu0 %v2191
    %2257 = vmatprep.subr.bf16.mxu0 %v2194
    %2258 = vmatpush1.bf16.msra.mxu0 %v2193
    %2259 = vmatprep.subr.bf16.mxu0 %v2196
    %2260 = vmatpush1.bf16.msra.mxu0 %v2195
    %2261 = vmatprep.subr.bf16.mxu0 %v2198
    %2262 = vmatpush1.bf16.msra.mxu0 %v2197
    %2263 = vmatprep.subr.bf16.mxu0 %v2200
    %2264 = vmatpush1.bf16.msra.mxu0 %v2199
    %2265 = vmatprep.subr.bf16.mxu0 %v2202
    %2266 = vmatpush1.bf16.msra.mxu0 %v2201
    %2267 = vmatprep.subr.bf16.mxu0 %v2204
    %2268 = vmatpush1.bf16.msra.mxu0 %v2203
    %2269 = vmatprep.subr.bf16.mxu0 %v2206
    %2270 = vmatpush1.bf16.msra.mxu0 %v2205
    %2271 = vmatprep.mubr.bf16.mxu0 %v2003
    %2272 = vmatmul.mubr.bf16.gmra.mrb[0].mxu0 %v690
    %v2273 = vpop.f32.mrb[0].mxu0
    %v2274 = vadd.f32 %v2072, %v2273
    %v2275 = vpop.f32.mrb[0].mxu0
    %v2276 = vadd.f32 %v2076, %v2275
    %v2277 = vpop.f32.mrb[0].mxu0
    %v2278 = vadd.f32 %v2072, %v2277
    %v2279 = vpop.f32.mrb[0].mxu0
    %v2280 = vadd.f32 %v2076, %v2279
    %2281 = vmatprep.mubr.bf16.mxu0 %v2004
    %2282 = vmatmul.mubr.bf16.gmra.mrb[0].mxu0 %v691
    %v2283 = vpop.f32.mrb[0].mxu0
    %v2284 = vadd.f32 %v2072, %v2283
    %v2285 = vpop.f32.mrb[0].mxu0
    %v2286 = vadd.f32 %v2076, %v2285
    %v2287 = vpop.f32.mrb[0].mxu0
    %v2288 = vadd.f32 %v2072, %v2287
    %v2289 = vpop.f32.mrb[0].mxu0
    %v2290 = vadd.f32 %v2076, %v2289
    %2291 = vmatprep.mubr.bf16.mxu0 %v2005
    %2292 = vmatmul.mubr.bf16.gmra.mrb[0].mxu0 %v692
    %v2293 = vpop.f32.mrb[0].mxu0
    %v2294 = vadd.f32 %v2072, %v2293
    %v2295 = vpop.f32.mrb[0].mxu0
    %v2296 = vadd.f32 %v2076, %v2295
    %v2297 = vpop.f32.mrb[0].mxu0
    %v2298 = vadd.f32 %v2072, %v2297
    %v2299 = vpop.f32.mrb[0].mxu0
    %v2300 = vadd.f32 %v2076, %v2299
    %2301 = vmatprep.mubr.bf16.mxu0 %v2006
    %2302 = vmatmul.mubr.bf16.gmra.mrb[0].mxu0 %v693
    %v2303 = vpop.f32.mrb[0].mxu0
    %v2304 = vadd.f32 %v2072, %v2303
    %v2305 = vpop.f32.mrb[0].mxu0
    %v2306 = vadd.f32 %v2076, %v2305
    %v2307 = vpop.f32.mrb[0].mxu0
    %v2308 = vadd.f32 %v2072, %v2307
    %v2309 = vpop.f32.mrb[0].mxu0
    %v2310 = vadd.f32 %v2076, %v2309
    %2311 = vmatprep.mubr.bf16.mxu0 %v2007
    %2312 = vmatmul.mubr.bf16.gmra.mrb[0].mxu0 %v694
    %v2313 = vpop.f32.mrb[0].mxu0
    %v2314 = vadd.f32 %v2072, %v2313
    %v2315 = vpop.f32.mrb[0].mxu0
    %v2316 = vadd.f32 %v2076, %v2315
    %v2317 = vpop.f32.mrb[0].mxu0
    %v2318 = vadd.f32 %v2072, %v2317
    %v2319 = vpop.f32.mrb[0].mxu0
    %v2320 = vadd.f32 %v2076, %v2319
    %2321 = vmatprep.mubr.bf16.mxu0 %v2008
    %2322 = vmatmul.mubr.bf16.gmra.mrb[0].mxu0 %v695
    %v2323 = vpop.f32.mrb[0].mxu0
    %v2324 = vadd.f32 %v2072, %v2323
    %v2325 = vpop.f32.mrb[0].mxu0
    %v2326 = vadd.f32 %v2076, %v2325
    %v2327 = vpop.f32.mrb[0].mxu0
    %v2328 = vadd.f32 %v2072, %v2327
    %v2329 = vpop.f32.mrb[0].mxu0
    %v2330 = vadd.f32 %v2076, %v2329
    %2331 = vmatprep.mubr.bf16.mxu0 %v2009
    %2332 = vmatmul.mubr.bf16.gmra.mrb[0].mxu0 %v696
    %v2333 = vpop.f32.mrb[0].mxu0
    %v2334 = vadd.f32 %v2072, %v2333
    %v2335 = vpop.f32.mrb[0].mxu0
    %v2336 = vadd.f32 %v2076, %v2335
    %v2337 = vpop.f32.mrb[0].mxu0
    %v2338 = vadd.f32 %v2072, %v2337
    %v2339 = vpop.f32.mrb[0].mxu0
    %v2340 = vadd.f32 %v2076, %v2339
    %2341 = vmatprep.mubr.bf16.mxu0 %v2010
    %2342 = vmatmul.mubr.bf16.gmra.mrb[0].mxu0 %v697
    %v2343 = vpop.f32.mrb[0].mxu0
    %v2344 = vadd.f32 %v2072, %v2343
    %v2345 = vpop.f32.mrb[0].mxu0
    %v2346 = vadd.f32 %v2076, %v2345
    %v2347 = vpop.f32.mrb[0].mxu0
    %v2348 = vadd.f32 %v2072, %v2347
    %v2349 = vpop.f32.mrb[0].mxu0
    %v2350 = vadd.f32 %v2076, %v2349
    %2351 = vmatprep.mubr.bf16.mxu0 %v2011
    %2352 = vmatmul.mubr.bf16.gmra.mrb[0].mxu0 %v698
    %v2353 = vpop.f32.mrb[0].mxu0
    %v2354 = vadd.f32 %v2072, %v2353
    %v2355 = vpop.f32.mrb[0].mxu0
    %v2356 = vadd.f32 %v2076, %v2355
    %v2357 = vpop.f32.mrb[0].mxu0
    %v2358 = vadd.f32 %v2072, %v2357
    %v2359 = vpop.f32.mrb[0].mxu0
    %v2360 = vadd.f32 %v2076, %v2359
    %2361 = vmatprep.mubr.bf16.mxu0 %v2012
    %2362 = vmatmul.mubr.bf16.gmra.mrb[0].mxu0 %v699
    %v2363 = vpop.f32.mrb[0].mxu0
    %v2364 = vadd.f32 %v2072, %v2363
    %v2365 = vpop.f32.mrb[0].mxu0
    %v2366 = vadd.f32 %v2076, %v2365
    %v2367 = vpop.f32.mrb[0].mxu0
    %v2368 = vadd.f32 %v2072, %v2367
    %v2369 = vpop.f32.mrb[0].mxu0
    %v2370 = vadd.f32 %v2076, %v2369
    %2371 = vmatprep.mubr.bf16.mxu0 %v2013
    %2372 = vmatmul.mubr.bf16.gmra.mrb[0].mxu0 %v700
    %v2373 = vpop.f32.mrb[0].mxu0
    %v2374 = vadd.f32 %v2072, %v2373
    %v2375 = vpop.f32.mrb[0].mxu0
    %v2376 = vadd.f32 %v2076, %v2375
    %v2377 = vpop.f32.mrb[0].mxu0
    %v2378 = vadd.f32 %v2072, %v2377
    %v2379 = vpop.f32.mrb[0].mxu0
    %v2380 = vadd.f32 %v2076, %v2379
    %2381 = vmatprep.mubr.bf16.mxu0 %v2014
    %2382 = vmatmul.mubr.bf16.gmra.mrb[0].mxu0 %v701
    %v2383 = vpop.f32.mrb[0].mxu0
    %v2384 = vadd.f32 %v2072, %v2383
    %v2385 = vpop.f32.mrb[0].mxu0
    %v2386 = vadd.f32 %v2076, %v2385
    %v2387 = vpop.f32.mrb[0].mxu0
    %v2388 = vadd.f32 %v2072, %v2387
    %v2389 = vpop.f32.mrb[0].mxu0
    %v2390 = vadd.f32 %v2076, %v2389
    %2391 = vmatprep.mubr.bf16.mxu0 %v2015
    %2392 = vmatmul.mubr.bf16.gmra.mrb[0].mxu0 %v702
    %v2393 = vpop.f32.mrb[0].mxu0
    %v2394 = vadd.f32 %v2072, %v2393
    %v2395 = vpop.f32.mrb[0].mxu0
    %v2396 = vadd.f32 %v2076, %v2395
    %v2397 = vpop.f32.mrb[0].mxu0
    %v2398 = vadd.f32 %v2072, %v2397
    %v2399 = vpop.f32.mrb[0].mxu0
    %v2400 = vadd.f32 %v2076, %v2399
    %2401 = vmatprep.mubr.bf16.mxu0 %v2016
    %2402 = vmatmul.mubr.bf16.gmra.mrb[0].mxu0 %v703
    %v2403 = vpop.f32.mrb[0].mxu0
    %v2404 = vadd.f32 %v2072, %v2403
    %v2405 = vpop.f32.mrb[0].mxu0
    %v2406 = vadd.f32 %v2076, %v2405
    %v2407 = vpop.f32.mrb[0].mxu0
    %v2408 = vadd.f32 %v2072, %v2407
    %v2409 = vpop.f32.mrb[0].mxu0
    %v2410 = vadd.f32 %v2076, %v2409
    %2411 = vmatprep.mubr.bf16.mxu0 %v2017
    %2412 = vmatmul.mubr.bf16.gmra.mrb[0].mxu0 %v704
    %v2413 = vpop.f32.mrb[0].mxu0
    %v2414 = vadd.f32 %v2072, %v2413
    %v2415 = vpop.f32.mrb[0].mxu0
    %v2416 = vadd.f32 %v2076, %v2415
    %v2417 = vpop.f32.mrb[0].mxu0
    %v2418 = vadd.f32 %v2072, %v2417
    %v2419 = vpop.f32.mrb[0].mxu0
    %v2420 = vadd.f32 %v2076, %v2419
    %2421 = vmatprep.mubr.bf16.mxu0 %v2018
    %2422 = vmatmul.mubr.bf16.gmra.mrb[0].mxu0 %v705
    %v2423 = vpop.f32.mrb[0].mxu0
    %v2424 = vadd.f32 %v2072, %v2423
    %v2425 = vpop.f32.mrb[0].mxu0
    %v2426 = vadd.f32 %v2076, %v2425
    %v2427 = vpop.f32.mrb[0].mxu0
    %v2428 = vadd.f32 %v2072, %v2427
    %v2429 = vpop.f32.mrb[0].mxu0
    %v2430 = vadd.f32 %v2076, %v2429
    %2431 = vmatprep.mubr.bf16.mxu0 %v2019
    %2432 = vmatmul.mubr.bf16.gmra.mrb[0].mxu0 %v706
    %v2433 = vpop.f32.mrb[0].mxu0
    %v2434 = vadd.f32 %v2072, %v2433
    %v2435 = vpop.f32.mrb[0].mxu0
    %v2436 = vadd.f32 %v2076, %v2435
    %v2437 = vpop.f32.mrb[0].mxu0
    %v2438 = vadd.f32 %v2072, %v2437
    %v2439 = vpop.f32.mrb[0].mxu0
    %v2440 = vadd.f32 %v2076, %v2439
    %2441 = vmatprep.mubr.bf16.mxu0 %v2020
    %2442 = vmatmul.mubr.bf16.gmra.mrb[0].mxu0 %v707
    %v2443 = vpop.f32.mrb[0].mxu0
    %v2444 = vadd.f32 %v2072, %v2443
    %v2445 = vpop.f32.mrb[0].mxu0
    %v2446 = vadd.f32 %v2076, %v2445
    %v2447 = vpop.f32.mrb[0].mxu0
    %v2448 = vadd.f32 %v2072, %v2447
    %v2449 = vpop.f32.mrb[0].mxu0
    %v2450 = vadd.f32 %v2076, %v2449
    %2451 = vmatprep.mubr.bf16.mxu0 %v2021
    %2452 = vmatmul.mubr.bf16.gmra.mrb[0].mxu0 %v708
    %v2453 = vpop.f32.mrb[0].mxu0
    %v2454 = vadd.f32 %v2072, %v2453
    %v2455 = vpop.f32.mrb[0].mxu0
    %v2456 = vadd.f32 %v2076, %v2455
    %v2457 = vpop.f32.mrb[0].mxu0
    %v2458 = vadd.f32 %v2072, %v2457
    %v2459 = vpop.f32.mrb[0].mxu0
    %v2460 = vadd.f32 %v2076, %v2459
    %2461 = vmatprep.mubr.bf16.mxu0 %v2022
    %2462 = vmatmul.mubr.bf16.gmra.mrb[0].mxu0 %v709
    %v2463 = vpop.f32.mrb[0].mxu0
    %v2464 = vadd.f32 %v2072, %v2463
    %v2465 = vpop.f32.mrb[0].mxu0
    %v2466 = vadd.f32 %v2076, %v2465
    %v2467 = vpop.f32.mrb[0].mxu0
    %v2468 = vadd.f32 %v2072, %v2467
    %v2469 = vpop.f32.mrb[0].mxu0
    %v2470 = vadd.f32 %v2076, %v2469
    %2471 = vmatprep.mubr.bf16.mxu0 %v2023
    %2472 = vmatmul.mubr.bf16.gmra.mrb[0].mxu0 %v710
    %v2473 = vpop.f32.mrb[0].mxu0
    %v2474 = vadd.f32 %v2072, %v2473
    %v2475 = vpop.f32.mrb[0].mxu0
    %v2476 = vadd.f32 %v2076, %v2475
    %v2477 = vpop.f32.mrb[0].mxu0
    %v2478 = vadd.f32 %v2072, %v2477
    %v2479 = vpop.f32.mrb[0].mxu0
    %v2480 = vadd.f32 %v2076, %v2479
    %2481 = vmatprep.mubr.bf16.mxu0 %v2024
    %2482 = vmatmul.mubr.bf16.gmra.mrb[0].mxu0 %v711
    %v2483 = vpop.f32.mrb[0].mxu0
    %v2484 = vadd.f32 %v2072, %v2483
    %v2485 = vpop.f32.mrb[0].mxu0
    %v2486 = vadd.f32 %v2076, %v2485
    %v2487 = vpop.f32.mrb[0].mxu0
    %v2488 = vadd.f32 %v2072, %v2487
    %v2489 = vpop.f32.mrb[0].mxu0
    %v2490 = vadd.f32 %v2076, %v2489
    %2491 = vmatprep.mubr.bf16.mxu0 %v2025
    %2492 = vmatmul.mubr.bf16.gmra.mrb[0].mxu0 %v712
    %v2493 = vpop.f32.mrb[0].mxu0
    %v2494 = vadd.f32 %v2072, %v2493
    %v2495 = vpop.f32.mrb[0].mxu0
    %v2496 = vadd.f32 %v2076, %v2495
    %v2497 = vpop.f32.mrb[0].mxu0
    %v2498 = vadd.f32 %v2072, %v2497
    %v2499 = vpop.f32.mrb[0].mxu0
    %v2500 = vadd.f32 %v2076, %v2499
    %2501 = vmatprep.mubr.bf16.mxu0 %v2026
    %2502 = vmatmul.mubr.bf16.gmra.mrb[0].mxu0 %v713
    %v2503 = vpop.f32.mrb[0].mxu0
    %v2504 = vadd.f32 %v2072, %v2503
    %v2505 = vpop.f32.mrb[0].mxu0
    %v2506 = vadd.f32 %v2076, %v2505
    %v2507 = vpop.f32.mrb[0].mxu0
    %v2508 = vadd.f32 %v2072, %v2507
    %v2509 = vpop.f32.mrb[0].mxu0
    %v2510 = vadd.f32 %v2076, %v2509
    %2511 = vmatprep.mubr.bf16.mxu0 %v2027
    %2512 = vmatmul.mubr.bf16.gmra.mrb[0].mxu0 %v714
    %v2513 = vpop.f32.mrb[0].mxu0
    %v2514 = vadd.f32 %v2072, %v2513
    %v2515 = vpop.f32.mrb[0].mxu0
    %v2516 = vadd.f32 %v2076, %v2515
    %v2517 = vpop.f32.mrb[0].mxu0
    %v2518 = vadd.f32 %v2072, %v2517
    %v2519 = vpop.f32.mrb[0].mxu0
    %v2520 = vadd.f32 %v2076, %v2519
    %2521 = vmatprep.mubr.bf16.mxu0 %v2028
    %2522 = vmatmul.mubr.bf16.gmra.mrb[0].mxu0 %v715
    %v2523 = vpop.f32.mrb[0].mxu0
    %v2524 = vadd.f32 %v2072, %v2523
    %v2525 = vpop.f32.mrb[0].mxu0
    %v2526 = vadd.f32 %v2076, %v2525
    %v2527 = vpop.f32.mrb[0].mxu0
    %v2528 = vadd.f32 %v2072, %v2527
    %v2529 = vpop.f32.mrb[0].mxu0
    %v2530 = vadd.f32 %v2076, %v2529
    %2531 = vmatprep.mubr.bf16.mxu0 %v2029
    %2532 = vmatmul.mubr.bf16.gmra.mrb[0].mxu0 %v716
    %v2533 = vpop.f32.mrb[0].mxu0
    %v2534 = vadd.f32 %v2072, %v2533
    %v2535 = vpop.f32.mrb[0].mxu0
    %v2536 = vadd.f32 %v2076, %v2535
    %v2537 = vpop.f32.mrb[0].mxu0
    %v2538 = vadd.f32 %v2072, %v2537
    %v2539 = vpop.f32.mrb[0].mxu0
    %v2540 = vadd.f32 %v2076, %v2539
    %2541 = vmatprep.mubr.bf16.mxu0 %v2030
    %2542 = vmatmul.mubr.bf16.gmra.mrb[0].mxu0 %v717
    %v2543 = vpop.f32.mrb[0].mxu0
    %v2544 = vadd.f32 %v2072, %v2543
    %v2545 = vpop.f32.mrb[0].mxu0
    %v2546 = vadd.f32 %v2076, %v2545
    %v2547 = vpop.f32.mrb[0].mxu0
    %v2548 = vadd.f32 %v2072, %v2547
    %v2549 = vpop.f32.mrb[0].mxu0
    %v2550 = vadd.f32 %v2076, %v2549
    %2551 = vmatprep.mubr.bf16.mxu0 %v2031
    %2552 = vmatmul.mubr.bf16.gmra.mrb[0].mxu0 %v718
    %v2553 = vpop.f32.mrb[0].mxu0
    %v2554 = vadd.f32 %v2072, %v2553
    %v2555 = vpop.f32.mrb[0].mxu0
    %v2556 = vadd.f32 %v2076, %v2555
    %v2557 = vpop.f32.mrb[0].mxu0
    %v2558 = vadd.f32 %v2072, %v2557
    %v2559 = vpop.f32.mrb[0].mxu0
    %v2560 = vadd.f32 %v2076, %v2559
    %2561 = vmatprep.mubr.bf16.mxu0 %v2032
    %2562 = vmatmul.mubr.bf16.gmra.mrb[0].mxu0 %v719
    %v2563 = vpop.f32.mrb[0].mxu0
    %v2564 = vadd.f32 %v2072, %v2563
    %v2565 = vpop.f32.mrb[0].mxu0
    %v2566 = vadd.f32 %v2076, %v2565
    %v2567 = vpop.f32.mrb[0].mxu0
    %v2568 = vadd.f32 %v2072, %v2567
    %v2569 = vpop.f32.mrb[0].mxu0
    %v2570 = vadd.f32 %v2076, %v2569
    %2571 = vmatprep.mubr.bf16.mxu0 %v2033
    %2572 = vmatmul.mubr.bf16.gmra.mrb[0].mxu0 %v720
    %v2573 = vpop.f32.mrb[0].mxu0
    %v2574 = vadd.f32 %v2072, %v2573
    %v2575 = vpop.f32.mrb[0].mxu0
    %v2576 = vadd.f32 %v2076, %v2575
    %v2577 = vpop.f32.mrb[0].mxu0
    %v2578 = vadd.f32 %v2072, %v2577
    %v2579 = vpop.f32.mrb[0].mxu0
    %v2580 = vadd.f32 %v2076, %v2579
    %2581 = vmatprep.mubr.bf16.mxu0 %v2034
    %2582 = vmatmul.mubr.bf16.gmra.mrb[0].mxu0 %v721
    %v2583 = vpop.f32.mrb[0].mxu0
    %v2584 = vadd.f32 %v2072, %v2583
    %v2585 = vpop.f32.mrb[0].mxu0
    %v2586 = vadd.f32 %v2076, %v2585
    %v2587 = vpop.f32.mrb[0].mxu0
    %v2588 = vadd.f32 %v2072, %v2587
    %v2589 = vpop.f32.mrb[0].mxu0
    %v2590 = vadd.f32 %v2076, %v2589
    %2591 = vdwg.mxu0
    %v2592 = vmax.f32 %v2274, 0.0
    %v2593 = vmax.f32 %v2276, 0.0
    %v2594 = vmax.f32 %v2278, 0.0
    %v2595 = vmax.f32 %v2280, 0.0
    %v2596 = vmax.f32 %v2284, 0.0
    %v2597 = vmax.f32 %v2286, 0.0
    %v2598 = vmax.f32 %v2288, 0.0
    %v2599 = vmax.f32 %v2290, 0.0
    %v2600 = vmax.f32 %v2294, 0.0
    %v2601 = vmax.f32 %v2296, 0.0
    %v2602 = vmax.f32 %v2298, 0.0
    %v2603 = vmax.f32 %v2300, 0.0
    %v2604 = vmax.f32 %v2304, 0.0
    %v2605 = vmax.f32 %v2306, 0.0
    %v2606 = vmax.f32 %v2308, 0.0
    %v2607 = vmax.f32 %v2310, 0.0
    %v2608 = vmax.f32 %v2314, 0.0
    %v2609 = vmax.f32 %v2316, 0.0
    %v2610 = vmax.f32 %v2318, 0.0
    %v2611 = vmax.f32 %v2320, 0.0
    %v2612 = vmax.f32 %v2324, 0.0
    %v2613 = vmax.f32 %v2326, 0.0
    %v2614 = vmax.f32 %v2328, 0.0
    %v2615 = vmax.f32 %v2330, 0.0
    %v2616 = vmax.f32 %v2334, 0.0
    %v2617 = vmax.f32 %v2336, 0.0
    %v2618 = vmax.f32 %v2338, 0.0
    %v2619 = vmax.f32 %v2340, 0.0
    %v2620 = vmax.f32 %v2344, 0.0
    %v2621 = vmax.f32 %v2346, 0.0
    %v2622 = vmax.f32 %v2348, 0.0
    %v2623 = vmax.f32 %v2350, 0.0
    %v2624 = vmax.f32 %v2354, 0.0
    %v2625 = vmax.f32 %v2356, 0.0
    %v2626 = vmax.f32 %v2358, 0.0
    %v2627 = vmax.f32 %v2360, 0.0
    %v2628 = vmax.f32 %v2364, 0.0
    %v2629 = vmax.f32 %v2366, 0.0
    %v2630 = vmax.f32 %v2368, 0.0
    %v2631 = vmax.f32 %v2370, 0.0
    %v2632 = vmax.f32 %v2374, 0.0
    %v2633 = vmax.f32 %v2376, 0.0
    %v2634 = vmax.f32 %v2378, 0.0
    %v2635 = vmax.f32 %v2380, 0.0
    %v2636 = vmax.f32 %v2384, 0.0
    %v2637 = vmax.f32 %v2386, 0.0
    %v2638 = vmax.f32 %v2388, 0.0
    %v2639 = vmax.f32 %v2390, 0.0
    %v2640 = vmax.f32 %v2394, 0.0
    %v2641 = vmax.f32 %v2396, 0.0
    %v2642 = vmax.f32 %v2398, 0.0
    %v2643 = vmax.f32 %v2400, 0.0
    %v2644 = vmax.f32 %v2404, 0.0
    %v2645 = vmax.f32 %v2406, 0.0
    %v2646 = vmax.f32 %v2408, 0.0
    %v2647 = vmax.f32 %v2410, 0.0
    %v2648 = vmax.f32 %v2414, 0.0
    %v2649 = vmax.f32 %v2416, 0.0
    %v2650 = vmax.f32 %v2418, 0.0
    %v2651 = vmax.f32 %v2420, 0.0
    %v2652 = vmax.f32 %v2424, 0.0
    %v2653 = vmax.f32 %v2426, 0.0
    %v2654 = vmax.f32 %v2428, 0.0
    %v2655 = vmax.f32 %v2430, 0.0
    %v2656 = vmax.f32 %v2434, 0.0
    %v2657 = vmax.f32 %v2436, 0.0
    %v2658 = vmax.f32 %v2438, 0.0
    %v2659 = vmax.f32 %v2440, 0.0
    %v2660 = vmax.f32 %v2444, 0.0
    %v2661 = vmax.f32 %v2446, 0.0
    %v2662 = vmax.f32 %v2448, 0.0
    %v2663 = vmax.f32 %v2450, 0.0
    %v2664 = vmax.f32 %v2454, 0.0
    %v2665 = vmax.f32 %v2456, 0.0
    %v2666 = vmax.f32 %v2458, 0.0
    %v2667 = vmax.f32 %v2460, 0.0
    %v2668 = vmax.f32 %v2464, 0.0
    %v2669 = vmax.f32 %v2466, 0.0
    %v2670 = vmax.f32 %v2468, 0.0
    %v2671 = vmax.f32 %v2470, 0.0
    %v2672 = vmax.f32 %v2474, 0.0
    %v2673 = vmax.f32 %v2476, 0.0
    %v2674 = vmax.f32 %v2478, 0.0
    %v2675 = vmax.f32 %v2480, 0.0
    %v2676 = vmax.f32 %v2484, 0.0
    %v2677 = vmax.f32 %v2486, 0.0
    %v2678 = vmax.f32 %v2488, 0.0
    %v2679 = vmax.f32 %v2490, 0.0
    %v2680 = vmax.f32 %v2494, 0.0
    %v2681 = vmax.f32 %v2496, 0.0
    %v2682 = vmax.f32 %v2498, 0.0
    %v2683 = vmax.f32 %v2500, 0.0
    %v2684 = vmax.f32 %v2504, 0.0
    %v2685 = vmax.f32 %v2506, 0.0
    %v2686 = vmax.f32 %v2508, 0.0
    %v2687 = vmax.f32 %v2510, 0.0
    %v2688 = vmax.f32 %v2514, 0.0
    %v2689 = vmax.f32 %v2516, 0.0
    %v2690 = vmax.f32 %v2518, 0.0
    %v2691 = vmax.f32 %v2520, 0.0
    %v2692 = vmax.f32 %v2524, 0.0
    %v2693 = vmax.f32 %v2526, 0.0
    %v2694 = vmax.f32 %v2528, 0.0
    %v2695 = vmax.f32 %v2530, 0.0
    %v2696 = vmax.f32 %v2534, 0.0
    %v2697 = vmax.f32 %v2536, 0.0
    %v2698 = vmax.f32 %v2538, 0.0
    %v2699 = vmax.f32 %v2540, 0.0
    %v2700 = vmax.f32 %v2544, 0.0
    %v2701 = vmax.f32 %v2546, 0.0
    %v2702 = vmax.f32 %v2548, 0.0
    %v2703 = vmax.f32 %v2550, 0.0
    %v2704 = vmax.f32 %v2554, 0.0
    %v2705 = vmax.f32 %v2556, 0.0
    %v2706 = vmax.f32 %v2558, 0.0
    %v2707 = vmax.f32 %v2560, 0.0
    %v2708 = vmax.f32 %v2564, 0.0
    %v2709 = vmax.f32 %v2566, 0.0
    %v2710 = vmax.f32 %v2568, 0.0
    %v2711 = vmax.f32 %v2570, 0.0
    %v2712 = vmax.f32 %v2574, 0.0
    %v2713 = vmax.f32 %v2576, 0.0
    %v2714 = vmax.f32 %v2578, 0.0
    %v2715 = vmax.f32 %v2580, 0.0
    %v2716 = vmax.f32 %v2584, 0.0
    %v2717 = vmax.f32 %v2586, 0.0
    %v2718 = vmax.f32 %v2588, 0.0
    %v2719 = vmax.f32 %v2590, 0.0
    %v2720 = vpack.c.bf16 %v2594, %v2592
    %v2721 = vpack.c.bf16 %v2595, %v2593
    %v2722 = vpack.c.bf16 %v2598, %v2596
    %v2723 = vpack.c.bf16 %v2599, %v2597
    %v2724 = vpack.c.bf16 %v2602, %v2600
    %v2725 = vpack.c.bf16 %v2603, %v2601
    %v2726 = vpack.c.bf16 %v2606, %v2604
    %v2727 = vpack.c.bf16 %v2607, %v2605
    %v2728 = vpack.c.bf16 %v2610, %v2608
    %v2729 = vpack.c.bf16 %v2611, %v2609
    %v2730 = vpack.c.bf16 %v2614, %v2612
    %v2731 = vpack.c.bf16 %v2615, %v2613
    %v2732 = vpack.c.bf16 %v2618, %v2616
    %v2733 = vpack.c.bf16 %v2619, %v2617
    %v2734 = vpack.c.bf16 %v2622, %v2620
    %v2735 = vpack.c.bf16 %v2623, %v2621
    %v2736 = vpack.c.bf16 %v2626, %v2624
    %v2737 = vpack.c.bf16 %v2627, %v2625
    %v2738 = vpack.c.bf16 %v2630, %v2628
    %v2739 = vpack.c.bf16 %v2631, %v2629
    %v2740 = vpack.c.bf16 %v2634, %v2632
    %v2741 = vpack.c.bf16 %v2635, %v2633
    %v2742 = vpack.c.bf16 %v2638, %v2636
    %v2743 = vpack.c.bf16 %v2639, %v2637
    %v2744 = vpack.c.bf16 %v2642, %v2640
    %v2745 = vpack.c.bf16 %v2643, %v2641
    %v2746 = vpack.c.bf16 %v2646, %v2644
    %v2747 = vpack.c.bf16 %v2647, %v2645
    %v2748 = vpack.c.bf16 %v2650, %v2648
    %v2749 = vpack.c.bf16 %v2651, %v2649
    %v2750 = vpack.c.bf16 %v2654, %v2652
    %v2751 = vpack.c.bf16 %v2655, %v2653
    %v2752 = vpack.c.bf16 %v2658, %v2656
    %v2753 = vpack.c.bf16 %v2659, %v2657
    %v2754 = vpack.c.bf16 %v2662, %v2660
    %v2755 = vpack.c.bf16 %v2663, %v2661
    %v2756 = vpack.c.bf16 %v2666, %v2664
    %v2757 = vpack.c.bf16 %v2667, %v2665
    %v2758 = vpack.c.bf16 %v2670, %v2668
    %v2759 = vpack.c.bf16 %v2671, %v2669
    %v2760 = vpack.c.bf16 %v2674, %v2672
    %v2761 = vpack.c.bf16 %v2675, %v2673
    %v2762 = vpack.c.bf16 %v2678, %v2676
    %v2763 = vpack.c.bf16 %v2679, %v2677
    %v2764 = vpack.c.bf16 %v2682, %v2680
    %v2765 = vpack.c.bf16 %v2683, %v2681
    %v2766 = vpack.c.bf16 %v2686, %v2684
    %v2767 = vpack.c.bf16 %v2687, %v2685
    %v2768 = vpack.c.bf16 %v2690, %v2688
    %v2769 = vpack.c.bf16 %v2691, %v2689
    %v2770 = vpack.c.bf16 %v2694, %v2692
    %v2771 = vpack.c.bf16 %v2695, %v2693
    %v2772 = vpack.c.bf16 %v2698, %v2696
    %v2773 = vpack.c.bf16 %v2699, %v2697
    %v2774 = vpack.c.bf16 %v2702, %v2700
    %v2775 = vpack.c.bf16 %v2703, %v2701
    %v2776 = vpack.c.bf16 %v2706, %v2704
    %v2777 = vpack.c.bf16 %v2707, %v2705
    %v2778 = vpack.c.bf16 %v2710, %v2708
    %v2779 = vpack.c.bf16 %v2711, %v2709
    %v2780 = vpack.c.bf16 %v2714, %v2712
    %v2781 = vpack.c.bf16 %v2715, %v2713
    %v2782 = vpack.c.bf16 %v2718, %v2716
    %v2783 = vpack.c.bf16 %v2719, %v2717
    %v2784 = vld [vmem:[#allocation11] sm:$0xff]
    %v2785 = vld [vmem:[#allocation11 + $0x8] sm:$0xff]
    %v2786 = vld [vmem:[#allocation11 + $0x10] sm:$0xff]
    %v2787 = vld [vmem:[#allocation11 + $0x18] sm:$0xff]
    %v2788 = vld [vmem:[#allocation11 + $0x20] sm:$0xff]
    %v2789 = vld [vmem:[#allocation11 + $0x28] sm:$0xff]
    %v2790 = vld [vmem:[#allocation11 + $0x30] sm:$0xff]
    %v2791 = vld [vmem:[#allocation11 + $0x38] sm:$0xff]
    %v2792 = vld [vmem:[#allocation11 + $0x40] sm:$0xff]
    %v2793 = vld [vmem:[#allocation11 + $0x48] sm:$0xff]
    %v2794 = vld [vmem:[#allocation11 + $0x50] sm:$0xff]
    %v2795 = vld [vmem:[#allocation11 + $0x58] sm:$0xff]
    %v2796 = vld [vmem:[#allocation11 + $0x60] sm:$0xff]
    %v2797 = vld [vmem:[#allocation11 + $0x68] sm:$0xff]
    %v2798 = vld [vmem:[#allocation11 + $0x70] sm:$0xff]
    %v2799 = vld [vmem:[#allocation11 + $0x78] sm:$0xff]
    %v2800 = vld [vmem:[#allocation11 + $0x80] sm:$0xff]
    %v2801 = vld [vmem:[#allocation11 + $0x88] sm:$0xff]
    %v2802 = vld [vmem:[#allocation11 + $0x90] sm:$0xff]
    %v2803 = vld [vmem:[#allocation11 + $0x98] sm:$0xff]
    %v2804 = vld [vmem:[#allocation11 + $0xa0] sm:$0xff]
    %v2805 = vld [vmem:[#allocation11 + $0xa8] sm:$0xff]
    %v2806 = vld [vmem:[#allocation11 + $0xb0] sm:$0xff]
    %v2807 = vld [vmem:[#allocation11 + $0xb8] sm:$0xff]
    %v2808 = vld [vmem:[#allocation11 + $0xc0] sm:$0xff]
    %v2809 = vld [vmem:[#allocation11 + $0xc8] sm:$0xff]
    %v2810 = vld [vmem:[#allocation11 + $0xd0] sm:$0xff]
    %v2811 = vld [vmem:[#allocation11 + $0xd8] sm:$0xff]
    %v2812 = vld [vmem:[#allocation11 + $0xe0] sm:$0xff]
    %v2813 = vld [vmem:[#allocation11 + $0xe8] sm:$0xff]
    %v2814 = vld [vmem:[#allocation11 + $0xf0] sm:$0xff]
    %v2815 = vld [vmem:[#allocation11 + $0xf8] sm:$0xff]
    %v2816 = vld [vmem:[%s9] sm:$0x3]
    %v2818 = vlaneseq
    %v2819 = vshrl.u32 %v2818, 7
    %v2820 = vsub.s32 0, %v2819
    %v2821 = vrot.slane %v2816, %v2820
    %v2822 = vlaneseq
    %v2823 = vshrl.u32 %v2822, 7
    %v2824 = vsub.s32 1, %v2823
    %v2825 = vrot.slane %v2816, %v2824
    %v2860 = vunpack.c.l.b16 %v2784
    %v2861 = vunpack.c.h.b16 %v2784
    %v2862 = vunpack.c.l.b16 %v2785
    %v2863 = vunpack.c.h.b16 %v2785
    %v2864 = vunpack.c.l.b16 %v2786
    %v2865 = vunpack.c.h.b16 %v2786
    %v2866 = vunpack.c.l.b16 %v2787
    %v2867 = vunpack.c.h.b16 %v2787
    %v2868 = vunpack.c.l.b16 %v2788
    %v2869 = vunpack.c.h.b16 %v2788
    %v2870 = vunpack.c.l.b16 %v2789
    %v2871 = vunpack.c.h.b16 %v2789
    %v2872 = vunpack.c.l.b16 %v2790
    %v2873 = vunpack.c.h.b16 %v2790
    %v2874 = vunpack.c.l.b16 %v2791
    %v2875 = vunpack.c.h.b16 %v2791
    %v2876 = vunpack.c.l.b16 %v2792
    %v2877 = vunpack.c.h.b16 %v2792
    %v2878 = vunpack.c.l.b16 %v2793
    %v2879 = vunpack.c.h.b16 %v2793
    %v2880 = vunpack.c.l.b16 %v2794
    %v2881 = vunpack.c.h.b16 %v2794
    %v2882 = vunpack.c.l.b16 %v2795
    %v2883 = vunpack.c.h.b16 %v2795
    %v2884 = vunpack.c.l.b16 %v2796
    %v2885 = vunpack.c.h.b16 %v2796
    %v2886 = vunpack.c.l.b16 %v2797
    %v2887 = vunpack.c.h.b16 %v2797
    %v2888 = vunpack.c.l.b16 %v2798
    %v2889 = vunpack.c.h.b16 %v2798
    %v2890 = vunpack.c.l.b16 %v2799
    %v2891 = vunpack.c.h.b16 %v2799
    %v2892 = vunpack.c.l.b16 %v2800
    %v2893 = vunpack.c.h.b16 %v2800
    %v2894 = vunpack.c.l.b16 %v2801
    %v2895 = vunpack.c.h.b16 %v2801
    %v2896 = vunpack.c.l.b16 %v2802
    %v2897 = vunpack.c.h.b16 %v2802
    %v2898 = vunpack.c.l.b16 %v2803
    %v2899 = vunpack.c.h.b16 %v2803
    %v2900 = vunpack.c.l.b16 %v2804
    %v2901 = vunpack.c.h.b16 %v2804
    %v2902 = vunpack.c.l.b16 %v2805
    %v2903 = vunpack.c.h.b16 %v2805
    %v2904 = vunpack.c.l.b16 %v2806
    %v2905 = vunpack.c.h.b16 %v2806
    %v2906 = vunpack.c.l.b16 %v2807
    %v2907 = vunpack.c.h.b16 %v2807
    %v2908 = vunpack.c.l.b16 %v2808
    %v2909 = vunpack.c.h.b16 %v2808
    %v2910 = vunpack.c.l.b16 %v2809
    %v2911 = vunpack.c.h.b16 %v2809
    %v2912 = vunpack.c.l.b16 %v2810
    %v2913 = vunpack.c.h.b16 %v2810
    %v2914 = vunpack.c.l.b16 %v2811
    %v2915 = vunpack.c.h.b16 %v2811
    %v2916 = vunpack.c.l.b16 %v2812
    %v2917 = vunpack.c.h.b16 %v2812
    %v2918 = vunpack.c.l.b16 %v2813
    %v2919 = vunpack.c.h.b16 %v2813
    %v2920 = vunpack.c.l.b16 %v2814
    %v2921 = vunpack.c.h.b16 %v2814
    %v2922 = vunpack.c.l.b16 %v2815
    %v2923 = vunpack.c.h.b16 %v2815
    %v2924 = vpack.c.b16 %v2862, %v2860
    %v2925 = vpack.c.b16 %v2863, %v2861
    %v2926 = vpack.c.b16 %v2866, %v2864
    %v2927 = vpack.c.b16 %v2867, %v2865
    %v2928 = vpack.c.b16 %v2870, %v2868
    %v2929 = vpack.c.b16 %v2871, %v2869
    %v2930 = vpack.c.b16 %v2874, %v2872
    %v2931 = vpack.c.b16 %v2875, %v2873
    %v2932 = vpack.c.b16 %v2878, %v2876
    %v2933 = vpack.c.b16 %v2879, %v2877
    %v2934 = vpack.c.b16 %v2882, %v2880
    %v2935 = vpack.c.b16 %v2883, %v2881
    %v2936 = vpack.c.b16 %v2886, %v2884
    %v2937 = vpack.c.b16 %v2887, %v2885
    %v2938 = vpack.c.b16 %v2890, %v2888
    %v2939 = vpack.c.b16 %v2891, %v2889
    %v2940 = vpack.c.b16 %v2894, %v2892
    %v2941 = vpack.c.b16 %v2895, %v2893
    %v2942 = vpack.c.b16 %v2898, %v2896
    %v2943 = vpack.c.b16 %v2899, %v2897
    %v2944 = vpack.c.b16 %v2902, %v2900
    %v2945 = vpack.c.b16 %v2903, %v2901
    %v2946 = vpack.c.b16 %v2906, %v2904
    %v2947 = vpack.c.b16 %v2907, %v2905
    %v2948 = vpack.c.b16 %v2910, %v2908
    %v2949 = vpack.c.b16 %v2911, %v2909
    %v2950 = vpack.c.b16 %v2914, %v2912
    %v2951 = vpack.c.b16 %v2915, %v2913
    %v2952 = vpack.c.b16 %v2918, %v2916
    %v2953 = vpack.c.b16 %v2919, %v2917
    %v2954 = vpack.c.b16 %v2922, %v2920
    %v2955 = vpack.c.b16 %v2923, %v2921
    %2988 = vmatprep.subr.bf16.mxu0 %v2925
    %2989 = vmatpush1.bf16.msra.mxu0 %v2924
    %2990 = vmatprep.subr.bf16.mxu0 %v2927
    %2991 = vmatpush1.bf16.msra.mxu0 %v2926
    %2992 = vmatprep.subr.bf16.mxu0 %v2929
    %2993 = vmatpush1.bf16.msra.mxu0 %v2928
    %2994 = vmatprep.subr.bf16.mxu0 %v2931
    %2995 = vmatpush1.bf16.msra.mxu0 %v2930
    %2996 = vmatprep.subr.bf16.mxu0 %v2933
    %2997 = vmatpush1.bf16.msra.mxu0 %v2932
    %2998 = vmatprep.subr.bf16.mxu0 %v2935
    %2999 = vmatpush1.bf16.msra.mxu0 %v2934
    %3000 = vmatprep.subr.bf16.mxu0 %v2937
    %3001 = vmatpush1.bf16.msra.mxu0 %v2936
    %3002 = vmatprep.subr.bf16.mxu0 %v2939
    %3003 = vmatpush1.bf16.msra.mxu0 %v2938
    %3004 = vmatprep.subr.bf16.mxu0 %v2941
    %3005 = vmatpush1.bf16.msra.mxu0 %v2940
    %3006 = vmatprep.subr.bf16.mxu0 %v2943
    %3007 = vmatpush1.bf16.msra.mxu0 %v2942
    %3008 = vmatprep.subr.bf16.mxu0 %v2945
    %3009 = vmatpush1.bf16.msra.mxu0 %v2944
    %3010 = vmatprep.subr.bf16.mxu0 %v2947
    %3011 = vmatpush1.bf16.msra.mxu0 %v2946
    %3012 = vmatprep.subr.bf16.mxu0 %v2949
    %3013 = vmatpush1.bf16.msra.mxu0 %v2948
    %3014 = vmatprep.subr.bf16.mxu0 %v2951
    %3015 = vmatpush1.bf16.msra.mxu0 %v2950
    %3016 = vmatprep.subr.bf16.mxu0 %v2953
    %3017 = vmatpush1.bf16.msra.mxu0 %v2952
    %3018 = vmatprep.subr.bf16.mxu0 %v2955
    %3019 = vmatpush1.bf16.msra.mxu0 %v2954
    %3020 = vmatprep.mubr.bf16.mxu0 %v2721
    %3021 = vmatmul.mubr.bf16.gmra.mrb[0].mxu0 %v2720
    %v3022 = vpop.f32.mrb[0].mxu0
    %v3023 = vadd.f32 %v2821, %v3022
    %v3024 = vpop.f32.mrb[0].mxu0
    %v3025 = vadd.f32 %v2825, %v3024
    %v3026 = vpop.f32.mrb[0].mxu0
    %v3027 = vadd.f32 %v2821, %v3026
    %v3028 = vpop.f32.mrb[0].mxu0
    %v3029 = vadd.f32 %v2825, %v3028
    %3030 = vmatprep.mubr.bf16.mxu0 %v2723
    %3031 = vmatmul.mubr.bf16.gmra.mrb[0].mxu0 %v2722
    %v3032 = vpop.f32.mrb[0].mxu0
    %v3033 = vadd.f32 %v2821, %v3032
    %v3034 = vpop.f32.mrb[0].mxu0
    %v3035 = vadd.f32 %v2825, %v3034
    %v3036 = vpop.f32.mrb[0].mxu0
    %v3037 = vadd.f32 %v2821, %v3036
    %v3038 = vpop.f32.mrb[0].mxu0
    %v3039 = vadd.f32 %v2825, %v3038
    %3040 = vmatprep.mubr.bf16.mxu0 %v2725
    %3041 = vmatmul.mubr.bf16.gmra.mrb[0].mxu0 %v2724
    %v3042 = vpop.f32.mrb[0].mxu0
    %v3043 = vadd.f32 %v2821, %v3042
    %v3044 = vpop.f32.mrb[0].mxu0
    %v3045 = vadd.f32 %v2825, %v3044
    %v3046 = vpop.f32.mrb[0].mxu0
    %v3047 = vadd.f32 %v2821, %v3046
    %v3048 = vpop.f32.mrb[0].mxu0
    %v3049 = vadd.f32 %v2825, %v3048
    %3050 = vmatprep.mubr.bf16.mxu0 %v2727
    %3051 = vmatmul.mubr.bf16.gmra.mrb[0].mxu0 %v2726
    %v3052 = vpop.f32.mrb[0].mxu0
    %v3053 = vadd.f32 %v2821, %v3052
    %v3054 = vpop.f32.mrb[0].mxu0
    %v3055 = vadd.f32 %v2825, %v3054
    %v3056 = vpop.f32.mrb[0].mxu0
    %v3057 = vadd.f32 %v2821, %v3056
    %v3058 = vpop.f32.mrb[0].mxu0
    %v3059 = vadd.f32 %v2825, %v3058
    %3060 = vmatprep.mubr.bf16.mxu0 %v2729
    %3061 = vmatmul.mubr.bf16.gmra.mrb[0].mxu0 %v2728
    %v3062 = vpop.f32.mrb[0].mxu0
    %v3063 = vadd.f32 %v2821, %v3062
    %v3064 = vpop.f32.mrb[0].mxu0
    %v3065 = vadd.f32 %v2825, %v3064
    %v3066 = vpop.f32.mrb[0].mxu0
    %v3067 = vadd.f32 %v2821, %v3066
    %v3068 = vpop.f32.mrb[0].mxu0
    %v3069 = vadd.f32 %v2825, %v3068
    %3070 = vmatprep.mubr.bf16.mxu0 %v2731
    %3071 = vmatmul.mubr.bf16.gmra.mrb[0].mxu0 %v2730
    %v3072 = vpop.f32.mrb[0].mxu0
    %v3073 = vadd.f32 %v2821, %v3072
    %v3074 = vpop.f32.mrb[0].mxu0
    %v3075 = vadd.f32 %v2825, %v3074
    %v3076 = vpop.f32.mrb[0].mxu0
    %v3077 = vadd.f32 %v2821, %v3076
    %v3078 = vpop.f32.mrb[0].mxu0
    %v3079 = vadd.f32 %v2825, %v3078
    %3080 = vmatprep.mubr.bf16.mxu0 %v2733
    %3081 = vmatmul.mubr.bf16.gmra.mrb[0].mxu0 %v2732
    %v3082 = vpop.f32.mrb[0].mxu0
    %v3083 = vadd.f32 %v2821, %v3082
    %v3084 = vpop.f32.mrb[0].mxu0
    %v3085 = vadd.f32 %v2825, %v3084
    %v3086 = vpop.f32.mrb[0].mxu0
    %v3087 = vadd.f32 %v2821, %v3086
    %v3088 = vpop.f32.mrb[0].mxu0
    %v3089 = vadd.f32 %v2825, %v3088
    %3090 = vmatprep.mubr.bf16.mxu0 %v2735
    %3091 = vmatmul.mubr.bf16.gmra.mrb[0].mxu0 %v2734
    %v3092 = vpop.f32.mrb[0].mxu0
    %v3093 = vadd.f32 %v2821, %v3092
    %v3094 = vpop.f32.mrb[0].mxu0
    %v3095 = vadd.f32 %v2825, %v3094
    %v3096 = vpop.f32.mrb[0].mxu0
    %v3097 = vadd.f32 %v2821, %v3096
    %v3098 = vpop.f32.mrb[0].mxu0
    %v3099 = vadd.f32 %v2825, %v3098
    %3100 = vmatprep.mubr.bf16.mxu0 %v2737
    %3101 = vmatmul.mubr.bf16.gmra.mrb[0].mxu0 %v2736
    %v3102 = vpop.f32.mrb[0].mxu0
    %v3103 = vadd.f32 %v2821, %v3102
    %v3104 = vpop.f32.mrb[0].mxu0
    %v3105 = vadd.f32 %v2825, %v3104
    %v3106 = vpop.f32.mrb[0].mxu0
    %v3107 = vadd.f32 %v2821, %v3106
    %v3108 = vpop.f32.mrb[0].mxu0
    %v3109 = vadd.f32 %v2825, %v3108
    %3110 = vmatprep.mubr.bf16.mxu0 %v2739
    %3111 = vmatmul.mubr.bf16.gmra.mrb[0].mxu0 %v2738
    %v3112 = vpop.f32.mrb[0].mxu0
    %v3113 = vadd.f32 %v2821, %v3112
    %v3114 = vpop.f32.mrb[0].mxu0
    %v3115 = vadd.f32 %v2825, %v3114
    %v3116 = vpop.f32.mrb[0].mxu0
    %v3117 = vadd.f32 %v2821, %v3116
    %v3118 = vpop.f32.mrb[0].mxu0
    %v3119 = vadd.f32 %v2825, %v3118
    %3120 = vmatprep.mubr.bf16.mxu0 %v2741
    %3121 = vmatmul.mubr.bf16.gmra.mrb[0].mxu0 %v2740
    %v3122 = vpop.f32.mrb[0].mxu0
    %v3123 = vadd.f32 %v2821, %v3122
    %v3124 = vpop.f32.mrb[0].mxu0
    %v3125 = vadd.f32 %v2825, %v3124
    %v3126 = vpop.f32.mrb[0].mxu0
    %v3127 = vadd.f32 %v2821, %v3126
    %v3128 = vpop.f32.mrb[0].mxu0
    %v3129 = vadd.f32 %v2825, %v3128
    %3130 = vmatprep.mubr.bf16.mxu0 %v2743
    %3131 = vmatmul.mubr.bf16.gmra.mrb[0].mxu0 %v2742
    %v3132 = vpop.f32.mrb[0].mxu0
    %v3133 = vadd.f32 %v2821, %v3132
    %v3134 = vpop.f32.mrb[0].mxu0
    %v3135 = vadd.f32 %v2825, %v3134
    %v3136 = vpop.f32.mrb[0].mxu0
    %v3137 = vadd.f32 %v2821, %v3136
    %v3138 = vpop.f32.mrb[0].mxu0
    %v3139 = vadd.f32 %v2825, %v3138
    %3140 = vmatprep.mubr.bf16.mxu0 %v2745
    %3141 = vmatmul.mubr.bf16.gmra.mrb[0].mxu0 %v2744
    %v3142 = vpop.f32.mrb[0].mxu0
    %v3143 = vadd.f32 %v2821, %v3142
    %v3144 = vpop.f32.mrb[0].mxu0
    %v3145 = vadd.f32 %v2825, %v3144
    %v3146 = vpop.f32.mrb[0].mxu0
    %v3147 = vadd.f32 %v2821, %v3146
    %v3148 = vpop.f32.mrb[0].mxu0
    %v3149 = vadd.f32 %v2825, %v3148
    %3150 = vmatprep.mubr.bf16.mxu0 %v2747
    %3151 = vmatmul.mubr.bf16.gmra.mrb[0].mxu0 %v2746
    %v3152 = vpop.f32.mrb[0].mxu0
    %v3153 = vadd.f32 %v2821, %v3152
    %v3154 = vpop.f32.mrb[0].mxu0
    %v3155 = vadd.f32 %v2825, %v3154
    %v3156 = vpop.f32.mrb[0].mxu0
    %v3157 = vadd.f32 %v2821, %v3156
    %v3158 = vpop.f32.mrb[0].mxu0
    %v3159 = vadd.f32 %v2825, %v3158
    %3160 = vmatprep.mubr.bf16.mxu0 %v2749
    %3161 = vmatmul.mubr.bf16.gmra.mrb[0].mxu0 %v2748
    %v3162 = vpop.f32.mrb[0].mxu0
    %v3163 = vadd.f32 %v2821, %v3162
    %v3164 = vpop.f32.mrb[0].mxu0
    %v3165 = vadd.f32 %v2825, %v3164
    %v3166 = vpop.f32.mrb[0].mxu0
    %v3167 = vadd.f32 %v2821, %v3166
    %v3168 = vpop.f32.mrb[0].mxu0
    %v3169 = vadd.f32 %v2825, %v3168
    %3170 = vmatprep.mubr.bf16.mxu0 %v2751
    %3171 = vmatmul.mubr.bf16.gmra.mrb[0].mxu0 %v2750
    %v3172 = vpop.f32.mrb[0].mxu0
    %v3173 = vadd.f32 %v2821, %v3172
    %v3174 = vpop.f32.mrb[0].mxu0
    %v3175 = vadd.f32 %v2825, %v3174
    %v3176 = vpop.f32.mrb[0].mxu0
    %v3177 = vadd.f32 %v2821, %v3176
    %v3178 = vpop.f32.mrb[0].mxu0
    %v3179 = vadd.f32 %v2825, %v3178
    %3180 = vmatprep.mubr.bf16.mxu0 %v2753
    %3181 = vmatmul.mubr.bf16.gmra.mrb[0].mxu0 %v2752
    %v3182 = vpop.f32.mrb[0].mxu0
    %v3183 = vadd.f32 %v2821, %v3182
    %v3184 = vpop.f32.mrb[0].mxu0
    %v3185 = vadd.f32 %v2825, %v3184
    %v3186 = vpop.f32.mrb[0].mxu0
    %v3187 = vadd.f32 %v2821, %v3186
    %v3188 = vpop.f32.mrb[0].mxu0
    %v3189 = vadd.f32 %v2825, %v3188
    %3190 = vmatprep.mubr.bf16.mxu0 %v2755
    %3191 = vmatmul.mubr.bf16.gmra.mrb[0].mxu0 %v2754
    %v3192 = vpop.f32.mrb[0].mxu0
    %v3193 = vadd.f32 %v2821, %v3192
    %v3194 = vpop.f32.mrb[0].mxu0
    %v3195 = vadd.f32 %v2825, %v3194
    %v3196 = vpop.f32.mrb[0].mxu0
    %v3197 = vadd.f32 %v2821, %v3196
    %v3198 = vpop.f32.mrb[0].mxu0
    %v3199 = vadd.f32 %v2825, %v3198
    %3200 = vmatprep.mubr.bf16.mxu0 %v2757
    %3201 = vmatmul.mubr.bf16.gmra.mrb[0].mxu0 %v2756
    %v3202 = vpop.f32.mrb[0].mxu0
    %v3203 = vadd.f32 %v2821, %v3202
    %v3204 = vpop.f32.mrb[0].mxu0
    %v3205 = vadd.f32 %v2825, %v3204
    %v3206 = vpop.f32.mrb[0].mxu0
    %v3207 = vadd.f32 %v2821, %v3206
    %v3208 = vpop.f32.mrb[0].mxu0
    %v3209 = vadd.f32 %v2825, %v3208
    %3210 = vmatprep.mubr.bf16.mxu0 %v2759
    %3211 = vmatmul.mubr.bf16.gmra.mrb[0].mxu0 %v2758
    %v3212 = vpop.f32.mrb[0].mxu0
    %v3213 = vadd.f32 %v2821, %v3212
    %v3214 = vpop.f32.mrb[0].mxu0
    %v3215 = vadd.f32 %v2825, %v3214
    %v3216 = vpop.f32.mrb[0].mxu0
    %v3217 = vadd.f32 %v2821, %v3216
    %v3218 = vpop.f32.mrb[0].mxu0
    %v3219 = vadd.f32 %v2825, %v3218
    %3220 = vmatprep.mubr.bf16.mxu0 %v2761
    %3221 = vmatmul.mubr.bf16.gmra.mrb[0].mxu0 %v2760
    %v3222 = vpop.f32.mrb[0].mxu0
    %v3223 = vadd.f32 %v2821, %v3222
    %v3224 = vpop.f32.mrb[0].mxu0
    %v3225 = vadd.f32 %v2825, %v3224
    %v3226 = vpop.f32.mrb[0].mxu0
    %v3227 = vadd.f32 %v2821, %v3226
    %v3228 = vpop.f32.mrb[0].mxu0
    %v3229 = vadd.f32 %v2825, %v3228
    %3230 = vmatprep.mubr.bf16.mxu0 %v2763
    %3231 = vmatmul.mubr.bf16.gmra.mrb[0].mxu0 %v2762
    %v3232 = vpop.f32.mrb[0].mxu0
    %v3233 = vadd.f32 %v2821, %v3232
    %v3234 = vpop.f32.mrb[0].mxu0
    %v3235 = vadd.f32 %v2825, %v3234
    %v3236 = vpop.f32.mrb[0].mxu0
    %v3237 = vadd.f32 %v2821, %v3236
    %v3238 = vpop.f32.mrb[0].mxu0
    %v3239 = vadd.f32 %v2825, %v3238
    %3240 = vmatprep.mubr.bf16.mxu0 %v2765
    %3241 = vmatmul.mubr.bf16.gmra.mrb[0].mxu0 %v2764
    %v3242 = vpop.f32.mrb[0].mxu0
    %v3243 = vadd.f32 %v2821, %v3242
    %v3244 = vpop.f32.mrb[0].mxu0
    %v3245 = vadd.f32 %v2825, %v3244
    %v3246 = vpop.f32.mrb[0].mxu0
    %v3247 = vadd.f32 %v2821, %v3246
    %v3248 = vpop.f32.mrb[0].mxu0
    %v3249 = vadd.f32 %v2825, %v3248
    %3250 = vmatprep.mubr.bf16.mxu0 %v2767
    %3251 = vmatmul.mubr.bf16.gmra.mrb[0].mxu0 %v2766
    %v3252 = vpop.f32.mrb[0].mxu0
    %v3253 = vadd.f32 %v2821, %v3252
    %v3254 = vpop.f32.mrb[0].mxu0
    %v3255 = vadd.f32 %v2825, %v3254
    %v3256 = vpop.f32.mrb[0].mxu0
    %v3257 = vadd.f32 %v2821, %v3256
    %v3258 = vpop.f32.mrb[0].mxu0
    %v3259 = vadd.f32 %v2825, %v3258
    %3260 = vmatprep.mubr.bf16.mxu0 %v2769
    %3261 = vmatmul.mubr.bf16.gmra.mrb[0].mxu0 %v2768
    %v3262 = vpop.f32.mrb[0].mxu0
    %v3263 = vadd.f32 %v2821, %v3262
    %v3264 = vpop.f32.mrb[0].mxu0
    %v3265 = vadd.f32 %v2825, %v3264
    %v3266 = vpop.f32.mrb[0].mxu0
    %v3267 = vadd.f32 %v2821, %v3266
    %v3268 = vpop.f32.mrb[0].mxu0
    %v3269 = vadd.f32 %v2825, %v3268
    %3270 = vmatprep.mubr.bf16.mxu0 %v2771
    %3271 = vmatmul.mubr.bf16.gmra.mrb[0].mxu0 %v2770
    %v3272 = vpop.f32.mrb[0].mxu0
    %v3273 = vadd.f32 %v2821, %v3272
    %v3274 = vpop.f32.mrb[0].mxu0
    %v3275 = vadd.f32 %v2825, %v3274
    %v3276 = vpop.f32.mrb[0].mxu0
    %v3277 = vadd.f32 %v2821, %v3276
    %v3278 = vpop.f32.mrb[0].mxu0
    %v3279 = vadd.f32 %v2825, %v3278
    %3280 = vmatprep.mubr.bf16.mxu0 %v2773
    %3281 = vmatmul.mubr.bf16.gmra.mrb[0].mxu0 %v2772
    %v3282 = vpop.f32.mrb[0].mxu0
    %v3283 = vadd.f32 %v2821, %v3282
    %v3284 = vpop.f32.mrb[0].mxu0
    %v3285 = vadd.f32 %v2825, %v3284
    %v3286 = vpop.f32.mrb[0].mxu0
    %v3287 = vadd.f32 %v2821, %v3286
    %v3288 = vpop.f32.mrb[0].mxu0
    %v3289 = vadd.f32 %v2825, %v3288
    %3290 = vmatprep.mubr.bf16.mxu0 %v2775
    %3291 = vmatmul.mubr.bf16.gmra.mrb[0].mxu0 %v2774
    %v3292 = vpop.f32.mrb[0].mxu0
    %v3293 = vadd.f32 %v2821, %v3292
    %v3294 = vpop.f32.mrb[0].mxu0
    %v3295 = vadd.f32 %v2825, %v3294
    %v3296 = vpop.f32.mrb[0].mxu0
    %v3297 = vadd.f32 %v2821, %v3296
    %v3298 = vpop.f32.mrb[0].mxu0
    %v3299 = vadd.f32 %v2825, %v3298
    %3300 = vmatprep.mubr.bf16.mxu0 %v2777
    %3301 = vmatmul.mubr.bf16.gmra.mrb[0].mxu0 %v2776
    %v3302 = vpop.f32.mrb[0].mxu0
    %v3303 = vadd.f32 %v2821, %v3302
    %v3304 = vpop.f32.mrb[0].mxu0
    %v3305 = vadd.f32 %v2825, %v3304
    %v3306 = vpop.f32.mrb[0].mxu0
    %v3307 = vadd.f32 %v2821, %v3306
    %v3308 = vpop.f32.mrb[0].mxu0
    %v3309 = vadd.f32 %v2825, %v3308
    %3310 = vmatprep.mubr.bf16.mxu0 %v2779
    %3311 = vmatmul.mubr.bf16.gmra.mrb[0].mxu0 %v2778
    %v3312 = vpop.f32.mrb[0].mxu0
    %v3313 = vadd.f32 %v2821, %v3312
    %v3314 = vpop.f32.mrb[0].mxu0
    %v3315 = vadd.f32 %v2825, %v3314
    %v3316 = vpop.f32.mrb[0].mxu0
    %v3317 = vadd.f32 %v2821, %v3316
    %v3318 = vpop.f32.mrb[0].mxu0
    %v3319 = vadd.f32 %v2825, %v3318
    %3320 = vmatprep.mubr.bf16.mxu0 %v2781
    %3321 = vmatmul.mubr.bf16.gmra.mrb[0].mxu0 %v2780
    %v3322 = vpop.f32.mrb[0].mxu0
    %v3323 = vadd.f32 %v2821, %v3322
    %v3324 = vpop.f32.mrb[0].mxu0
    %v3325 = vadd.f32 %v2825, %v3324
    %v3326 = vpop.f32.mrb[0].mxu0
    %v3327 = vadd.f32 %v2821, %v3326
    %v3328 = vpop.f32.mrb[0].mxu0
    %v3329 = vadd.f32 %v2825, %v3328
    %3330 = vmatprep.mubr.bf16.mxu0 %v2783
    %3331 = vmatmul.mubr.bf16.gmra.mrb[0].mxu0 %v2782
    %v3332 = vpop.f32.mrb[0].mxu0
    %v3333 = vadd.f32 %v2821, %v3332
    %v3334 = vpop.f32.mrb[0].mxu0
    %v3335 = vadd.f32 %v2825, %v3334
    %v3336 = vpop.f32.mrb[0].mxu0
    %v3337 = vadd.f32 %v2821, %v3336
    %v3338 = vpop.f32.mrb[0].mxu0
    %v3339 = vadd.f32 %v2825, %v3338
    %3340 = vdwg.mxu0
    %v3341 = vpack.c.bf16 %v3027, %v3023
    %v3342 = vpack.c.bf16 %v3037, %v3033
    %v3343 = vpack.c.bf16 %v3047, %v3043
    %v3344 = vpack.c.bf16 %v3057, %v3053
    %v3345 = vpack.c.bf16 %v3067, %v3063
    %v3346 = vpack.c.bf16 %v3077, %v3073
    %v3347 = vpack.c.bf16 %v3087, %v3083
    %v3348 = vpack.c.bf16 %v3097, %v3093
    %v3349 = vpack.c.bf16 %v3107, %v3103
    %v3350 = vpack.c.bf16 %v3117, %v3113
    %v3351 = vpack.c.bf16 %v3127, %v3123
    %v3352 = vpack.c.bf16 %v3137, %v3133
    %v3353 = vpack.c.bf16 %v3147, %v3143
    %v3354 = vpack.c.bf16 %v3157, %v3153
    %v3355 = vpack.c.bf16 %v3167, %v3163
    %v3356 = vpack.c.bf16 %v3177, %v3173
    %v3357 = vpack.c.bf16 %v3187, %v3183
    %v3358 = vpack.c.bf16 %v3197, %v3193
    %v3359 = vpack.c.bf16 %v3207, %v3203
    %v3360 = vpack.c.bf16 %v3217, %v3213
    %v3361 = vpack.c.bf16 %v3227, %v3223
    %v3362 = vpack.c.bf16 %v3237, %v3233
    %v3363 = vpack.c.bf16 %v3247, %v3243
    %v3364 = vpack.c.bf16 %v3257, %v3253
    %v3365 = vpack.c.bf16 %v3267, %v3263
    %v3366 = vpack.c.bf16 %v3277, %v3273
    %v3367 = vpack.c.bf16 %v3287, %v3283
    %v3368 = vpack.c.bf16 %v3297, %v3293
    %v3369 = vpack.c.bf16 %v3307, %v3303
    %v3370 = vpack.c.bf16 %v3317, %v3313
    %v3371 = vpack.c.bf16 %v3327, %v3323
    %v3372 = vpack.c.bf16 %v3337, %v3333
    %v3373 = vld [vmem:[#allocation13] sm:$0xff]
    %v3374 = vld [vmem:[#allocation13 + $0x8] sm:$0xff]
    %v3375 = vld [vmem:[#allocation13 + $0x10] sm:$0xff]
    %v3376 = vld [vmem:[#allocation13 + $0x18] sm:$0xff]
    %v3377 = vld [vmem:[#allocation13 + $0x20] sm:$0xff]
    %v3378 = vld [vmem:[#allocation13 + $0x28] sm:$0xff]
    %v3379 = vld [vmem:[#allocation13 + $0x30] sm:$0xff]
    %v3380 = vld [vmem:[#allocation13 + $0x38] sm:$0xff]
    %v3381 = vld [vmem:[#allocation13 + $0x40] sm:$0xff]
    %v3382 = vld [vmem:[#allocation13 + $0x48] sm:$0xff]
    %v3383 = vld [vmem:[#allocation13 + $0x50] sm:$0xff]
    %v3384 = vld [vmem:[#allocation13 + $0x58] sm:$0xff]
    %v3385 = vld [vmem:[#allocation13 + $0x60] sm:$0xff]
    %v3386 = vld [vmem:[#allocation13 + $0x68] sm:$0xff]
    %v3387 = vld [vmem:[#allocation13 + $0x70] sm:$0xff]
    %v3388 = vld [vmem:[#allocation13 + $0x78] sm:$0xff]
    %v3389 = vld [vmem:[%s11] sm:$0x3]
    %v3391 = vlaneseq
    %v3392 = vshrl.u32 %v3391, 7
    %v3393 = vsub.s32 0, %v3392
    %v3394 = vrot.slane %v3389, %v3393
    %v3395 = vlaneseq
    %v3396 = vshrl.u32 %v3395, 7
    %v3397 = vsub.s32 1, %v3396
    %v3398 = vrot.slane %v3389, %v3397
    %v3417 = vunpack.c.l.b16 %v3373
    %v3418 = vunpack.c.h.b16 %v3373
    %v3419 = vunpack.c.l.b16 %v3374
    %v3420 = vunpack.c.h.b16 %v3374
    %v3421 = vunpack.c.l.b16 %v3375
    %v3422 = vunpack.c.h.b16 %v3375
    %v3423 = vunpack.c.l.b16 %v3376
    %v3424 = vunpack.c.h.b16 %v3376
    %v3425 = vunpack.c.l.b16 %v3377
    %v3426 = vunpack.c.h.b16 %v3377
    %v3427 = vunpack.c.l.b16 %v3378
    %v3428 = vunpack.c.h.b16 %v3378
    %v3429 = vunpack.c.l.b16 %v3379
    %v3430 = vunpack.c.h.b16 %v3379
    %v3431 = vunpack.c.l.b16 %v3380
    %v3432 = vunpack.c.h.b16 %v3380
    %v3433 = vunpack.c.l.b16 %v3381
    %v3434 = vunpack.c.h.b16 %v3381
    %v3435 = vunpack.c.l.b16 %v3382
    %v3436 = vunpack.c.h.b16 %v3382
    %v3437 = vunpack.c.l.b16 %v3383
    %v3438 = vunpack.c.h.b16 %v3383
    %v3439 = vunpack.c.l.b16 %v3384
    %v3440 = vunpack.c.h.b16 %v3384
    %v3441 = vunpack.c.l.b16 %v3385
    %v3442 = vunpack.c.h.b16 %v3385
    %v3443 = vunpack.c.l.b16 %v3386
    %v3444 = vunpack.c.h.b16 %v3386
    %v3445 = vunpack.c.l.b16 %v3387
    %v3446 = vunpack.c.h.b16 %v3387
    %v3447 = vunpack.c.l.b16 %v3388
    %v3448 = vunpack.c.h.b16 %v3388
    %v3449 = vpack.c.b16 %v3419, %v3417
    %v3450 = vpack.c.b16 %v3420, %v3418
    %v3451 = vpack.c.b16 %v3423, %v3421
    %v3452 = vpack.c.b16 %v3424, %v3422
    %v3453 = vpack.c.b16 %v3427, %v3425
    %v3454 = vpack.c.b16 %v3428, %v3426
    %v3455 = vpack.c.b16 %v3431, %v3429
    %v3456 = vpack.c.b16 %v3432, %v3430
    %v3457 = vpack.c.b16 %v3435, %v3433
    %v3458 = vpack.c.b16 %v3436, %v3434
    %v3459 = vpack.c.b16 %v3439, %v3437
    %v3460 = vpack.c.b16 %v3440, %v3438
    %v3461 = vpack.c.b16 %v3443, %v3441
    %v3462 = vpack.c.b16 %v3444, %v3442
    %v3463 = vpack.c.b16 %v3447, %v3445
    %v3464 = vpack.c.b16 %v3448, %v3446
    %3481 = vmatprep.subr.bf16.mxu0 %v3450
    %3482 = vmatpush1.bf16.msra.mxu0 %v3449
    %3483 = vmatprep.subr.bf16.mxu0 %v3452
    %3484 = vmatpush1.bf16.msra.mxu0 %v3451
    %3485 = vmatprep.subr.bf16.mxu0 %v3454
    %3486 = vmatpush1.bf16.msra.mxu0 %v3453
    %3487 = vmatprep.subr.bf16.mxu0 %v3456
    %3488 = vmatpush1.bf16.msra.mxu0 %v3455
    %3489 = vmatprep.subr.bf16.mxu0 %v3458
    %3490 = vmatpush1.bf16.msra.mxu0 %v3457
    %3491 = vmatprep.subr.bf16.mxu0 %v3460
    %3492 = vmatpush1.bf16.msra.mxu0 %v3459
    %3493 = vmatprep.subr.bf16.mxu0 %v3462
    %3494 = vmatpush1.bf16.msra.mxu0 %v3461
    %3495 = vmatprep.subr.bf16.mxu0 %v3464
    %3496 = vmatpush1.bf16.msra.mxu0 %v3463
    %3497 = vmatprep.subr.bf16.mxu0 0
    %3498 = vmatpush1.bf16.msra.mxu0 0
    %3499 = vmatprep.subr.bf16.mxu0 0
    %3500 = vmatpush1.bf16.msra.mxu0 0
    %3501 = vmatprep.subr.bf16.mxu0 0
    %3502 = vmatpush1.bf16.msra.mxu0 0
    %3503 = vmatprep.subr.bf16.mxu0 0
    %3504 = vmatpush1.bf16.msra.mxu0 0
    %3505 = vmatprep.subr.bf16.mxu0 0
    %3506 = vmatpush1.bf16.msra.mxu0 0
    %3507 = vmatprep.subr.bf16.mxu0 0
    %3508 = vmatpush1.bf16.msra.mxu0 0
    %3509 = vmatprep.subr.bf16.mxu0 0
    %3510 = vmatpush1.bf16.msra.mxu0 0
    %3511 = vmatprep.subr.bf16.mxu0 0
    %3512 = vmatpush1.bf16.msra.mxu0 0
    %3513 = vmatprep.mubr.bf16.mxu0 0
    %3514 = vmatmul.mubr.bf16.gmra.mrb[0].mxu0 %v3341
    %v3515 = vpop.f32.mrb[0].mxu0
    %v3516 = vadd.f32 %v3394, %v3515
    %v3517 = vpop.f32.mrb[0].mxu0
    %v3518 = vadd.f32 %v3398, %v3517
    %v3519 = vpop.f32.mrb[0].mxu0
    %v3520 = vadd.f32 %v3394, %v3519
    %v3521 = vpop.f32.mrb[0].mxu0
    %v3522 = vadd.f32 %v3398, %v3521
    %3523 = vmatprep.mubr.bf16.mxu0 0
    %3524 = vmatmul.mubr.bf16.gmra.mrb[0].mxu0 %v3342
    %v3525 = vpop.f32.mrb[0].mxu0
    %v3526 = vadd.f32 %v3394, %v3525
    %v3527 = vpop.f32.mrb[0].mxu0
    %v3528 = vadd.f32 %v3398, %v3527
    %v3529 = vpop.f32.mrb[0].mxu0
    %v3530 = vadd.f32 %v3394, %v3529
    %v3531 = vpop.f32.mrb[0].mxu0
    %v3532 = vadd.f32 %v3398, %v3531
    %3533 = vmatprep.mubr.bf16.mxu0 0
    %3534 = vmatmul.mubr.bf16.gmra.mrb[0].mxu0 %v3343
    %v3535 = vpop.f32.mrb[0].mxu0
    %v3536 = vadd.f32 %v3394, %v3535
    %v3537 = vpop.f32.mrb[0].mxu0
    %v3538 = vadd.f32 %v3398, %v3537
    %v3539 = vpop.f32.mrb[0].mxu0
    %v3540 = vadd.f32 %v3394, %v3539
    %v3541 = vpop.f32.mrb[0].mxu0
    %v3542 = vadd.f32 %v3398, %v3541
    %3543 = vmatprep.mubr.bf16.mxu0 0
    %3544 = vmatmul.mubr.bf16.gmra.mrb[0].mxu0 %v3344
    %v3545 = vpop.f32.mrb[0].mxu0
    %v3546 = vadd.f32 %v3394, %v3545
    %v3547 = vpop.f32.mrb[0].mxu0
    %v3548 = vadd.f32 %v3398, %v3547
    %v3549 = vpop.f32.mrb[0].mxu0
    %v3550 = vadd.f32 %v3394, %v3549
    %v3551 = vpop.f32.mrb[0].mxu0
    %v3552 = vadd.f32 %v3398, %v3551
    %3553 = vmatprep.mubr.bf16.mxu0 0
    %3554 = vmatmul.mubr.bf16.gmra.mrb[0].mxu0 %v3345
    %v3555 = vpop.f32.mrb[0].mxu0
    %v3556 = vadd.f32 %v3394, %v3555
    %v3557 = vpop.f32.mrb[0].mxu0
    %v3558 = vadd.f32 %v3398, %v3557
    %v3559 = vpop.f32.mrb[0].mxu0
    %v3560 = vadd.f32 %v3394, %v3559
    %v3561 = vpop.f32.mrb[0].mxu0
    %v3562 = vadd.f32 %v3398, %v3561
    %3563 = vmatprep.mubr.bf16.mxu0 0
    %3564 = vmatmul.mubr.bf16.gmra.mrb[0].mxu0 %v3346
    %v3565 = vpop.f32.mrb[0].mxu0
    %v3566 = vadd.f32 %v3394, %v3565
    %v3567 = vpop.f32.mrb[0].mxu0
    %v3568 = vadd.f32 %v3398, %v3567
    %v3569 = vpop.f32.mrb[0].mxu0
    %v3570 = vadd.f32 %v3394, %v3569
    %v3571 = vpop.f32.mrb[0].mxu0
    %v3572 = vadd.f32 %v3398, %v3571
    %3573 = vmatprep.mubr.bf16.mxu0 0
    %3574 = vmatmul.mubr.bf16.gmra.mrb[0].mxu0 %v3347
    %v3575 = vpop.f32.mrb[0].mxu0
    %v3576 = vadd.f32 %v3394, %v3575
    %v3577 = vpop.f32.mrb[0].mxu0
    %v3578 = vadd.f32 %v3398, %v3577
    %v3579 = vpop.f32.mrb[0].mxu0
    %v3580 = vadd.f32 %v3394, %v3579
    %v3581 = vpop.f32.mrb[0].mxu0
    %v3582 = vadd.f32 %v3398, %v3581
    %3583 = vmatprep.mubr.bf16.mxu0 0
    %3584 = vmatmul.mubr.bf16.gmra.mrb[0].mxu0 %v3348
    %v3585 = vpop.f32.mrb[0].mxu0
    %v3586 = vadd.f32 %v3394, %v3585
    %v3587 = vpop.f32.mrb[0].mxu0
    %v3588 = vadd.f32 %v3398, %v3587
    %v3589 = vpop.f32.mrb[0].mxu0
    %v3590 = vadd.f32 %v3394, %v3589
    %v3591 = vpop.f32.mrb[0].mxu0
    %v3592 = vadd.f32 %v3398, %v3591
    %3593 = vmatprep.mubr.bf16.mxu0 0
    %3594 = vmatmul.mubr.bf16.gmra.mrb[0].mxu0 %v3349
    %v3595 = vpop.f32.mrb[0].mxu0
    %v3596 = vadd.f32 %v3394, %v3595
    %v3597 = vpop.f32.mrb[0].mxu0
    %v3598 = vadd.f32 %v3398, %v3597
    %v3599 = vpop.f32.mrb[0].mxu0
    %v3600 = vadd.f32 %v3394, %v3599
    %v3601 = vpop.f32.mrb[0].mxu0
    %v3602 = vadd.f32 %v3398, %v3601
    %3603 = vmatprep.mubr.bf16.mxu0 0
    %3604 = vmatmul.mubr.bf16.gmra.mrb[0].mxu0 %v3350
    %v3605 = vpop.f32.mrb[0].mxu0
    %v3606 = vadd.f32 %v3394, %v3605
    %v3607 = vpop.f32.mrb[0].mxu0
    %v3608 = vadd.f32 %v3398, %v3607
    %v3609 = vpop.f32.mrb[0].mxu0
    %v3610 = vadd.f32 %v3394, %v3609
    %v3611 = vpop.f32.mrb[0].mxu0
    %v3612 = vadd.f32 %v3398, %v3611
    %3613 = vmatprep.mubr.bf16.mxu0 0
    %3614 = vmatmul.mubr.bf16.gmra.mrb[0].mxu0 %v3351
    %v3615 = vpop.f32.mrb[0].mxu0
    %v3616 = vadd.f32 %v3394, %v3615
    %v3617 = vpop.f32.mrb[0].mxu0
    %v3618 = vadd.f32 %v3398, %v3617
    %v3619 = vpop.f32.mrb[0].mxu0
    %v3620 = vadd.f32 %v3394, %v3619
    %v3621 = vpop.f32.mrb[0].mxu0
    %v3622 = vadd.f32 %v3398, %v3621
    %3623 = vmatprep.mubr.bf16.mxu0 0
    %3624 = vmatmul.mubr.bf16.gmra.mrb[0].mxu0 %v3352
    %v3625 = vpop.f32.mrb[0].mxu0
    %v3626 = vadd.f32 %v3394, %v3625
    %v3627 = vpop.f32.mrb[0].mxu0
    %v3628 = vadd.f32 %v3398, %v3627
    %v3629 = vpop.f32.mrb[0].mxu0
    %v3630 = vadd.f32 %v3394, %v3629
    %v3631 = vpop.f32.mrb[0].mxu0
    %v3632 = vadd.f32 %v3398, %v3631
    %3633 = vmatprep.mubr.bf16.mxu0 0
    %3634 = vmatmul.mubr.bf16.gmra.mrb[0].mxu0 %v3353
    %v3635 = vpop.f32.mrb[0].mxu0
    %v3636 = vadd.f32 %v3394, %v3635
    %v3637 = vpop.f32.mrb[0].mxu0
    %v3638 = vadd.f32 %v3398, %v3637
    %v3639 = vpop.f32.mrb[0].mxu0
    %v3640 = vadd.f32 %v3394, %v3639
    %v3641 = vpop.f32.mrb[0].mxu0
    %v3642 = vadd.f32 %v3398, %v3641
    %3643 = vmatprep.mubr.bf16.mxu0 0
    %3644 = vmatmul.mubr.bf16.gmra.mrb[0].mxu0 %v3354
    %v3645 = vpop.f32.mrb[0].mxu0
    %v3646 = vadd.f32 %v3394, %v3645
    %v3647 = vpop.f32.mrb[0].mxu0
    %v3648 = vadd.f32 %v3398, %v3647
    %v3649 = vpop.f32.mrb[0].mxu0
    %v3650 = vadd.f32 %v3394, %v3649
    %v3651 = vpop.f32.mrb[0].mxu0
    %v3652 = vadd.f32 %v3398, %v3651
    %3653 = vmatprep.mubr.bf16.mxu0 0
    %3654 = vmatmul.mubr.bf16.gmra.mrb[0].mxu0 %v3355
    %v3655 = vpop.f32.mrb[0].mxu0
    %v3656 = vadd.f32 %v3394, %v3655
    %v3657 = vpop.f32.mrb[0].mxu0
    %v3658 = vadd.f32 %v3398, %v3657
    %v3659 = vpop.f32.mrb[0].mxu0
    %v3660 = vadd.f32 %v3394, %v3659
    %v3661 = vpop.f32.mrb[0].mxu0
    %v3662 = vadd.f32 %v3398, %v3661
    %3663 = vmatprep.mubr.bf16.mxu0 0
    %3664 = vmatmul.mubr.bf16.gmra.mrb[0].mxu0 %v3356
    %v3665 = vpop.f32.mrb[0].mxu0
    %v3666 = vadd.f32 %v3394, %v3665
    %v3667 = vpop.f32.mrb[0].mxu0
    %v3668 = vadd.f32 %v3398, %v3667
    %v3669 = vpop.f32.mrb[0].mxu0
    %v3670 = vadd.f32 %v3394, %v3669
    %v3671 = vpop.f32.mrb[0].mxu0
    %v3672 = vadd.f32 %v3398, %v3671
    %3673 = vmatprep.mubr.bf16.mxu0 0
    %3674 = vmatmul.mubr.bf16.gmra.mrb[0].mxu0 %v3357
    %v3675 = vpop.f32.mrb[0].mxu0
    %v3676 = vadd.f32 %v3394, %v3675
    %v3677 = vpop.f32.mrb[0].mxu0
    %v3678 = vadd.f32 %v3398, %v3677
    %v3679 = vpop.f32.mrb[0].mxu0
    %v3680 = vadd.f32 %v3394, %v3679
    %v3681 = vpop.f32.mrb[0].mxu0
    %v3682 = vadd.f32 %v3398, %v3681
    %3683 = vmatprep.mubr.bf16.mxu0 0
    %3684 = vmatmul.mubr.bf16.gmra.mrb[0].mxu0 %v3358
    %v3685 = vpop.f32.mrb[0].mxu0
    %v3686 = vadd.f32 %v3394, %v3685
    %v3687 = vpop.f32.mrb[0].mxu0
    %v3688 = vadd.f32 %v3398, %v3687
    %v3689 = vpop.f32.mrb[0].mxu0
    %v3690 = vadd.f32 %v3394, %v3689
    %v3691 = vpop.f32.mrb[0].mxu0
    %v3692 = vadd.f32 %v3398, %v3691
    %3693 = vmatprep.mubr.bf16.mxu0 0
    %3694 = vmatmul.mubr.bf16.gmra.mrb[0].mxu0 %v3359
    %v3695 = vpop.f32.mrb[0].mxu0
    %v3696 = vadd.f32 %v3394, %v3695
    %v3697 = vpop.f32.mrb[0].mxu0
    %v3698 = vadd.f32 %v3398, %v3697
    %v3699 = vpop.f32.mrb[0].mxu0
    %v3700 = vadd.f32 %v3394, %v3699
    %v3701 = vpop.f32.mrb[0].mxu0
    %v3702 = vadd.f32 %v3398, %v3701
    %3703 = vmatprep.mubr.bf16.mxu0 0
    %3704 = vmatmul.mubr.bf16.gmra.mrb[0].mxu0 %v3360
    %v3705 = vpop.f32.mrb[0].mxu0
    %v3706 = vadd.f32 %v3394, %v3705
    %v3707 = vpop.f32.mrb[0].mxu0
    %v3708 = vadd.f32 %v3398, %v3707
    %v3709 = vpop.f32.mrb[0].mxu0
    %v3710 = vadd.f32 %v3394, %v3709
    %v3711 = vpop.f32.mrb[0].mxu0
    %v3712 = vadd.f32 %v3398, %v3711
    %3713 = vmatprep.mubr.bf16.mxu0 0
    %3714 = vmatmul.mubr.bf16.gmra.mrb[0].mxu0 %v3361
    %v3715 = vpop.f32.mrb[0].mxu0
    %v3716 = vadd.f32 %v3394, %v3715
    %v3717 = vpop.f32.mrb[0].mxu0
    %v3718 = vadd.f32 %v3398, %v3717
    %v3719 = vpop.f32.mrb[0].mxu0
    %v3720 = vadd.f32 %v3394, %v3719
    %v3721 = vpop.f32.mrb[0].mxu0
    %v3722 = vadd.f32 %v3398, %v3721
    %3723 = vmatprep.mubr.bf16.mxu0 0
    %3724 = vmatmul.mubr.bf16.gmra.mrb[0].mxu0 %v3362
    %v3725 = vpop.f32.mrb[0].mxu0
    %v3726 = vadd.f32 %v3394, %v3725
    %v3727 = vpop.f32.mrb[0].mxu0
    %v3728 = vadd.f32 %v3398, %v3727
    %v3729 = vpop.f32.mrb[0].mxu0
    %v3730 = vadd.f32 %v3394, %v3729
    %v3731 = vpop.f32.mrb[0].mxu0
    %v3732 = vadd.f32 %v3398, %v3731
    %3733 = vmatprep.mubr.bf16.mxu0 0
    %3734 = vmatmul.mubr.bf16.gmra.mrb[0].mxu0 %v3363
    %v3735 = vpop.f32.mrb[0].mxu0
    %v3736 = vadd.f32 %v3394, %v3735
    %v3737 = vpop.f32.mrb[0].mxu0
    %v3738 = vadd.f32 %v3398, %v3737
    %v3739 = vpop.f32.mrb[0].mxu0
    %v3740 = vadd.f32 %v3394, %v3739
    %v3741 = vpop.f32.mrb[0].mxu0
    %v3742 = vadd.f32 %v3398, %v3741
    %3743 = vmatprep.mubr.bf16.mxu0 0
    %3744 = vmatmul.mubr.bf16.gmra.mrb[0].mxu0 %v3364
    %v3745 = vpop.f32.mrb[0].mxu0
    %v3746 = vadd.f32 %v3394, %v3745
    %v3747 = vpop.f32.mrb[0].mxu0
    %v3748 = vadd.f32 %v3398, %v3747
    %v3749 = vpop.f32.mrb[0].mxu0
    %v3750 = vadd.f32 %v3394, %v3749
    %v3751 = vpop.f32.mrb[0].mxu0
    %v3752 = vadd.f32 %v3398, %v3751
    %3753 = vmatprep.mubr.bf16.mxu0 0
    %3754 = vmatmul.mubr.bf16.gmra.mrb[0].mxu0 %v3365
    %v3755 = vpop.f32.mrb[0].mxu0
    %v3756 = vadd.f32 %v3394, %v3755
    %v3757 = vpop.f32.mrb[0].mxu0
    %v3758 = vadd.f32 %v3398, %v3757
    %v3759 = vpop.f32.mrb[0].mxu0
    %v3760 = vadd.f32 %v3394, %v3759
    %v3761 = vpop.f32.mrb[0].mxu0
    %v3762 = vadd.f32 %v3398, %v3761
    %3763 = vmatprep.mubr.bf16.mxu0 0
    %3764 = vmatmul.mubr.bf16.gmra.mrb[0].mxu0 %v3366
    %v3765 = vpop.f32.mrb[0].mxu0
    %v3766 = vadd.f32 %v3394, %v3765
    %v3767 = vpop.f32.mrb[0].mxu0
    %v3768 = vadd.f32 %v3398, %v3767
    %v3769 = vpop.f32.mrb[0].mxu0
    %v3770 = vadd.f32 %v3394, %v3769
    %v3771 = vpop.f32.mrb[0].mxu0
    %v3772 = vadd.f32 %v3398, %v3771
    %3773 = vmatprep.mubr.bf16.mxu0 0
    %3774 = vmatmul.mubr.bf16.gmra.mrb[0].mxu0 %v3367
    %v3775 = vpop.f32.mrb[0].mxu0
    %v3776 = vadd.f32 %v3394, %v3775
    %v3777 = vpop.f32.mrb[0].mxu0
    %v3778 = vadd.f32 %v3398, %v3777
    %v3779 = vpop.f32.mrb[0].mxu0
    %v3780 = vadd.f32 %v3394, %v3779
    %v3781 = vpop.f32.mrb[0].mxu0
    %v3782 = vadd.f32 %v3398, %v3781
    %3783 = vmatprep.mubr.bf16.mxu0 0
    %3784 = vmatmul.mubr.bf16.gmra.mrb[0].mxu0 %v3368
    %v3785 = vpop.f32.mrb[0].mxu0
    %v3786 = vadd.f32 %v3394, %v3785
    %v3787 = vpop.f32.mrb[0].mxu0
    %v3788 = vadd.f32 %v3398, %v3787
    %v3789 = vpop.f32.mrb[0].mxu0
    %v3790 = vadd.f32 %v3394, %v3789
    %v3791 = vpop.f32.mrb[0].mxu0
    %v3792 = vadd.f32 %v3398, %v3791
    %3793 = vmatprep.mubr.bf16.mxu0 0
    %3794 = vmatmul.mubr.bf16.gmra.mrb[0].mxu0 %v3369
    %v3795 = vpop.f32.mrb[0].mxu0
    %v3796 = vadd.f32 %v3394, %v3795
    %v3797 = vpop.f32.mrb[0].mxu0
    %v3798 = vadd.f32 %v3398, %v3797
    %v3799 = vpop.f32.mrb[0].mxu0
    %v3800 = vadd.f32 %v3394, %v3799
    %v3801 = vpop.f32.mrb[0].mxu0
    %v3802 = vadd.f32 %v3398, %v3801
    %3803 = vmatprep.mubr.bf16.mxu0 0
    %3804 = vmatmul.mubr.bf16.gmra.mrb[0].mxu0 %v3370
    %v3805 = vpop.f32.mrb[0].mxu0
    %v3806 = vadd.f32 %v3394, %v3805
    %v3807 = vpop.f32.mrb[0].mxu0
    %v3808 = vadd.f32 %v3398, %v3807
    %v3809 = vpop.f32.mrb[0].mxu0
    %v3810 = vadd.f32 %v3394, %v3809
    %v3811 = vpop.f32.mrb[0].mxu0
    %v3812 = vadd.f32 %v3398, %v3811
    %3813 = vmatprep.mubr.bf16.mxu0 0
    %3814 = vmatmul.mubr.bf16.gmra.mrb[0].mxu0 %v3371
    %v3815 = vpop.f32.mrb[0].mxu0
    %v3816 = vadd.f32 %v3394, %v3815
    %v3817 = vpop.f32.mrb[0].mxu0
    %v3818 = vadd.f32 %v3398, %v3817
    %v3819 = vpop.f32.mrb[0].mxu0
    %v3820 = vadd.f32 %v3394, %v3819
    %v3821 = vpop.f32.mrb[0].mxu0
    %v3822 = vadd.f32 %v3398, %v3821
    %3823 = vmatprep.mubr.bf16.mxu0 0
    %3824 = vmatmul.mubr.bf16.gmra.mrb[0].mxu0 %v3372
    %v3825 = vpop.f32.mrb[0].mxu0
    %v3826 = vadd.f32 %v3394, %v3825
    %v3827 = vpop.f32.mrb[0].mxu0
    %v3828 = vadd.f32 %v3398, %v3827
    %v3829 = vpop.f32.mrb[0].mxu0
    %v3830 = vadd.f32 %v3394, %v3829
    %v3831 = vpop.f32.mrb[0].mxu0
    %v3832 = vadd.f32 %v3398, %v3831
    %3833 = vdwg.mxu0
    %v3834 = vmax.f32 %v3516, 0.0
    %v3835 = vmax.f32 %v3518, 0.0
    %v3836 = vmax.f32 %v3520, 0.0
    %v3837 = vmax.f32 %v3522, 0.0
    %v3838 = vmax.f32 %v3526, 0.0
    %v3839 = vmax.f32 %v3528, 0.0
    %v3840 = vmax.f32 %v3530, 0.0
    %v3841 = vmax.f32 %v3532, 0.0
    %v3842 = vmax.f32 %v3536, 0.0
    %v3843 = vmax.f32 %v3538, 0.0
    %v3844 = vmax.f32 %v3540, 0.0
    %v3845 = vmax.f32 %v3542, 0.0
    %v3846 = vmax.f32 %v3546, 0.0
    %v3847 = vmax.f32 %v3548, 0.0
    %v3848 = vmax.f32 %v3550, 0.0
    %v3849 = vmax.f32 %v3552, 0.0
    %v3850 = vmax.f32 %v3556, 0.0
    %v3851 = vmax.f32 %v3558, 0.0
    %v3852 = vmax.f32 %v3560, 0.0
    %v3853 = vmax.f32 %v3562, 0.0
    %v3854 = vmax.f32 %v3566, 0.0
    %v3855 = vmax.f32 %v3568, 0.0
    %v3856 = vmax.f32 %v3570, 0.0
    %v3857 = vmax.f32 %v3572, 0.0
    %v3858 = vmax.f32 %v3576, 0.0
    %v3859 = vmax.f32 %v3578, 0.0
    %v3860 = vmax.f32 %v3580, 0.0
    %v3861 = vmax.f32 %v3582, 0.0
    %v3862 = vmax.f32 %v3586, 0.0
    %v3863 = vmax.f32 %v3588, 0.0
    %v3864 = vmax.f32 %v3590, 0.0
    %v3865 = vmax.f32 %v3592, 0.0
    %v3866 = vmax.f32 %v3596, 0.0
    %v3867 = vmax.f32 %v3598, 0.0
    %v3868 = vmax.f32 %v3600, 0.0
    %v3869 = vmax.f32 %v3602, 0.0
    %v3870 = vmax.f32 %v3606, 0.0
    %v3871 = vmax.f32 %v3608, 0.0
    %v3872 = vmax.f32 %v3610, 0.0
    %v3873 = vmax.f32 %v3612, 0.0
    %v3874 = vmax.f32 %v3616, 0.0
    %v3875 = vmax.f32 %v3618, 0.0
    %v3876 = vmax.f32 %v3620, 0.0
    %v3877 = vmax.f32 %v3622, 0.0
    %v3878 = vmax.f32 %v3626, 0.0
    %v3879 = vmax.f32 %v3628, 0.0
    %v3880 = vmax.f32 %v3630, 0.0
    %v3881 = vmax.f32 %v3632, 0.0
    %v3882 = vmax.f32 %v3636, 0.0
    %v3883 = vmax.f32 %v3638, 0.0
    %v3884 = vmax.f32 %v3640, 0.0
    %v3885 = vmax.f32 %v3642, 0.0
    %v3886 = vmax.f32 %v3646, 0.0
    %v3887 = vmax.f32 %v3648, 0.0
    %v3888 = vmax.f32 %v3650, 0.0
    %v3889 = vmax.f32 %v3652, 0.0
    %v3890 = vmax.f32 %v3656, 0.0
    %v3891 = vmax.f32 %v3658, 0.0
    %v3892 = vmax.f32 %v3660, 0.0
    %v3893 = vmax.f32 %v3662, 0.0
    %v3894 = vmax.f32 %v3666, 0.0
    %v3895 = vmax.f32 %v3668, 0.0
    %v3896 = vmax.f32 %v3670, 0.0
    %v3897 = vmax.f32 %v3672, 0.0
    %v3898 = vmax.f32 %v3676, 0.0
    %v3899 = vmax.f32 %v3678, 0.0
    %v3900 = vmax.f32 %v3680, 0.0
    %v3901 = vmax.f32 %v3682, 0.0
    %v3902 = vmax.f32 %v3686, 0.0
    %v3903 = vmax.f32 %v3688, 0.0
    %v3904 = vmax.f32 %v3690, 0.0
    %v3905 = vmax.f32 %v3692, 0.0
    %v3906 = vmax.f32 %v3696, 0.0
    %v3907 = vmax.f32 %v3698, 0.0
    %v3908 = vmax.f32 %v3700, 0.0
    %v3909 = vmax.f32 %v3702, 0.0
    %v3910 = vmax.f32 %v3706, 0.0
    %v3911 = vmax.f32 %v3708, 0.0
    %v3912 = vmax.f32 %v3710, 0.0
    %v3913 = vmax.f32 %v3712, 0.0
    %v3914 = vmax.f32 %v3716, 0.0
    %v3915 = vmax.f32 %v3718, 0.0
    %v3916 = vmax.f32 %v3720, 0.0
    %v3917 = vmax.f32 %v3722, 0.0
    %v3918 = vmax.f32 %v3726, 0.0
    %v3919 = vmax.f32 %v3728, 0.0
    %v3920 = vmax.f32 %v3730, 0.0
    %v3921 = vmax.f32 %v3732, 0.0
    %v3922 = vmax.f32 %v3736, 0.0
    %v3923 = vmax.f32 %v3738, 0.0
    %v3924 = vmax.f32 %v3740, 0.0
    %v3925 = vmax.f32 %v3742, 0.0
    %v3926 = vmax.f32 %v3746, 0.0
    %v3927 = vmax.f32 %v3748, 0.0
    %v3928 = vmax.f32 %v3750, 0.0
    %v3929 = vmax.f32 %v3752, 0.0
    %v3930 = vmax.f32 %v3756, 0.0
    %v3931 = vmax.f32 %v3758, 0.0
    %v3932 = vmax.f32 %v3760, 0.0
    %v3933 = vmax.f32 %v3762, 0.0
    %v3934 = vmax.f32 %v3766, 0.0
    %v3935 = vmax.f32 %v3768, 0.0
    %v3936 = vmax.f32 %v3770, 0.0
    %v3937 = vmax.f32 %v3772, 0.0
    %v3938 = vmax.f32 %v3776, 0.0
    %v3939 = vmax.f32 %v3778, 0.0
    %v3940 = vmax.f32 %v3780, 0.0
    %v3941 = vmax.f32 %v3782, 0.0
    %v3942 = vmax.f32 %v3786, 0.0
    %v3943 = vmax.f32 %v3788, 0.0
    %v3944 = vmax.f32 %v3790, 0.0
    %v3945 = vmax.f32 %v3792, 0.0
    %v3946 = vmax.f32 %v3796, 0.0
    %v3947 = vmax.f32 %v3798, 0.0
    %v3948 = vmax.f32 %v3800, 0.0
    %v3949 = vmax.f32 %v3802, 0.0
    %v3950 = vmax.f32 %v3806, 0.0
    %v3951 = vmax.f32 %v3808, 0.0
    %v3952 = vmax.f32 %v3810, 0.0
    %v3953 = vmax.f32 %v3812, 0.0
    %v3954 = vmax.f32 %v3816, 0.0
    %v3955 = vmax.f32 %v3818, 0.0
    %v3956 = vmax.f32 %v3820, 0.0
    %v3957 = vmax.f32 %v3822, 0.0
    %v3958 = vmax.f32 %v3826, 0.0
    %v3959 = vmax.f32 %v3828, 0.0
    %v3960 = vmax.f32 %v3830, 0.0
    %v3961 = vmax.f32 %v3832, 0.0
    %v3962 = vpack.c.bf16 %v3836, %v3834
    %v3963 = vpack.c.bf16 %v3837, %v3835
    %v3964 = vpack.c.bf16 %v3840, %v3838
    %v3965 = vpack.c.bf16 %v3841, %v3839
    %v3966 = vpack.c.bf16 %v3844, %v3842
    %v3967 = vpack.c.bf16 %v3845, %v3843
    %v3968 = vpack.c.bf16 %v3848, %v3846
    %v3969 = vpack.c.bf16 %v3849, %v3847
    %v3970 = vpack.c.bf16 %v3852, %v3850
    %v3971 = vpack.c.bf16 %v3853, %v3851
    %v3972 = vpack.c.bf16 %v3856, %v3854
    %v3973 = vpack.c.bf16 %v3857, %v3855
    %v3974 = vpack.c.bf16 %v3860, %v3858
    %v3975 = vpack.c.bf16 %v3861, %v3859
    %v3976 = vpack.c.bf16 %v3864, %v3862
    %v3977 = vpack.c.bf16 %v3865, %v3863
    %v3978 = vpack.c.bf16 %v3868, %v3866
    %v3979 = vpack.c.bf16 %v3869, %v3867
    %v3980 = vpack.c.bf16 %v3872, %v3870
    %v3981 = vpack.c.bf16 %v3873, %v3871
    %v3982 = vpack.c.bf16 %v3876, %v3874
    %v3983 = vpack.c.bf16 %v3877, %v3875
    %v3984 = vpack.c.bf16 %v3880, %v3878
    %v3985 = vpack.c.bf16 %v3881, %v3879
    %v3986 = vpack.c.bf16 %v3884, %v3882
    %v3987 = vpack.c.bf16 %v3885, %v3883
    %v3988 = vpack.c.bf16 %v3888, %v3886
    %v3989 = vpack.c.bf16 %v3889, %v3887
    %v3990 = vpack.c.bf16 %v3892, %v3890
    %v3991 = vpack.c.bf16 %v3893, %v3891
    %v3992 = vpack.c.bf16 %v3896, %v3894
    %v3993 = vpack.c.bf16 %v3897, %v3895
    %v3994 = vpack.c.bf16 %v3900, %v3898
    %v3995 = vpack.c.bf16 %v3901, %v3899
    %v3996 = vpack.c.bf16 %v3904, %v3902
    %v3997 = vpack.c.bf16 %v3905, %v3903
    %v3998 = vpack.c.bf16 %v3908, %v3906
    %v3999 = vpack.c.bf16 %v3909, %v3907
    %v4000 = vpack.c.bf16 %v3912, %v3910
    %v4001 = vpack.c.bf16 %v3913, %v3911
    %v4002 = vpack.c.bf16 %v3916, %v3914
    %v4003 = vpack.c.bf16 %v3917, %v3915
    %v4004 = vpack.c.bf16 %v3920, %v3918
    %v4005 = vpack.c.bf16 %v3921, %v3919
    %v4006 = vpack.c.bf16 %v3924, %v3922
    %v4007 = vpack.c.bf16 %v3925, %v3923
    %v4008 = vpack.c.bf16 %v3928, %v3926
    %v4009 = vpack.c.bf16 %v3929, %v3927
    %v4010 = vpack.c.bf16 %v3932, %v3930
    %v4011 = vpack.c.bf16 %v3933, %v3931
    %v4012 = vpack.c.bf16 %v3936, %v3934
    %v4013 = vpack.c.bf16 %v3937, %v3935
    %v4014 = vpack.c.bf16 %v3940, %v3938
    %v4015 = vpack.c.bf16 %v3941, %v3939
    %v4016 = vpack.c.bf16 %v3944, %v3942
    %v4017 = vpack.c.bf16 %v3945, %v3943
    %v4018 = vpack.c.bf16 %v3948, %v3946
    %v4019 = vpack.c.bf16 %v3949, %v3947
    %v4020 = vpack.c.bf16 %v3952, %v3950
    %v4021 = vpack.c.bf16 %v3953, %v3951
    %v4022 = vpack.c.bf16 %v3956, %v3954
    %v4023 = vpack.c.bf16 %v3957, %v3955
    %v4024 = vpack.c.bf16 %v3960, %v3958
    %v4025 = vpack.c.bf16 %v3961, %v3959
    %v4026 = vld [vmem:[#allocation14] sm:$0xf]
    %v4027 = vld [vmem:[#allocation14 + $0x4] sm:$0xf]
    %v4028 = vld [vmem:[#allocation14 + $0x8] sm:$0xf]
    %v4029 = vld [vmem:[#allocation14 + $0xc] sm:$0xf]
    %v4030 = vld [vmem:[#allocation14 + $0x10] sm:$0xf]
    %v4031 = vld [vmem:[#allocation14 + $0x14] sm:$0xf]
    %v4032 = vld [vmem:[#allocation14 + $0x18] sm:$0xf]
    %v4033 = vld [vmem:[#allocation14 + $0x1c] sm:$0xf]
    %v4034 = vld [vmem:[#allocation14 + $0x20] sm:$0xf]
    %v4035 = vld [vmem:[#allocation14 + $0x24] sm:$0xf]
    %v4036 = vld [vmem:[#allocation14 + $0x28] sm:$0xf]
    %v4037 = vld [vmem:[#allocation14 + $0x2c] sm:$0xf]
    %v4038 = vld [vmem:[#allocation14 + $0x30] sm:$0xf]
    %v4039 = vld [vmem:[#allocation14 + $0x34] sm:$0xf]
    %v4040 = vld [vmem:[#allocation14 + $0x38] sm:$0xf]
    %v4041 = vld [vmem:[#allocation14 + $0x3c] sm:$0xf]
    %v4042 = vld [vmem:[#allocation14 + $0x40] sm:$0xf]
    %v4043 = vld [vmem:[#allocation14 + $0x44] sm:$0xf]
    %v4044 = vld [vmem:[#allocation14 + $0x48] sm:$0xf]
    %v4045 = vld [vmem:[#allocation14 + $0x4c] sm:$0xf]
    %v4046 = vld [vmem:[#allocation14 + $0x50] sm:$0xf]
    %v4047 = vld [vmem:[#allocation14 + $0x54] sm:$0xf]
    %v4048 = vld [vmem:[#allocation14 + $0x58] sm:$0xf]
    %v4049 = vld [vmem:[#allocation14 + $0x5c] sm:$0xf]
    %v4050 = vld [vmem:[#allocation14 + $0x60] sm:$0xf]
    %v4051 = vld [vmem:[#allocation14 + $0x64] sm:$0xf]
    %v4052 = vld [vmem:[#allocation14 + $0x68] sm:$0xf]
    %v4053 = vld [vmem:[#allocation14 + $0x6c] sm:$0xf]
    %v4054 = vld [vmem:[#allocation14 + $0x70] sm:$0xf]
    %v4055 = vld [vmem:[#allocation14 + $0x74] sm:$0xf]
    %v4056 = vld [vmem:[#allocation14 + $0x78] sm:$0xf]
    %v4057 = vld [vmem:[#allocation14 + $0x7c] sm:$0xf]
    %v4058 = vld [vmem:[%s13] sm:$0x1]
    %v4060 = vlaneseq
    %v4061 = vshrl.u32 %v4060, 7
    %v4062 = vsub.s32 0, %v4061
    %v4063 = vrot.slane %v4058, %v4062
    %v4097 = vunpack.c.l.b16 %v4026
    %v4098 = vunpack.c.l.b16 %v4027
    %v4099 = vunpack.c.l.b16 %v4028
    %v4100 = vunpack.c.l.b16 %v4029
    %v4101 = vunpack.c.l.b16 %v4030
    %v4102 = vunpack.c.l.b16 %v4031
    %v4103 = vunpack.c.l.b16 %v4032
    %v4104 = vunpack.c.l.b16 %v4033
    %v4105 = vunpack.c.l.b16 %v4034
    %v4106 = vunpack.c.l.b16 %v4035
    %v4107 = vunpack.c.l.b16 %v4036
    %v4108 = vunpack.c.l.b16 %v4037
    %v4109 = vunpack.c.l.b16 %v4038
    %v4110 = vunpack.c.l.b16 %v4039
    %v4111 = vunpack.c.l.b16 %v4040
    %v4112 = vunpack.c.l.b16 %v4041
    %v4113 = vunpack.c.l.b16 %v4042
    %v4114 = vunpack.c.l.b16 %v4043
    %v4115 = vunpack.c.l.b16 %v4044
    %v4116 = vunpack.c.l.b16 %v4045
    %v4117 = vunpack.c.l.b16 %v4046
    %v4118 = vunpack.c.l.b16 %v4047
    %v4119 = vunpack.c.l.b16 %v4048
    %v4120 = vunpack.c.l.b16 %v4049
    %v4121 = vunpack.c.l.b16 %v4050
    %v4122 = vunpack.c.l.b16 %v4051
    %v4123 = vunpack.c.l.b16 %v4052
    %v4124 = vunpack.c.l.b16 %v4053
    %v4125 = vunpack.c.l.b16 %v4054
    %v4126 = vunpack.c.l.b16 %v4055
    %v4127 = vunpack.c.l.b16 %v4056
    %v4128 = vunpack.c.l.b16 %v4057
    %v4129 = vpack.c.b16 %v4098, %v4097
    %v4130 = vpack.c.b16 %v4100, %v4099
    %v4131 = vpack.c.b16 %v4102, %v4101
    %v4132 = vpack.c.b16 %v4104, %v4103
    %v4133 = vpack.c.b16 %v4106, %v4105
    %v4134 = vpack.c.b16 %v4108, %v4107
    %v4135 = vpack.c.b16 %v4110, %v4109
    %v4136 = vpack.c.b16 %v4112, %v4111
    %v4137 = vpack.c.b16 %v4114, %v4113
    %v4138 = vpack.c.b16 %v4116, %v4115
    %v4139 = vpack.c.b16 %v4118, %v4117
    %v4140 = vpack.c.b16 %v4120, %v4119
    %v4141 = vpack.c.b16 %v4122, %v4121
    %v4142 = vpack.c.b16 %v4124, %v4123
    %v4143 = vpack.c.b16 %v4126, %v4125
    %v4144 = vpack.c.b16 %v4128, %v4127
    %4161 = vmatprep.subr.bf16.mxu0 0
    %4162 = vmatpush1.bf16.msra.mxu0 %v4129
    %4163 = vmatprep.subr.bf16.mxu0 0
    %4164 = vmatpush1.bf16.msra.mxu0 %v4130
    %4165 = vmatprep.subr.bf16.mxu0 0
    %4166 = vmatpush1.bf16.msra.mxu0 %v4131
    %4167 = vmatprep.subr.bf16.mxu0 0
    %4168 = vmatpush1.bf16.msra.mxu0 %v4132
    %4169 = vmatprep.subr.bf16.mxu0 0
    %4170 = vmatpush1.bf16.msra.mxu0 %v4133
    %4171 = vmatprep.subr.bf16.mxu0 0
    %4172 = vmatpush1.bf16.msra.mxu0 %v4134
    %4173 = vmatprep.subr.bf16.mxu0 0
    %4174 = vmatpush1.bf16.msra.mxu0 %v4135
    %4175 = vmatprep.subr.bf16.mxu0 0
    %4176 = vmatpush1.bf16.msra.mxu0 %v4136
    %4177 = vmatprep.subr.bf16.mxu0 0
    %4178 = vmatpush1.bf16.msra.mxu0 %v4137
    %4179 = vmatprep.subr.bf16.mxu0 0
    %4180 = vmatpush1.bf16.msra.mxu0 %v4138
    %4181 = vmatprep.subr.bf16.mxu0 0
    %4182 = vmatpush1.bf16.msra.mxu0 %v4139
    %4183 = vmatprep.subr.bf16.mxu0 0
    %4184 = vmatpush1.bf16.msra.mxu0 %v4140
    %4185 = vmatprep.subr.bf16.mxu0 0
    %4186 = vmatpush1.bf16.msra.mxu0 %v4141
    %4187 = vmatprep.subr.bf16.mxu0 0
    %4188 = vmatpush1.bf16.msra.mxu0 %v4142
    %4189 = vmatprep.subr.bf16.mxu0 0
    %4190 = vmatpush1.bf16.msra.mxu0 %v4143
    %4191 = vmatprep.subr.bf16.mxu0 0
    %4192 = vmatpush1.bf16.msra.mxu0 %v4144
    %4193 = vmatprep.mubr.bf16.mxu0 %v3963
    %4194 = vmatmul.mubr.bf16.gmra.mrb[0].mxu0 %v3962
    %v4195 = vpop.f32.mrb[0].mxu0
    %v4196 = vadd.f32 %v4063, %v4195
    %v4197 = vpop.f32.mrb[0].mxu0
    %v4198 = vpop.f32.mrb[0].mxu0
    %v4199 = vadd.f32 %v4063, %v4198
    %v4200 = vpop.f32.mrb[0].mxu0
    %4201 = vmatprep.mubr.bf16.mxu0 %v3965
    %4202 = vmatmul.mubr.bf16.gmra.mrb[0].mxu0 %v3964
    %v4203 = vpop.f32.mrb[0].mxu0
    %v4204 = vadd.f32 %v4063, %v4203
    %v4205 = vpop.f32.mrb[0].mxu0
    %v4206 = vpop.f32.mrb[0].mxu0
    %v4207 = vadd.f32 %v4063, %v4206
    %v4208 = vpop.f32.mrb[0].mxu0
    %4209 = vmatprep.mubr.bf16.mxu0 %v3967
    %4210 = vmatmul.mubr.bf16.gmra.mrb[0].mxu0 %v3966
    %v4211 = vpop.f32.mrb[0].mxu0
    %v4212 = vadd.f32 %v4063, %v4211
    %v4213 = vpop.f32.mrb[0].mxu0
    %v4214 = vpop.f32.mrb[0].mxu0
    %v4215 = vadd.f32 %v4063, %v4214
    %v4216 = vpop.f32.mrb[0].mxu0
    %4217 = vmatprep.mubr.bf16.mxu0 %v3969
    %4218 = vmatmul.mubr.bf16.gmra.mrb[0].mxu0 %v3968
    %v4219 = vpop.f32.mrb[0].mxu0
    %v4220 = vadd.f32 %v4063, %v4219
    %v4221 = vpop.f32.mrb[0].mxu0
    %v4222 = vpop.f32.mrb[0].mxu0
    %v4223 = vadd.f32 %v4063, %v4222
    %v4224 = vpop.f32.mrb[0].mxu0
    %4225 = vmatprep.mubr.bf16.mxu0 %v3971
    %4226 = vmatmul.mubr.bf16.gmra.mrb[0].mxu0 %v3970
    %v4227 = vpop.f32.mrb[0].mxu0
    %v4228 = vadd.f32 %v4063, %v4227
    %v4229 = vpop.f32.mrb[0].mxu0
    %v4230 = vpop.f32.mrb[0].mxu0
    %v4231 = vadd.f32 %v4063, %v4230
    %v4232 = vpop.f32.mrb[0].mxu0
    %4233 = vmatprep.mubr.bf16.mxu0 %v3973
    %4234 = vmatmul.mubr.bf16.gmra.mrb[0].mxu0 %v3972
    %v4235 = vpop.f32.mrb[0].mxu0
    %v4236 = vadd.f32 %v4063, %v4235
    %v4237 = vpop.f32.mrb[0].mxu0
    %v4238 = vpop.f32.mrb[0].mxu0
    %v4239 = vadd.f32 %v4063, %v4238
    %v4240 = vpop.f32.mrb[0].mxu0
    %4241 = vmatprep.mubr.bf16.mxu0 %v3975
    %4242 = vmatmul.mubr.bf16.gmra.mrb[0].mxu0 %v3974
    %v4243 = vpop.f32.mrb[0].mxu0
    %v4244 = vadd.f32 %v4063, %v4243
    %v4245 = vpop.f32.mrb[0].mxu0
    %v4246 = vpop.f32.mrb[0].mxu0
    %v4247 = vadd.f32 %v4063, %v4246
    %v4248 = vpop.f32.mrb[0].mxu0
    %4249 = vmatprep.mubr.bf16.mxu0 %v3977
    %4250 = vmatmul.mubr.bf16.gmra.mrb[0].mxu0 %v3976
    %v4251 = vpop.f32.mrb[0].mxu0
    %v4252 = vadd.f32 %v4063, %v4251
    %v4253 = vpop.f32.mrb[0].mxu0
    %v4254 = vpop.f32.mrb[0].mxu0
    %v4255 = vadd.f32 %v4063, %v4254
    %v4256 = vpop.f32.mrb[0].mxu0
    %4257 = vmatprep.mubr.bf16.mxu0 %v3979
    %4258 = vmatmul.mubr.bf16.gmra.mrb[0].mxu0 %v3978
    %v4259 = vpop.f32.mrb[0].mxu0
    %v4260 = vadd.f32 %v4063, %v4259
    %v4261 = vpop.f32.mrb[0].mxu0
    %v4262 = vpop.f32.mrb[0].mxu0
    %v4263 = vadd.f32 %v4063, %v4262
    %v4264 = vpop.f32.mrb[0].mxu0
    %4265 = vmatprep.mubr.bf16.mxu0 %v3981
    %4266 = vmatmul.mubr.bf16.gmra.mrb[0].mxu0 %v3980
    %v4267 = vpop.f32.mrb[0].mxu0
    %v4268 = vadd.f32 %v4063, %v4267
    %v4269 = vpop.f32.mrb[0].mxu0
    %v4270 = vpop.f32.mrb[0].mxu0
    %v4271 = vadd.f32 %v4063, %v4270
    %v4272 = vpop.f32.mrb[0].mxu0
    %4273 = vmatprep.mubr.bf16.mxu0 %v3983
    %4274 = vmatmul.mubr.bf16.gmra.mrb[0].mxu0 %v3982
    %v4275 = vpop.f32.mrb[0].mxu0
    %v4276 = vadd.f32 %v4063, %v4275
    %v4277 = vpop.f32.mrb[0].mxu0
    %v4278 = vpop.f32.mrb[0].mxu0
    %v4279 = vadd.f32 %v4063, %v4278
    %v4280 = vpop.f32.mrb[0].mxu0
    %4281 = vmatprep.mubr.bf16.mxu0 %v3985
    %4282 = vmatmul.mubr.bf16.gmra.mrb[0].mxu0 %v3984
    %v4283 = vpop.f32.mrb[0].mxu0
    %v4284 = vadd.f32 %v4063, %v4283
    %v4285 = vpop.f32.mrb[0].mxu0
    %v4286 = vpop.f32.mrb[0].mxu0
    %v4287 = vadd.f32 %v4063, %v4286
    %v4288 = vpop.f32.mrb[0].mxu0
    %4289 = vmatprep.mubr.bf16.mxu0 %v3987
    %4290 = vmatmul.mubr.bf16.gmra.mrb[0].mxu0 %v3986
    %v4291 = vpop.f32.mrb[0].mxu0
    %v4292 = vadd.f32 %v4063, %v4291
    %v4293 = vpop.f32.mrb[0].mxu0
    %v4294 = vpop.f32.mrb[0].mxu0
    %v4295 = vadd.f32 %v4063, %v4294
    %v4296 = vpop.f32.mrb[0].mxu0
    %4297 = vmatprep.mubr.bf16.mxu0 %v3989
    %4298 = vmatmul.mubr.bf16.gmra.mrb[0].mxu0 %v3988
    %v4299 = vpop.f32.mrb[0].mxu0
    %v4300 = vadd.f32 %v4063, %v4299
    %v4301 = vpop.f32.mrb[0].mxu0
    %v4302 = vpop.f32.mrb[0].mxu0
    %v4303 = vadd.f32 %v4063, %v4302
    %v4304 = vpop.f32.mrb[0].mxu0
    %4305 = vmatprep.mubr.bf16.mxu0 %v3991
    %4306 = vmatmul.mubr.bf16.gmra.mrb[0].mxu0 %v3990
    %v4307 = vpop.f32.mrb[0].mxu0
    %v4308 = vadd.f32 %v4063, %v4307
    %v4309 = vpop.f32.mrb[0].mxu0
    %v4310 = vpop.f32.mrb[0].mxu0
    %v4311 = vadd.f32 %v4063, %v4310
    %v4312 = vpop.f32.mrb[0].mxu0
    %4313 = vmatprep.mubr.bf16.mxu0 %v3993
    %4314 = vmatmul.mubr.bf16.gmra.mrb[0].mxu0 %v3992
    %v4315 = vpop.f32.mrb[0].mxu0
    %v4316 = vadd.f32 %v4063, %v4315
    %v4317 = vpop.f32.mrb[0].mxu0
    %v4318 = vpop.f32.mrb[0].mxu0
    %v4319 = vadd.f32 %v4063, %v4318
    %v4320 = vpop.f32.mrb[0].mxu0
    %4321 = vmatprep.mubr.bf16.mxu0 %v3995
    %4322 = vmatmul.mubr.bf16.gmra.mrb[0].mxu0 %v3994
    %v4323 = vpop.f32.mrb[0].mxu0
    %v4324 = vadd.f32 %v4063, %v4323
    %v4325 = vpop.f32.mrb[0].mxu0
    %v4326 = vpop.f32.mrb[0].mxu0
    %v4327 = vadd.f32 %v4063, %v4326
    %v4328 = vpop.f32.mrb[0].mxu0
    %4329 = vmatprep.mubr.bf16.mxu0 %v3997
    %4330 = vmatmul.mubr.bf16.gmra.mrb[0].mxu0 %v3996
    %v4331 = vpop.f32.mrb[0].mxu0
    %v4332 = vadd.f32 %v4063, %v4331
    %v4333 = vpop.f32.mrb[0].mxu0
    %v4334 = vpop.f32.mrb[0].mxu0
    %v4335 = vadd.f32 %v4063, %v4334
    %v4336 = vpop.f32.mrb[0].mxu0
    %4337 = vmatprep.mubr.bf16.mxu0 %v3999
    %4338 = vmatmul.mubr.bf16.gmra.mrb[0].mxu0 %v3998
    %v4339 = vpop.f32.mrb[0].mxu0
    %v4340 = vadd.f32 %v4063, %v4339
    %v4341 = vpop.f32.mrb[0].mxu0
    %v4342 = vpop.f32.mrb[0].mxu0
    %v4343 = vadd.f32 %v4063, %v4342
    %v4344 = vpop.f32.mrb[0].mxu0
    %4345 = vmatprep.mubr.bf16.mxu0 %v4001
    %4346 = vmatmul.mubr.bf16.gmra.mrb[0].mxu0 %v4000
    %v4347 = vpop.f32.mrb[0].mxu0
    %v4348 = vadd.f32 %v4063, %v4347
    %v4349 = vpop.f32.mrb[0].mxu0
    %v4350 = vpop.f32.mrb[0].mxu0
    %v4351 = vadd.f32 %v4063, %v4350
    %v4352 = vpop.f32.mrb[0].mxu0
    %4353 = vmatprep.mubr.bf16.mxu0 %v4003
    %4354 = vmatmul.mubr.bf16.gmra.mrb[0].mxu0 %v4002
    %v4355 = vpop.f32.mrb[0].mxu0
    %v4356 = vadd.f32 %v4063, %v4355
    %v4357 = vpop.f32.mrb[0].mxu0
    %v4358 = vpop.f32.mrb[0].mxu0
    %v4359 = vadd.f32 %v4063, %v4358
    %v4360 = vpop.f32.mrb[0].mxu0
    %4361 = vmatprep.mubr.bf16.mxu0 %v4005
    %4362 = vmatmul.mubr.bf16.gmra.mrb[0].mxu0 %v4004
    %v4363 = vpop.f32.mrb[0].mxu0
    %v4364 = vadd.f32 %v4063, %v4363
    %v4365 = vpop.f32.mrb[0].mxu0
    %v4366 = vpop.f32.mrb[0].mxu0
    %v4367 = vadd.f32 %v4063, %v4366
    %v4368 = vpop.f32.mrb[0].mxu0
    %4369 = vmatprep.mubr.bf16.mxu0 %v4007
    %4370 = vmatmul.mubr.bf16.gmra.mrb[0].mxu0 %v4006
    %v4371 = vpop.f32.mrb[0].mxu0
    %v4372 = vadd.f32 %v4063, %v4371
    %v4373 = vpop.f32.mrb[0].mxu0
    %v4374 = vpop.f32.mrb[0].mxu0
    %v4375 = vadd.f32 %v4063, %v4374
    %v4376 = vpop.f32.mrb[0].mxu0
    %4377 = vmatprep.mubr.bf16.mxu0 %v4009
    %4378 = vmatmul.mubr.bf16.gmra.mrb[0].mxu0 %v4008
    %v4379 = vpop.f32.mrb[0].mxu0
    %v4380 = vadd.f32 %v4063, %v4379
    %v4381 = vpop.f32.mrb[0].mxu0
    %v4382 = vpop.f32.mrb[0].mxu0
    %v4383 = vadd.f32 %v4063, %v4382
    %v4384 = vpop.f32.mrb[0].mxu0
    %4385 = vmatprep.mubr.bf16.mxu0 %v4011
    %4386 = vmatmul.mubr.bf16.gmra.mrb[0].mxu0 %v4010
    %v4387 = vpop.f32.mrb[0].mxu0
    %v4388 = vadd.f32 %v4063, %v4387
    %v4389 = vpop.f32.mrb[0].mxu0
    %v4390 = vpop.f32.mrb[0].mxu0
    %v4391 = vadd.f32 %v4063, %v4390
    %v4392 = vpop.f32.mrb[0].mxu0
    %4393 = vmatprep.mubr.bf16.mxu0 %v4013
    %4394 = vmatmul.mubr.bf16.gmra.mrb[0].mxu0 %v4012
    %v4395 = vpop.f32.mrb[0].mxu0
    %v4396 = vadd.f32 %v4063, %v4395
    %v4397 = vpop.f32.mrb[0].mxu0
    %v4398 = vpop.f32.mrb[0].mxu0
    %v4399 = vadd.f32 %v4063, %v4398
    %v4400 = vpop.f32.mrb[0].mxu0
    %4401 = vmatprep.mubr.bf16.mxu0 %v4015
    %4402 = vmatmul.mubr.bf16.gmra.mrb[0].mxu0 %v4014
    %v4403 = vpop.f32.mrb[0].mxu0
    %v4404 = vadd.f32 %v4063, %v4403
    %v4405 = vpop.f32.mrb[0].mxu0
    %v4406 = vpop.f32.mrb[0].mxu0
    %v4407 = vadd.f32 %v4063, %v4406
    %v4408 = vpop.f32.mrb[0].mxu0
    %4409 = vmatprep.mubr.bf16.mxu0 %v4017
    %4410 = vmatmul.mubr.bf16.gmra.mrb[0].mxu0 %v4016
    %v4411 = vpop.f32.mrb[0].mxu0
    %v4412 = vadd.f32 %v4063, %v4411
    %v4413 = vpop.f32.mrb[0].mxu0
    %v4414 = vpop.f32.mrb[0].mxu0
    %v4415 = vadd.f32 %v4063, %v4414
    %v4416 = vpop.f32.mrb[0].mxu0
    %4417 = vmatprep.mubr.bf16.mxu0 %v4019
    %4418 = vmatmul.mubr.bf16.gmra.mrb[0].mxu0 %v4018
    %v4419 = vpop.f32.mrb[0].mxu0
    %v4420 = vadd.f32 %v4063, %v4419
    %v4421 = vpop.f32.mrb[0].mxu0
    %v4422 = vpop.f32.mrb[0].mxu0
    %v4423 = vadd.f32 %v4063, %v4422
    %v4424 = vpop.f32.mrb[0].mxu0
    %4425 = vmatprep.mubr.bf16.mxu0 %v4021
    %4426 = vmatmul.mubr.bf16.gmra.mrb[0].mxu0 %v4020
    %v4427 = vpop.f32.mrb[0].mxu0
    %v4428 = vadd.f32 %v4063, %v4427
    %v4429 = vpop.f32.mrb[0].mxu0
    %v4430 = vpop.f32.mrb[0].mxu0
    %v4431 = vadd.f32 %v4063, %v4430
    %v4432 = vpop.f32.mrb[0].mxu0
    %4433 = vmatprep.mubr.bf16.mxu0 %v4023
    %4434 = vmatmul.mubr.bf16.gmra.mrb[0].mxu0 %v4022
    %v4435 = vpop.f32.mrb[0].mxu0
    %v4436 = vadd.f32 %v4063, %v4435
    %v4437 = vpop.f32.mrb[0].mxu0
    %v4438 = vpop.f32.mrb[0].mxu0
    %v4439 = vadd.f32 %v4063, %v4438
    %v4440 = vpop.f32.mrb[0].mxu0
    %4441 = vmatprep.mubr.bf16.mxu0 %v4025
    %4442 = vmatmul.mubr.bf16.gmra.mrb[0].mxu0 %v4024
    %v4443 = vpop.f32.mrb[0].mxu0
    %v4444 = vadd.f32 %v4063, %v4443
    %v4445 = vpop.f32.mrb[0].mxu0
    %v4446 = vpop.f32.mrb[0].mxu0
    %v4447 = vadd.f32 %v4063, %v4446
    %v4448 = vpop.f32.mrb[0].mxu0
    %4449 = vdwg.mxu0
    %4450 = vst [vmem:[#allocation16] sm:$0xff] %v4196
    %4451 = vst [vmem:[#allocation16 + $0x8] sm:$0xff] %v4199
    %4452 = vst [vmem:[#allocation16 + $0x10] sm:$0xff] %v4204
    %4453 = vst [vmem:[#allocation16 + $0x18] sm:$0xff] %v4207
    %4454 = vst [vmem:[#allocation16 + $0x20] sm:$0xff] %v4212
    %4455 = vst [vmem:[#allocation16 + $0x28] sm:$0xff] %v4215
    %4456 = vst [vmem:[#allocation16 + $0x30] sm:$0xff] %v4220
    %4457 = vst [vmem:[#allocation16 + $0x38] sm:$0xff] %v4223
    %4458 = vst [vmem:[#allocation16 + $0x40] sm:$0xff] %v4228
    %4459 = vst [vmem:[#allocation16 + $0x48] sm:$0xff] %v4231
    %4460 = vst [vmem:[#allocation16 + $0x50] sm:$0xff] %v4236
    %4461 = vst [vmem:[#allocation16 + $0x58] sm:$0xff] %v4239
    %4462 = vst [vmem:[#allocation16 + $0x60] sm:$0xff] %v4244
    %4463 = vst [vmem:[#allocation16 + $0x68] sm:$0xff] %v4247
    %4464 = vst [vmem:[#allocation16 + $0x70] sm:$0xff] %v4252
    %4465 = vst [vmem:[#allocation16 + $0x78] sm:$0xff] %v4255
    %4466 = vst [vmem:[#allocation16 + $0x80] sm:$0xff] %v4260
    %4467 = vst [vmem:[#allocation16 + $0x88] sm:$0xff] %v4263
    %4468 = vst [vmem:[#allocation16 + $0x90] sm:$0xff] %v4268
    %4469 = vst [vmem:[#allocation16 + $0x98] sm:$0xff] %v4271
    %4470 = vst [vmem:[#allocation16 + $0xa0] sm:$0xff] %v4276
    %4471 = vst [vmem:[#allocation16 + $0xa8] sm:$0xff] %v4279
    %4472 = vst [vmem:[#allocation16 + $0xb0] sm:$0xff] %v4284
    %4473 = vst [vmem:[#allocation16 + $0xb8] sm:$0xff] %v4287
    %4474 = vst [vmem:[#allocation16 + $0xc0] sm:$0xff] %v4292
    %4475 = vst [vmem:[#allocation16 + $0xc8] sm:$0xff] %v4295
    %4476 = vst [vmem:[#allocation16 + $0xd0] sm:$0xff] %v4300
    %4477 = vst [vmem:[#allocation16 + $0xd8] sm:$0xff] %v4303
    %4478 = vst [vmem:[#allocation16 + $0xe0] sm:$0xff] %v4308
    %4479 = vst [vmem:[#allocation16 + $0xe8] sm:$0xff] %v4311
    %4480 = vst [vmem:[#allocation16 + $0xf0] sm:$0xff] %v4316
    %4481 = vst [vmem:[#allocation16 + $0xf8] sm:$0xff] %v4319
    %4482 = vst [vmem:[#allocation16 + $0x100] sm:$0xff] %v4324
    %4483 = vst [vmem:[#allocation16 + $0x108] sm:$0xff] %v4327
    %4484 = vst [vmem:[#allocation16 + $0x110] sm:$0xff] %v4332
    %4485 = vst [vmem:[#allocation16 + $0x118] sm:$0xff] %v4335
    %4486 = vst [vmem:[#allocation16 + $0x120] sm:$0xff] %v4340
    %4487 = vst [vmem:[#allocation16 + $0x128] sm:$0xff] %v4343
    %4488 = vst [vmem:[#allocation16 + $0x130] sm:$0xff] %v4348
    %4489 = vst [vmem:[#allocation16 + $0x138] sm:$0xff] %v4351
    %4490 = vst [vmem:[#allocation16 + $0x140] sm:$0xff] %v4356
    %4491 = vst [vmem:[#allocation16 + $0x148] sm:$0xff] %v4359
    %4492 = vst [vmem:[#allocation16 + $0x150] sm:$0xff] %v4364
    %4493 = vst [vmem:[#allocation16 + $0x158] sm:$0xff] %v4367
    %4494 = vst [vmem:[#allocation16 + $0x160] sm:$0xff] %v4372
    %4495 = vst [vmem:[#allocation16 + $0x168] sm:$0xff] %v4375
    %4496 = vst [vmem:[#allocation16 + $0x170] sm:$0xff] %v4380
    %4497 = vst [vmem:[#allocation16 + $0x178] sm:$0xff] %v4383
    %4498 = vst [vmem:[#allocation16 + $0x180] sm:$0xff] %v4388
    %4499 = vst [vmem:[#allocation16 + $0x188] sm:$0xff] %v4391
    %4500 = vst [vmem:[#allocation16 + $0x190] sm:$0xff] %v4396
    %4501 = vst [vmem:[#allocation16 + $0x198] sm:$0xff] %v4399
    %4502 = vst [vmem:[#allocation16 + $0x1a0] sm:$0xff] %v4404
    %4503 = vst [vmem:[#allocation16 + $0x1a8] sm:$0xff] %v4407
    %4504 = vst [vmem:[#allocation16 + $0x1b0] sm:$0xff] %v4412
    %4505 = vst [vmem:[#allocation16 + $0x1b8] sm:$0xff] %v4415
    %4506 = vst [vmem:[#allocation16 + $0x1c0] sm:$0xff] %v4420
    %4507 = vst [vmem:[#allocation16 + $0x1c8] sm:$0xff] %v4423
    %4508 = vst [vmem:[#allocation16 + $0x1d0] sm:$0xff] %v4428
    %4509 = vst [vmem:[#allocation16 + $0x1d8] sm:$0xff] %v4431
    %4510 = vst [vmem:[#allocation16 + $0x1e0] sm:$0xff] %v4436
    %4511 = vst [vmem:[#allocation16 + $0x1e8] sm:$0xff] %v4439
    %4512 = vst [vmem:[#allocation16 + $0x1f0] sm:$0xff] %v4444
    %4513 = vst [vmem:[#allocation16 + $0x1f8] sm:$0xff] %v4447
    %4514 = vst [vmem:[#allocation17] sm:$0xff] %v3023
    %4515 = vst [vmem:[#allocation17 + $0x8] sm:$0xff] %v3027
    %4516 = vst [vmem:[#allocation17 + $0x10] sm:$0xff] %v3033
    %4517 = vst [vmem:[#allocation17 + $0x18] sm:$0xff] %v3037
    %4518 = vst [vmem:[#allocation17 + $0x20] sm:$0xff] %v3043
    %4519 = vst [vmem:[#allocation17 + $0x28] sm:$0xff] %v3047
    %4520 = vst [vmem:[#allocation17 + $0x30] sm:$0xff] %v3053
    %4521 = vst [vmem:[#allocation17 + $0x38] sm:$0xff] %v3057
    %4522 = vst [vmem:[#allocation17 + $0x40] sm:$0xff] %v3063
    %4523 = vst [vmem:[#allocation17 + $0x48] sm:$0xff] %v3067
    %4524 = vst [vmem:[#allocation17 + $0x50] sm:$0xff] %v3073
    %4525 = vst [vmem:[#allocation17 + $0x58] sm:$0xff] %v3077
    %4526 = vst [vmem:[#allocation17 + $0x60] sm:$0xff] %v3083
    %4527 = vst [vmem:[#allocation17 + $0x68] sm:$0xff] %v3087
    %4528 = vst [vmem:[#allocation17 + $0x70] sm:$0xff] %v3093
    %4529 = vst [vmem:[#allocation17 + $0x78] sm:$0xff] %v3097
    %4530 = vst [vmem:[#allocation17 + $0x80] sm:$0xff] %v3103
    %4531 = vst [vmem:[#allocation17 + $0x88] sm:$0xff] %v3107
    %4532 = vst [vmem:[#allocation17 + $0x90] sm:$0xff] %v3113
    %4533 = vst [vmem:[#allocation17 + $0x98] sm:$0xff] %v3117
    %4534 = vst [vmem:[#allocation17 + $0xa0] sm:$0xff] %v3123
    %4535 = vst [vmem:[#allocation17 + $0xa8] sm:$0xff] %v3127
    %4536 = vst [vmem:[#allocation17 + $0xb0] sm:$0xff] %v3133
    %4537 = vst [vmem:[#allocation17 + $0xb8] sm:$0xff] %v3137
    %4538 = vst [vmem:[#allocation17 + $0xc0] sm:$0xff] %v3143
    %4539 = vst [vmem:[#allocation17 + $0xc8] sm:$0xff] %v3147
    %4540 = vst [vmem:[#allocation17 + $0xd0] sm:$0xff] %v3153
    %4541 = vst [vmem:[#allocation17 + $0xd8] sm:$0xff] %v3157
    %4542 = vst [vmem:[#allocation17 + $0xe0] sm:$0xff] %v3163
    %4543 = vst [vmem:[#allocation17 + $0xe8] sm:$0xff] %v3167
    %4544 = vst [vmem:[#allocation17 + $0xf0] sm:$0xff] %v3173
    %4545 = vst [vmem:[#allocation17 + $0xf8] sm:$0xff] %v3177
    %4546 = vst [vmem:[#allocation17 + $0x100] sm:$0xff] %v3183
    %4547 = vst [vmem:[#allocation17 + $0x108] sm:$0xff] %v3187
    %4548 = vst [vmem:[#allocation17 + $0x110] sm:$0xff] %v3193
    %4549 = vst [vmem:[#allocation17 + $0x118] sm:$0xff] %v3197
    %4550 = vst [vmem:[#allocation17 + $0x120] sm:$0xff] %v3203
    %4551 = vst [vmem:[#allocation17 + $0x128] sm:$0xff] %v3207
    %4552 = vst [vmem:[#allocation17 + $0x130] sm:$0xff] %v3213
    %4553 = vst [vmem:[#allocation17 + $0x138] sm:$0xff] %v3217
    %4554 = vst [vmem:[#allocation17 + $0x140] sm:$0xff] %v3223
    %4555 = vst [vmem:[#allocation17 + $0x148] sm:$0xff] %v3227
    %4556 = vst [vmem:[#allocation17 + $0x150] sm:$0xff] %v3233
    %4557 = vst [vmem:[#allocation17 + $0x158] sm:$0xff] %v3237
    %4558 = vst [vmem:[#allocation17 + $0x160] sm:$0xff] %v3243
    %4559 = vst [vmem:[#allocation17 + $0x168] sm:$0xff] %v3247
    %4560 = vst [vmem:[#allocation17 + $0x170] sm:$0xff] %v3253
    %4561 = vst [vmem:[#allocation17 + $0x178] sm:$0xff] %v3257
    %4562 = vst [vmem:[#allocation17 + $0x180] sm:$0xff] %v3263
    %4563 = vst [vmem:[#allocation17 + $0x188] sm:$0xff] %v3267
    %4564 = vst [vmem:[#allocation17 + $0x190] sm:$0xff] %v3273
    %4565 = vst [vmem:[#allocation17 + $0x198] sm:$0xff] %v3277
    %4566 = vst [vmem:[#allocation17 + $0x1a0] sm:$0xff] %v3283
    %4567 = vst [vmem:[#allocation17 + $0x1a8] sm:$0xff] %v3287
    %4568 = vst [vmem:[#allocation17 + $0x1b0] sm:$0xff] %v3293
    %4569 = vst [vmem:[#allocation17 + $0x1b8] sm:$0xff] %v3297
    %4570 = vst [vmem:[#allocation17 + $0x1c0] sm:$0xff] %v3303
    %4571 = vst [vmem:[#allocation17 + $0x1c8] sm:$0xff] %v3307
    %4572 = vst [vmem:[#allocation17 + $0x1d0] sm:$0xff] %v3313
    %4573 = vst [vmem:[#allocation17 + $0x1d8] sm:$0xff] %v3317
    %4574 = vst [vmem:[#allocation17 + $0x1e0] sm:$0xff] %v3323
    %4575 = vst [vmem:[#allocation17 + $0x1e8] sm:$0xff] %v3327
    %4576 = vst [vmem:[#allocation17 + $0x1f0] sm:$0xff] %v3333
    %4577 = vst [vmem:[#allocation17 + $0x1f8] sm:$0xff] %v3337
    %4578 = vst [vmem:[#allocation19] sm:$0xff] %v3025
    %4579 = vst [vmem:[#allocation19 + $0x8] sm:$0xff] %v3029
    %4580 = vst [vmem:[#allocation19 + $0x10] sm:$0xff] %v3035
    %4581 = vst [vmem:[#allocation19 + $0x18] sm:$0xff] %v3039
    %4582 = vst [vmem:[#allocation19 + $0x20] sm:$0xff] %v3045
    %4583 = vst [vmem:[#allocation19 + $0x28] sm:$0xff] %v3049
    %4584 = vst [vmem:[#allocation19 + $0x30] sm:$0xff] %v3055
    %4585 = vst [vmem:[#allocation19 + $0x38] sm:$0xff] %v3059
    %4586 = vst [vmem:[#allocation19 + $0x40] sm:$0xff] %v3065
    %4587 = vst [vmem:[#allocation19 + $0x48] sm:$0xff] %v3069
    %4588 = vst [vmem:[#allocation19 + $0x50] sm:$0xff] %v3075
    %4589 = vst [vmem:[#allocation19 + $0x58] sm:$0xff] %v3079
    %4590 = vst [vmem:[#allocation19 + $0x60] sm:$0xff] %v3085
    %4591 = vst [vmem:[#allocation19 + $0x68] sm:$0xff] %v3089
    %4592 = vst [vmem:[#allocation19 + $0x70] sm:$0xff] %v3095
    %4593 = vst [vmem:[#allocation19 + $0x78] sm:$0xff] %v3099
    %4594 = vst [vmem:[#allocation19 + $0x80] sm:$0xff] %v3105
    %4595 = vst [vmem:[#allocation19 + $0x88] sm:$0xff] %v3109
    %4596 = vst [vmem:[#allocation19 + $0x90] sm:$0xff] %v3115
    %4597 = vst [vmem:[#allocation19 + $0x98] sm:$0xff] %v3119
    %4598 = vst [vmem:[#allocation19 + $0xa0] sm:$0xff] %v3125
    %4599 = vst [vmem:[#allocation19 + $0xa8] sm:$0xff] %v3129
    %4600 = vst [vmem:[#allocation19 + $0xb0] sm:$0xff] %v3135
    %4601 = vst [vmem:[#allocation19 + $0xb8] sm:$0xff] %v3139
    %4602 = vst [vmem:[#allocation19 + $0xc0] sm:$0xff] %v3145
    %4603 = vst [vmem:[#allocation19 + $0xc8] sm:$0xff] %v3149
    %4604 = vst [vmem:[#allocation19 + $0xd0] sm:$0xff] %v3155
    %4605 = vst [vmem:[#allocation19 + $0xd8] sm:$0xff] %v3159
    %4606 = vst [vmem:[#allocation19 + $0xe0] sm:$0xff] %v3165
    %4607 = vst [vmem:[#allocation19 + $0xe8] sm:$0xff] %v3169
    %4608 = vst [vmem:[#allocation19 + $0xf0] sm:$0xff] %v3175
    %4609 = vst [vmem:[#allocation19 + $0xf8] sm:$0xff] %v3179
    %4610 = vst [vmem:[#allocation19 + $0x100] sm:$0xff] %v3185
    %4611 = vst [vmem:[#allocation19 + $0x108] sm:$0xff] %v3189
    %4612 = vst [vmem:[#allocation19 + $0x110] sm:$0xff] %v3195
    %4613 = vst [vmem:[#allocation19 + $0x118] sm:$0xff] %v3199
    %4614 = vst [vmem:[#allocation19 + $0x120] sm:$0xff] %v3205
    %4615 = vst [vmem:[#allocation19 + $0x128] sm:$0xff] %v3209
    %4616 = vst [vmem:[#allocation19 + $0x130] sm:$0xff] %v3215
    %4617 = vst [vmem:[#allocation19 + $0x138] sm:$0xff] %v3219
    %4618 = vst [vmem:[#allocation19 + $0x140] sm:$0xff] %v3225
    %4619 = vst [vmem:[#allocation19 + $0x148] sm:$0xff] %v3229
    %4620 = vst [vmem:[#allocation19 + $0x150] sm:$0xff] %v3235
    %4621 = vst [vmem:[#allocation19 + $0x158] sm:$0xff] %v3239
    %4622 = vst [vmem:[#allocation19 + $0x160] sm:$0xff] %v3245
    %4623 = vst [vmem:[#allocation19 + $0x168] sm:$0xff] %v3249
    %4624 = vst [vmem:[#allocation19 + $0x170] sm:$0xff] %v3255
    %4625 = vst [vmem:[#allocation19 + $0x178] sm:$0xff] %v3259
    %4626 = vst [vmem:[#allocation19 + $0x180] sm:$0xff] %v3265
    %4627 = vst [vmem:[#allocation19 + $0x188] sm:$0xff] %v3269
    %4628 = vst [vmem:[#allocation19 + $0x190] sm:$0xff] %v3275
    %4629 = vst [vmem:[#allocation19 + $0x198] sm:$0xff] %v3279
    %4630 = vst [vmem:[#allocation19 + $0x1a0] sm:$0xff] %v3285
    %4631 = vst [vmem:[#allocation19 + $0x1a8] sm:$0xff] %v3289
    %4632 = vst [vmem:[#allocation19 + $0x1b0] sm:$0xff] %v3295
    %4633 = vst [vmem:[#allocation19 + $0x1b8] sm:$0xff] %v3299
    %4634 = vst [vmem:[#allocation19 + $0x1c0] sm:$0xff] %v3305
    %4635 = vst [vmem:[#allocation19 + $0x1c8] sm:$0xff] %v3309
    %4636 = vst [vmem:[#allocation19 + $0x1d0] sm:$0xff] %v3315
    %4637 = vst [vmem:[#allocation19 + $0x1d8] sm:$0xff] %v3319
    %4638 = vst [vmem:[#allocation19 + $0x1e0] sm:$0xff] %v3325
    %4639 = vst [vmem:[#allocation19 + $0x1e8] sm:$0xff] %v3329
    %4640 = vst [vmem:[#allocation19 + $0x1f0] sm:$0xff] %v3335
    %4641 = vst [vmem:[#allocation19 + $0x1f8] sm:$0xff] %v3339
    // Predicated region
    $region90: #{tpu_custom_call.1} parent=1 // pred_check
      _
    $region91: #{tpu_custom_call.1} parent=1 // pred_check_branch
      %4643 = sbr.rel (0) target = $region93
    $region92: #{tpu_custom_call.1} parent=1 // pred_region
      %s4645 = ssub.s32 8192, 8192
      %4646 = vsyncadd [#allocation4], %s4645
      %s4647 = sshll.u32 [#allocation16], 4
      %s4648 = int_to_ptr.vmem [resolvable:$true] %s4647
      %4653 = dma.vmem_to_hbm [thread:$0]  %s4648, 8192, %s14, [#allocation4], 128, 128, 8
    $region93: #{tpu_custom_call.1} parent=1 // pred_fallthru
      _
    // Predicated region
    $region94: #{tpu_custom_call.1} parent=1 // pred_check
      _
    $region95: #{tpu_custom_call.1} parent=1 // pred_check_branch
      %4655 = sbr.rel (0) target = $region97
    $region96: #{tpu_custom_call.1} parent=1 // pred_region
      %s4657 = ssub.s32 8192, 8192
      %4658 = vsyncadd [#allocation18], %s4657
      %s4659 = sshll.u32 [#allocation17], 4
      %s4660 = int_to_ptr.vmem [resolvable:$true] %s4659
      %4665 = dma.vmem_to_hbm [thread:$0]  %s4660, 8192, %s15, [#allocation18], 128, 128, 8
    $region97: #{tpu_custom_call.1} parent=1 // pred_fallthru
      _
    // Predicated region
    $region98: #{tpu_custom_call.1} parent=1 // pred_check
      _
    $region99: #{tpu_custom_call.1} parent=1 // pred_check_branch
      %4667 = sbr.rel (0) target = $region101
    $region100: #{tpu_custom_call.1} parent=1 // pred_region
      %s4669 = ssub.s32 8192, 8192
      %4670 = vsyncadd [#allocation18], %s4669
      %s4671 = sshll.u32 [#allocation19], 4
      %s4672 = int_to_ptr.vmem [resolvable:$true] %s4671
      %4677 = dma.vmem_to_hbm [thread:$0]  %s4672, 8192, %s16, [#allocation18], 128, 128, 8
    $region101: #{tpu_custom_call.1} parent=1 // pred_fallthru
      _
    // Predicated region
    $region102: #{tpu_custom_call.1} parent=1 // pred_check
      _
    $region103: #{tpu_custom_call.1} parent=1 // pred_check_branch
      %4679 = sbr.rel (0) target = $region105
    $region104: #{tpu_custom_call.1} parent=1 // pred_region
      %4680 = dma.done [#allocation4], 8192
    $region105: #{tpu_custom_call.1} parent=1 // pred_fallthru
      _
    // Predicated region
    $region106: #{tpu_custom_call.1} parent=1 // pred_check
      _
    $region107: #{tpu_custom_call.1} parent=1 // pred_check_branch
      %4682 = sbr.rel (0) target = $region109
    $region108: #{tpu_custom_call.1} parent=1 // pred_region
      %4683 = dma.done [#allocation18], 8192
    $region109: #{tpu_custom_call.1} parent=1 // pred_fallthru
      _
    // Predicated region
    $region110: #{tpu_custom_call.1} parent=1 // pred_check
      _
    $region111: #{tpu_custom_call.1} parent=1 // pred_check_branch
      %4685 = sbr.rel (0) target = $region113
    $region112: #{tpu_custom_call.1} parent=1 // pred_region
      %4686 = dma.done [#allocation18], 8192
    $region113: #{tpu_custom_call.1} parent=1 // pred_fallthru
      _
    %4687 = vsyncpa [#allocation3], 1
    %4688 = vsyncpa [#allocation6], 1
    %4689 = vsyncpa [#allocation9], 1
    %4690 = vsyncpa [#allocation12], 1
    %4691 = vsyncpa [#allocation15], 1
    %4692 = vsyncpa [#allocation4], 1
    %4693 = vsyncpa [#allocation18], 1

</llo_original>
